<compile_context>
chip_gen: v7x
topology: tpu7x:2x2x1
jax: 0.10.0
libtpu: 0.0.40
codegen_flags: <defaults>
</compile_context>

<pallas_src>
import math
from functools import partial

import jax
import jax.numpy as jnp
from jax.experimental import pallas as pl
from jax.experimental.pallas import tpu as pltpu


# ----------------------------- in-kernel helpers -----------------------------

def _layer_norm(x, w, b, eps=1e-5):
    mu = jnp.mean(x, axis=-1, keepdims=True)
    var = jnp.mean(jnp.square(x - mu), axis=-1, keepdims=True)
    return (x - mu) * jax.lax.rsqrt(var + eps) * w + b


def _attention(q, k, v, wo, bo, ctx_ref, *, n_heads):
    """Multi-head attention core (no masks, eval mode).

    q: (Bt, Nq, D) compute-dtype with 1/sqrt(head_dim) already folded in.
    k, v: (Bt, Skv, D) compute-dtype.
    Each head's context is stored into ctx_ref (VMEM scratch, (Bt*Nq, D)) at its fixed
    lane offset — no lane-dim concatenate, no n_heads live ctx tensors — followed by ONE
    (Bt*Nq, D) x (D, D) output projection.  Returns (Bt, Nq, D) float32.
    """
    bt, nq, d = q.shape
    hd = d // n_heads
    cdt = ctx_ref.dtype
    for h in range(n_heads):
        lo, hi = h * hd, (h + 1) * hd
        s = jnp.einsum('bqe,bke->bqk', q[:, :, lo:hi], k[:, :, lo:hi],
                       preferred_element_type=jnp.float32)          # (Bt, Nq, Skv) f32
        s = s - jnp.max(s, axis=-1, keepdims=True)
        p = jnp.exp(s)
        p = p * pl.reciprocal(jnp.sum(p, axis=-1, keepdims=True), approx=True)
        ctx_h = jnp.einsum('bqk,bke->bqe', p.astype(cdt), v[:, :, lo:hi],
                           preferred_element_type=jnp.float32)       # (Bt, Nq, hd)
        ctx_ref[:, lo:hi] = ctx_h.reshape(bt * nq, hd).astype(cdt)
    out = jnp.dot(ctx_ref[...], wo, preferred_element_type=jnp.float32) + bo
    return out.reshape(bt, nq, d)


def _self_attention(x, w_in, b_in, wo, bo, ctx_ref, *, n_heads, cdt):
    """Fused Q/K/V in-projection: ONE (M, D) x (D, 3D) matmul."""
    bt, n, d = x.shape
    x2 = x.reshape(bt * n, d).astype(cdt)
    qkv = (jnp.dot(x2, w_in, preferred_element_type=jnp.float32) + b_in).astype(cdt)
    q = qkv[:, :d].reshape(bt, n, d)
    k = qkv[:, d:2 * d].reshape(bt, n, d)
    v = qkv[:, 2 * d:].reshape(bt, n, d)
    return _attention(q, k, v, wo, bo, ctx_ref, n_heads=n_heads)


def _cross_attention(x, mem, wq, bq, wkv, bkv, wo, bo, ctx_ref, *, n_heads, cdt):
    """Q from the decoder state; fused K/V projection from the (already bf16) memory."""
    bt, nq, d = x.shape
    skv = mem.shape[1]
    xq2 = x.reshape(bt * nq, d).astype(cdt)
    q = (jnp.dot(xq2, wq, preferred_element_type=jnp.float32) + bq).astype(cdt)
    q = q.reshape(bt, nq, d)
    m2 = mem.reshape(bt * skv, d)                        # memory already compute dtype
    kv = (jnp.dot(m2, wkv, preferred_element_type=jnp.float32) + bkv).astype(cdt)
    k = kv[:, :d].reshape(bt, skv, d)
    v = kv[:, d:].reshape(bt, skv, d)
    return _attention(q, k, v, wo, bo, ctx_ref, n_heads=n_heads)


# --------------------------------- kernel ------------------------------------

def decoder_stack_kernel(initq_ref, mem_ref,
                         sa_w_in, sa_b_in, sa_wo, sa_bo,
                         ca_wq, ca_bq, ca_wkv, ca_bkv, ca_wo, ca_bo,
                         w1, b1, w2, b2,
                         ln1_w, ln1_b, ln2_w, ln2_b, ln3_w, ln3_b,
                         out_ref, ctx_ref, *, n_heads, cdt):
    bt, nq, d = out_ref.shape

    # Layer 0: seed the resident output block with the broadcast init query
    # (BlockSpec re-reads block 0 for every batch tile — no jnp.tile in HBM).
    @pl.when(pl.program_id(1) == 0)
    def _():
        out_ref[...] = jnp.broadcast_to(initq_ref[...][None, :, :], (bt, nq, d))

    x = out_ref[...]      # (Bt, Nq, D) f32 running state, VMEM resident across layers
    mem = mem_ref[...]    # (Bt, S, D) compute-dtype, K/V source only

    # --- self-attention block (post-norm) ---
    sa = _self_attention(x, sa_w_in[...], sa_b_in[...], sa_wo[...], sa_bo[...],
                         ctx_ref, n_heads=n_heads, cdt=cdt)
    x = _layer_norm(x + sa, ln1_w[...], ln1_b[...])

    # --- cross-attention block ---
    ca = _cross_attention(x, mem, ca_wq[...], ca_bq[...], ca_wkv[...], ca_bkv[...],
                          ca_wo[...], ca_bo[...], ctx_ref, n_heads=n_heads, cdt=cdt)
    x = _layer_norm(x + ca, ln2_w[...], ln2_b[...])

    # --- feed-forward block (Linear -> ReLU -> Linear) ---
    x2 = x.reshape(bt * nq, d).astype(cdt)
    h = jnp.dot(x2, w1[...], preferred_element_type=jnp.float32) + b1[...]
    h = jnp.maximum(h, 0.0)
    ff = jnp.dot(h.astype(cdt), w2[...], preferred_element_type=jnp.float32) + b2[...]
    x = _layer_norm(x + ff.reshape(bt, nq, d), ln3_w[...], ln3_b[...])

    out_ref[...] = x
    # TODO(synk): dropout uses eval-mode (identity) semantics; no masks.


PARAM_ORDER = (
    "sa_w_in", "sa_b_in", "sa_wo", "sa_bo",
    "ca_wq", "ca_bq", "ca_wkv", "ca_bkv", "ca_wo", "ca_bo",
    "w1", "b1", "w2", "b2",
    "ln1_w", "ln1_b", "ln2_w", "ln2_b", "ln3_w", "ln3_b",
)


# ------------------------- host-side weight preparation ------------------------

def _prepare_stacked_params(layer_params, n_heads, compute_dtype):
    """Transpose to x@W layout, keep Q/K/V stacked ((D,3D) self-attn, (D,2D) K/V cross-attn),
    fold 1/sqrt(head_dim) into Q, cast matmul weights to the compute dtype, and stack all
    layers along a leading layer axis (one pallas_call runs the whole stack)."""
    d = layer_params[0]["sa_in_w"].shape[1]
    scale = 1.0 / math.sqrt(d // n_heads)
    wdt = compute_dtype
    f32 = jnp.float32

    per_layer = []
    for p in layer_params:
        # PyTorch in_proj_weight is (3D, D): rows [0:D]=Wq, [D:2D]=Wk, [2D:]=Wv.
        # x @ in_proj_weight.T == x @ concat([Wq.T, Wk.T, Wv.T], axis=1) -> (M, 3D).
        sa_w = p["sa_in_w"].T.astype(f32)            # (D, 3D), columns [q | k | v]
        sa_b = p["sa_in_b"].astype(f32)              # (3D,)
        sa_w = sa_w.at[:, :d].multiply(scale)        # fold softmax scale into Q
        sa_b = sa_b.at[:d].multiply(scale)

        ca_w = p["ca_in_w"].T.astype(f32)            # (D, 3D)
        ca_b = p["ca_in_b"].astype(f32)
        ca_wq, ca_bq = ca_w[:, :d] * scale, ca_b[:d] * scale
        ca_wkv, ca_bkv = ca_w[:, d:], ca_b[d:]       # (D, 2D), columns [k | v]

        per_layer.append({
            "sa_w_in": sa_w.astype(wdt),            "sa_b_in": sa_b[None, :],
            "sa_wo": p["sa_out_w"].T.astype(wdt),   "sa_bo": p["sa_out_b"][None, :].astype(f32),
            "ca_wq": ca_wq.astype(wdt),             "ca_bq": ca_bq[None, :],
            "ca_wkv": ca_wkv.astype(wdt),           "ca_bkv": ca_bkv[None, :],
            "ca_wo": p["ca_out_w"].T.astype(wdt),   "ca_bo": p["ca_out_b"][None, :].astype(f32),
            "w1": p["l1_w"].T.astype(wdt),          "b1": p["l1_b"][None, :].astype(f32),
            "w2": p["l2_w"].T.astype(wdt),          "b2": p["l2_b"][None, :].astype(f32),
            "ln1_w": p["ln1_w"][None, :].astype(f32), "ln1_b": p["ln1_b"][None, :].astype(f32),
            "ln2_w": p["ln2_w"][None, :].astype(f32), "ln2_b": p["ln2_b"][None, :].astype(f32),
            "ln3_w": p["ln3_w"][None, :].astype(f32), "ln3_b": p["ln3_b"][None, :].astype(f32),
        })
    stacked = {k: jnp.stack([lp[k] for lp in per_layer], axis=0) for k in PARAM_ORDER}
    return [stacked[k] for k in PARAM_ORDER]


# ----------------------- generation-aware default tiling -----------------------

def _tpu_defaults():
    """Best-effort (tensorcores_per_chip, vmem_limit_bytes) for the local TPU.

    v7x has 2 TensorCores/chip and 64 MiB VMEM; v5e/v6e have 1 TC and 128 MiB.
    Detection failures fall back to single-TC / 96 MiB.
    """
    n_tc = 1
    vmem_cap = 128 * 1024 * 1024
    try:
        info = pltpu.get_tpu_info()
        vmem_cap = int(getattr(info, "vmem_capacity_bytes", vmem_cap) or vmem_cap)
        cores = getattr(info, "num_cores", None) or getattr(info, "tensorcores_per_chip", None)
        if cores:
            n_tc = int(cores)
    except Exception:
        pass
    try:
        kind = str(jax.devices()[0].device_kind).lower()
        if "v7" in kind or "7x" in kind:
            n_tc = max(n_tc, 2)
    except Exception:
        pass
    # Leave headroom below physical VMEM: ~3/4 of capacity, capped at 96 MiB.
    vmem_limit = min(96 * 1024 * 1024, (vmem_cap * 3) // 4)
    return (2 if n_tc >= 2 else 1), vmem_limit


# -------------------------------- wrapper -------------------------------------

def transformer_decoder(memory, init_query, layer_params, n_heads, *,
                        compute_dtype=jnp.bfloat16, batch_block=None,
                        vmem_limit_bytes=None):
    """Whole decoder stack as ONE pallas_call over grid (batch_tiles, layers)."""
    B, S, D = memory.shape
    _, Nq, _ = init_query.shape
    L = len(layer_params)
    assert D % n_heads == 0

    n_tc, auto_vmem = _tpu_defaults()
    if batch_block is None:
        # Split the "parallel" batch axis across both TensorCores on dual-TC chips (v7x);
        # keep one big resident tile on single-TC chips (v5e/v6e).
        Bt = B // n_tc if (n_tc > 1 and B % n_tc == 0) else B
    else:
        Bt = batch_block
    assert B % Bt == 0
    if vmem_limit_bytes is None:
        vmem_limit_bytes = auto_vmem

    params = _prepare_stacked_params(layer_params, n_heads, compute_dtype)
    # memory is only ever the K/V source (never on the f32 residual path): cast once on
    # the host -> half the DMA bytes / VMEM footprint and no per-layer f32->bf16 casts.
    mem_c = memory.astype(compute_dtype)
    initq = init_query.astype(jnp.float32)

    def pspec(p):
        nd = p.ndim
        return pl.BlockSpec((None,) + p.shape[1:],
                            lambda b, l, _nd=nd: (l,) + (0,) * (_nd - 1))

    in_specs = [
        pl.BlockSpec((None, Nq, D), lambda b, l: (0, 0, 0)),   # init_query, batch-broadcast
        pl.BlockSpec((Bt, S, D), lambda b, l: (b, 0, 0)),      # memory tile, resident across layers
    ] + [pspec(p) for p in params]

    return pl.pallas_call(
        partial(decoder_stack_kernel, n_heads=n_heads, cdt=compute_dtype),
        out_shape=jax.ShapeDtypeStruct((B, Nq, D), jnp.float32),
        grid=(B // Bt, L),
        in_specs=in_specs,
        out_specs=pl.BlockSpec((Bt, Nq, D), lambda b, l: (b, 0, 0)),
        scratch_shapes=[pltpu.VMEM((Bt * Nq, D), compute_dtype)],   # per-head ctx accumulator
        compiler_params=pltpu.CompilerParams(
            dimension_semantics=("parallel", "arbitrary"),
            vmem_limit_bytes=vmem_limit_bytes),
    )(initq, mem_c, *params)


# ---------------------------- deterministic init -------------------------------

def init_layer_params(key, d_hid):
    """PyTorch-layout parameters for one nn.TransformerDecoderLayer."""
    ks = jax.random.split(key, 12)
    nrm = lambda k, shape, s=0.05: s * jax.random.normal(k, shape, jnp.float32)
    d, ff = d_hid, 2 * d_hid
    ones, zeros = jnp.ones((d,), jnp.float32), jnp.zeros((d,), jnp.float32)
    return {
        "sa_in_w": nrm(ks[0], (3 * d, d)), "sa_in_b": nrm(ks[1], (3 * d,)),
        "sa_out_w": nrm(ks[2], (d, d)),    "sa_out_b": nrm(ks[3], (d,)),
        "ca_in_w": nrm(ks[4], (3 * d, d)), "ca_in_b": nrm(ks[5], (3 * d,)),
        "ca_out_w": nrm(ks[6], (d, d)),    "ca_out_b": nrm(ks[7], (d,)),
        "l1_w": nrm(ks[8], (ff, d)),       "l1_b": nrm(ks[9], (ff,)),
        "l2_w": nrm(ks[10], (d, ff)),      "l2_b": nrm(ks[11], (d,)),
        "ln1_w": ones, "ln1_b": zeros,
        "ln2_w": ones, "ln2_b": zeros,
        "ln3_w": ones, "ln3_b": zeros,
    }


if __name__ == "__main__":
    B, S = 2, 16                 # batch, memory sequence length
    n_queries, d_hid = 8, 32
    n_layers, n_heads = 2, 4

    key = jax.random.PRNGKey(0)
    k_mem, k_q, *k_layers = jax.random.split(key, 2 + n_layers)

    memory = jax.random.normal(k_mem, (B, S, d_hid), jnp.float32)
    init_query = jax.random.normal(k_q, (1, n_queries, d_hid), jnp.float32)
    layer_params = [init_layer_params(k, d_hid) for k in k_layers]

    out = transformer_decoder(memory, init_query, layer_params, n_heads)
    jax.block_until_ready(out)
    assert out.shape == (B, n_queries, d_hid)
    assert bool(jnp.all(jnp.isfinite(out)))
    print("KERNEL_OK")
</pallas_src>

<mosaic_0001>
module attributes {stable_mosaic.version = 11 : i64} {
  func.func @decoder_stack_kernel(%arg0: i32, %arg1: i32, %arg2: memref<1x8x32xf32, #tpu.memory_space<vmem>>, %arg3: memref<2x16x32xbf16, #tpu.memory_space<vmem>>, %arg4: memref<1x32x96xbf16, #tpu.memory_space<vmem>>, %arg5: memref<1x1x96xf32, #tpu.memory_space<vmem>>, %arg6: memref<1x32x32xbf16, #tpu.memory_space<vmem>>, %arg7: memref<1x1x32xf32, #tpu.memory_space<vmem>>, %arg8: memref<1x32x32xbf16, #tpu.memory_space<vmem>>, %arg9: memref<1x1x32xf32, #tpu.memory_space<vmem>>, %arg10: memref<1x32x64xbf16, #tpu.memory_space<vmem>>, %arg11: memref<1x1x64xf32, #tpu.memory_space<vmem>>, %arg12: memref<1x32x32xbf16, #tpu.memory_space<vmem>>, %arg13: memref<1x1x32xf32, #tpu.memory_space<vmem>>, %arg14: memref<1x32x64xbf16, #tpu.memory_space<vmem>>, %arg15: memref<1x1x64xf32, #tpu.memory_space<vmem>>, %arg16: memref<1x64x32xbf16, #tpu.memory_space<vmem>>, %arg17: memref<1x1x32xf32, #tpu.memory_space<vmem>>, %arg18: memref<1x1x32xf32, #tpu.memory_space<vmem>>, %arg19: memref<1x1x32xf32, #tpu.memory_space<vmem>>, %arg20: memref<1x1x32xf32, #tpu.memory_space<vmem>>, %arg21: memref<1x1x32xf32, #tpu.memory_space<vmem>>, %arg22: memref<1x1x32xf32, #tpu.memory_space<vmem>>, %arg23: memref<1x1x32xf32, #tpu.memory_space<vmem>>, %arg24: memref<2x8x32xf32, #tpu.memory_space<vmem>>, %arg25: memref<16x32xbf16, #tpu.memory_space<vmem>>) attributes {dimension_semantics = [#tpu.dimension_semantics<parallel>, #tpu.dimension_semantics<arbitrary>], iteration_bounds = array<i64: 1, 2>, scalar_prefetch = 0 : i64, scratch_operands = 1 : i64, tpu.core_type = #tpu.core_type<tc>, window_params = [{pipeline_mode = #tpu.pipeline_mode<synchronous>, transform_indices = @transform_0, window_bounds = array<i64: 1, 8, 32>}, {transform_indices = @transform_1, window_bounds = array<i64: 2, 16, 32>}, {transform_indices = @transform_2, window_bounds = array<i64: 1, 32, 96>}, {transform_indices = @transform_3, window_bounds = array<i64: 1, 1, 96>}, {transform_indices = @transform_4, window_bounds = array<i64: 1, 32, 32>}, {transform_indices = @transform_5, window_bounds = array<i64: 1, 1, 32>}, {transform_indices = @transform_6, window_bounds = array<i64: 1, 32, 32>}, {transform_indices = @transform_7, window_bounds = array<i64: 1, 1, 32>}, {transform_indices = @transform_8, window_bounds = array<i64: 1, 32, 64>}, {transform_indices = @transform_9, window_bounds = array<i64: 1, 1, 64>}, {transform_indices = @transform_10, window_bounds = array<i64: 1, 32, 32>}, {transform_indices = @transform_11, window_bounds = array<i64: 1, 1, 32>}, {transform_indices = @transform_12, window_bounds = array<i64: 1, 32, 64>}, {transform_indices = @transform_13, window_bounds = array<i64: 1, 1, 64>}, {transform_indices = @transform_14, window_bounds = array<i64: 1, 64, 32>}, {transform_indices = @transform_15, window_bounds = array<i64: 1, 1, 32>}, {transform_indices = @transform_16, window_bounds = array<i64: 1, 1, 32>}, {transform_indices = @transform_17, window_bounds = array<i64: 1, 1, 32>}, {transform_indices = @transform_18, window_bounds = array<i64: 1, 1, 32>}, {transform_indices = @transform_19, window_bounds = array<i64: 1, 1, 32>}, {transform_indices = @transform_20, window_bounds = array<i64: 1, 1, 32>}, {transform_indices = @transform_21, window_bounds = array<i64: 1, 1, 32>}, {transform_indices = @transform_22, window_bounds = array<i64: 2, 8, 32>}]} {
    %c0_i32 = arith.constant 0 : i32
    %0 = arith.cmpi eq, %arg1, %c0_i32 : i32
    %1 = arith.extui %0 : i1 to i32
    %c0_i32_0 = arith.constant 0 : i32
    %2 = arith.cmpi ne, %1, %c0_i32_0 : i32
    scf.if %2 {
      %c0_140 = arith.constant 0 : index
      %c0_141 = arith.constant 0 : index
      %c0_142 = arith.constant 0 : index
      %323 = vector.load %arg2[%c0_140, %c0_141, %c0_142] : memref<1x8x32xf32, #tpu.memory_space<vmem>>, vector<1x8x32xf32>
      %324 = vector.shape_cast %323 : vector<1x8x32xf32> to vector<8x32xf32>
      %325 = vector.shape_cast %324 : vector<8x32xf32> to vector<1x8x32xf32>
      %326 = vector.shape_cast %325 : vector<1x8x32xf32> to vector<1x8x32xf32>
      %327 = vector.broadcast %326 : vector<1x8x32xf32> to vector<2x8x32xf32>
      %c0_143 = arith.constant 0 : index
      %c0_144 = arith.constant 0 : index
      %c0_145 = arith.constant 0 : index
      %328 = vector.load %arg24[%c0_143, %c0_144, %c0_145] : memref<2x8x32xf32, #tpu.memory_space<vmem>>, vector<2x8x32xf32>
      tpu.vector_store %arg24[%c0_143, %c0_144, %c0_145], %327 {strides = array<i32>} : memref<2x8x32xf32, #tpu.memory_space<vmem>>, vector<2x8x32xf32>,
    } else {
    }
    %c0 = arith.constant 0 : index
    %c0_1 = arith.constant 0 : index
    %c0_2 = arith.constant 0 : index
    %3 = vector.load %arg24[%c0, %c0_1, %c0_2] : memref<2x8x32xf32, #tpu.memory_space<vmem>>, vector<2x8x32xf32>
    %c0_3 = arith.constant 0 : index
    %c0_4 = arith.constant 0 : index
    %c0_5 = arith.constant 0 : index
    %4 = vector.load %arg3[%c0_3, %c0_4, %c0_5] : memref<2x16x32xbf16, #tpu.memory_space<vmem>>, vector<2x16x32xbf16>
    %c0_6 = arith.constant 0 : index
    %c0_7 = arith.constant 0 : index
    %c0_8 = arith.constant 0 : index
    %5 = vector.load %arg4[%c0_6, %c0_7, %c0_8] : memref<1x32x96xbf16, #tpu.memory_space<vmem>>, vector<1x32x96xbf16>
    %6 = vector.shape_cast %5 : vector<1x32x96xbf16> to vector<32x96xbf16>
    %c0_9 = arith.constant 0 : index
    %c0_10 = arith.constant 0 : index
    %c0_11 = arith.constant 0 : index
    %7 = vector.load %arg5[%c0_9, %c0_10, %c0_11] : memref<1x1x96xf32, #tpu.memory_space<vmem>>, vector<1x1x96xf32>
    %8 = vector.shape_cast %7 : vector<1x1x96xf32> to vector<1x96xf32>
    %c0_12 = arith.constant 0 : index
    %c0_13 = arith.constant 0 : index
    %c0_14 = arith.constant 0 : index
    %9 = vector.load %arg6[%c0_12, %c0_13, %c0_14] : memref<1x32x32xbf16, #tpu.memory_space<vmem>>, vector<1x32x32xbf16>
    %10 = vector.shape_cast %9 : vector<1x32x32xbf16> to vector<32x32xbf16>
    %c0_15 = arith.constant 0 : index
    %c0_16 = arith.constant 0 : index
    %c0_17 = arith.constant 0 : index
    %11 = vector.load %arg7[%c0_15, %c0_16, %c0_17] : memref<1x1x32xf32, #tpu.memory_space<vmem>>, vector<1x1x32xf32>
    %12 = vector.shape_cast %11 : vector<1x1x32xf32> to vector<1x32xf32>
    %13 = vector.shape_cast %3 : vector<2x8x32xf32> to vector<16x32xf32>
    %14 = arith.truncf %13 : vector<16x32xf32> to vector<16x32xbf16>
    %cst = arith.constant dense<0.000000e+00> : vector<16x96xf32>
    %15 = tpu.matmul %14, %6, %cst {dimension_numbers = #tpu.dot_dimension_numbers<[1], [0], [0], [1], [0, 0, 1, 1], [], []>} : vector<16x32xbf16>, vector<32x96xbf16>, vector<16x96xf32> -> vector<16x96xf32>
    %16 = vector.broadcast %8 : vector<1x96xf32> to vector<16x96xf32>
    %17 = arith.addf %15, %16 : vector<16x96xf32>
    %18 = arith.truncf %17 : vector<16x96xf32> to vector<16x96xbf16>
    %19 = vector.extract_strided_slice %18 {offsets = [0, 0], sizes = [16, 32], strides = [1, 1]} : vector<16x96xbf16> to vector<16x32xbf16>
    %20 = vector.shape_cast %19 : vector<16x32xbf16> to vector<2x8x32xbf16>
    %21 = vector.extract_strided_slice %18 {offsets = [0, 32], sizes = [16, 32], strides = [1, 1]} : vector<16x96xbf16> to vector<16x32xbf16>
    %22 = vector.shape_cast %21 : vector<16x32xbf16> to vector<2x8x32xbf16>
    %23 = vector.extract_strided_slice %18 {offsets = [0, 64], sizes = [16, 32], strides = [1, 1]} : vector<16x96xbf16> to vector<16x32xbf16>
    %24 = vector.shape_cast %23 : vector<16x32xbf16> to vector<2x8x32xbf16>
    %25 = vector.extract_strided_slice %20 {offsets = [0, 0, 0], sizes = [2, 8, 8], strides = [1, 1, 1]} : vector<2x8x32xbf16> to vector<2x8x8xbf16>
    %26 = vector.extract_strided_slice %22 {offsets = [0, 0, 0], sizes = [2, 8, 8], strides = [1, 1, 1]} : vector<2x8x32xbf16> to vector<2x8x8xbf16>
    "tpu.trace_start"() <{level = 10 : i32, message = "bqe,bke->bqk"}> : () -> ()
    %cst_18 = arith.constant dense<0.000000e+00> : vector<2x8x8xf32>
    %27 = tpu.matmul %25, %26, %cst_18 {dimension_numbers = #tpu.dot_dimension_numbers<[2], [2], [1], [1], [0, 0, 0, 1, 1, 1], [0], [0]>} : vector<2x8x8xbf16>, vector<2x8x8xbf16>, vector<2x8x8xf32> -> vector<2x8x8xf32>
    "tpu.trace_stop"() : () -> ()
    %cst_19 = arith.constant dense<0xFF800000> : vector<2x8xf32>
    %28 = vector.multi_reduction <maximumf>, %27, %cst_19 [2] : vector<2x8x8xf32> to vector<2x8xf32>
    %29 = vector.shape_cast %28 : vector<2x8xf32> to vector<2x8x1xf32>
    %30 = vector.broadcast %29 : vector<2x8x1xf32> to vector<2x8x8xf32>
    %31 = arith.subf %27, %30 : vector<2x8x8xf32>
    %32 = math.exp %31 : vector<2x8x8xf32>
    %cst_20 = arith.constant dense<0.000000e+00> : vector<2x8xf32>
    %33 = vector.multi_reduction <add>, %32, %cst_20 [2] : vector<2x8x8xf32> to vector<2x8xf32>
    %34 = vector.shape_cast %33 : vector<2x8xf32> to vector<2x8x1xf32>
    %35 = tpu.reciprocal %34 {approx = true} : vector<2x8x1xf32> -> vector<2x8x1xf32>
    %36 = vector.broadcast %35 : vector<2x8x1xf32> to vector<2x8x8xf32>
    %37 = arith.mulf %32, %36 : vector<2x8x8xf32>
    %38 = arith.truncf %37 : vector<2x8x8xf32> to vector<2x8x8xbf16>
    %39 = vector.extract_strided_slice %24 {offsets = [0, 0, 0], sizes = [2, 8, 8], strides = [1, 1, 1]} : vector<2x8x32xbf16> to vector<2x8x8xbf16>
    "tpu.trace_start"() <{level = 10 : i32, message = "bqk,bke->bqe"}> : () -> ()
    %cst_21 = arith.constant dense<0.000000e+00> : vector<2x8x8xf32>
    %40 = tpu.matmul %38, %39, %cst_21 {dimension_numbers = #tpu.dot_dimension_numbers<[2], [1], [1], [2], [0, 0, 0, 1, 1, 2], [0], [0]>} : vector<2x8x8xbf16>, vector<2x8x8xbf16>, vector<2x8x8xf32> -> vector<2x8x8xf32>
    "tpu.trace_stop"() : () -> ()
    %41 = vector.shape_cast %40 : vector<2x8x8xf32> to vector<16x8xf32>
    %42 = arith.truncf %41 : vector<16x8xf32> to vector<16x8xbf16>
    %c0_22 = arith.constant 0 : index
    %c0_23 = arith.constant 0 : index
    %43 = vector.load %arg25[%c0_22, %c0_23] : memref<16x32xbf16, #tpu.memory_space<vmem>>, vector<16x8xbf16>
    tpu.vector_store %arg25[%c0_22, %c0_23], %42 {strides = array<i32>} : memref<16x32xbf16, #tpu.memory_space<vmem>>, vector<16x8xbf16>,
    %44 = vector.extract_strided_slice %20 {offsets = [0, 0, 8], sizes = [2, 8, 8], strides = [1, 1, 1]} : vector<2x8x32xbf16> to vector<2x8x8xbf16>
    %45 = vector.extract_strided_slice %22 {offsets = [0, 0, 8], sizes = [2, 8, 8], strides = [1, 1, 1]} : vector<2x8x32xbf16> to vector<2x8x8xbf16>
    "tpu.trace_start"() <{level = 10 : i32, message = "bqe,bke->bqk"}> : () -> ()
    %cst_24 = arith.constant dense<0.000000e+00> : vector<2x8x8xf32>
    %46 = tpu.matmul %44, %45, %cst_24 {dimension_numbers = #tpu.dot_dimension_numbers<[2], [2], [1], [1], [0, 0, 0, 1, 1, 1], [0], [0]>} : vector<2x8x8xbf16>, vector<2x8x8xbf16>, vector<2x8x8xf32> -> vector<2x8x8xf32>
    "tpu.trace_stop"() : () -> ()
    %cst_25 = arith.constant dense<0xFF800000> : vector<2x8xf32>
    %47 = vector.multi_reduction <maximumf>, %46, %cst_25 [2] : vector<2x8x8xf32> to vector<2x8xf32>
    %48 = vector.shape_cast %47 : vector<2x8xf32> to vector<2x8x1xf32>
    %49 = vector.broadcast %48 : vector<2x8x1xf32> to vector<2x8x8xf32>
    %50 = arith.subf %46, %49 : vector<2x8x8xf32>
    %51 = math.exp %50 : vector<2x8x8xf32>
    %cst_26 = arith.constant dense<0.000000e+00> : vector<2x8xf32>
    %52 = vector.multi_reduction <add>, %51, %cst_26 [2] : vector<2x8x8xf32> to vector<2x8xf32>
    %53 = vector.shape_cast %52 : vector<2x8xf32> to vector<2x8x1xf32>
    %54 = tpu.reciprocal %53 {approx = true} : vector<2x8x1xf32> -> vector<2x8x1xf32>
    %55 = vector.broadcast %54 : vector<2x8x1xf32> to vector<2x8x8xf32>
    %56 = arith.mulf %51, %55 : vector<2x8x8xf32>
    %57 = arith.truncf %56 : vector<2x8x8xf32> to vector<2x8x8xbf16>
    %58 = vector.extract_strided_slice %24 {offsets = [0, 0, 8], sizes = [2, 8, 8], strides = [1, 1, 1]} : vector<2x8x32xbf16> to vector<2x8x8xbf16>
    "tpu.trace_start"() <{level = 10 : i32, message = "bqk,bke->bqe"}> : () -> ()
    %cst_27 = arith.constant dense<0.000000e+00> : vector<2x8x8xf32>
    %59 = tpu.matmul %57, %58, %cst_27 {dimension_numbers = #tpu.dot_dimension_numbers<[2], [1], [1], [2], [0, 0, 0, 1, 1, 2], [0], [0]>} : vector<2x8x8xbf16>, vector<2x8x8xbf16>, vector<2x8x8xf32> -> vector<2x8x8xf32>
    "tpu.trace_stop"() : () -> ()
    %60 = vector.shape_cast %59 : vector<2x8x8xf32> to vector<16x8xf32>
    %61 = arith.truncf %60 : vector<16x8xf32> to vector<16x8xbf16>
    %c0_28 = arith.constant 0 : index
    %c8 = arith.constant 8 : index
    %62 = vector.load %arg25[%c0_28, %c8] : memref<16x32xbf16, #tpu.memory_space<vmem>>, vector<16x8xbf16>
    tpu.vector_store %arg25[%c0_28, %c8], %61 {strides = array<i32>} : memref<16x32xbf16, #tpu.memory_space<vmem>>, vector<16x8xbf16>,
    %63 = vector.extract_strided_slice %20 {offsets = [0, 0, 16], sizes = [2, 8, 8], strides = [1, 1, 1]} : vector<2x8x32xbf16> to vector<2x8x8xbf16>
    %64 = vector.extract_strided_slice %22 {offsets = [0, 0, 16], sizes = [2, 8, 8], strides = [1, 1, 1]} : vector<2x8x32xbf16> to vector<2x8x8xbf16>
    "tpu.trace_start"() <{level = 10 : i32, message = "bqe,bke->bqk"}> : () -> ()
    %cst_29 = arith.constant dense<0.000000e+00> : vector<2x8x8xf32>
    %65 = tpu.matmul %63, %64, %cst_29 {dimension_numbers = #tpu.dot_dimension_numbers<[2], [2], [1], [1], [0, 0, 0, 1, 1, 1], [0], [0]>} : vector<2x8x8xbf16>, vector<2x8x8xbf16>, vector<2x8x8xf32> -> vector<2x8x8xf32>
    "tpu.trace_stop"() : () -> ()
    %cst_30 = arith.constant dense<0xFF800000> : vector<2x8xf32>
    %66 = vector.multi_reduction <maximumf>, %65, %cst_30 [2] : vector<2x8x8xf32> to vector<2x8xf32>
    %67 = vector.shape_cast %66 : vector<2x8xf32> to vector<2x8x1xf32>
    %68 = vector.broadcast %67 : vector<2x8x1xf32> to vector<2x8x8xf32>
    %69 = arith.subf %65, %68 : vector<2x8x8xf32>
    %70 = math.exp %69 : vector<2x8x8xf32>
    %cst_31 = arith.constant dense<0.000000e+00> : vector<2x8xf32>
    %71 = vector.multi_reduction <add>, %70, %cst_31 [2] : vector<2x8x8xf32> to vector<2x8xf32>
    %72 = vector.shape_cast %71 : vector<2x8xf32> to vector<2x8x1xf32>
    %73 = tpu.reciprocal %72 {approx = true} : vector<2x8x1xf32> -> vector<2x8x1xf32>
    %74 = vector.broadcast %73 : vector<2x8x1xf32> to vector<2x8x8xf32>
    %75 = arith.mulf %70, %74 : vector<2x8x8xf32>
    %76 = arith.truncf %75 : vector<2x8x8xf32> to vector<2x8x8xbf16>
    %77 = vector.extract_strided_slice %24 {offsets = [0, 0, 16], sizes = [2, 8, 8], strides = [1, 1, 1]} : vector<2x8x32xbf16> to vector<2x8x8xbf16>
    "tpu.trace_start"() <{level = 10 : i32, message = "bqk,bke->bqe"}> : () -> ()
    %cst_32 = arith.constant dense<0.000000e+00> : vector<2x8x8xf32>
    %78 = tpu.matmul %76, %77, %cst_32 {dimension_numbers = #tpu.dot_dimension_numbers<[2], [1], [1], [2], [0, 0, 0, 1, 1, 2], [0], [0]>} : vector<2x8x8xbf16>, vector<2x8x8xbf16>, vector<2x8x8xf32> -> vector<2x8x8xf32>
    "tpu.trace_stop"() : () -> ()
    %79 = vector.shape_cast %78 : vector<2x8x8xf32> to vector<16x8xf32>
    %80 = arith.truncf %79 : vector<16x8xf32> to vector<16x8xbf16>
    %c0_33 = arith.constant 0 : index
    %c16 = arith.constant 16 : index
    %81 = vector.load %arg25[%c0_33, %c16] : memref<16x32xbf16, #tpu.memory_space<vmem>>, vector<16x8xbf16>
    tpu.vector_store %arg25[%c0_33, %c16], %80 {strides = array<i32>} : memref<16x32xbf16, #tpu.memory_space<vmem>>, vector<16x8xbf16>,
    %82 = vector.extract_strided_slice %20 {offsets = [0, 0, 24], sizes = [2, 8, 8], strides = [1, 1, 1]} : vector<2x8x32xbf16> to vector<2x8x8xbf16>
    %83 = vector.extract_strided_slice %22 {offsets = [0, 0, 24], sizes = [2, 8, 8], strides = [1, 1, 1]} : vector<2x8x32xbf16> to vector<2x8x8xbf16>
    "tpu.trace_start"() <{level = 10 : i32, message = "bqe,bke->bqk"}> : () -> ()
    %cst_34 = arith.constant dense<0.000000e+00> : vector<2x8x8xf32>
    %84 = tpu.matmul %82, %83, %cst_34 {dimension_numbers = #tpu.dot_dimension_numbers<[2], [2], [1], [1], [0, 0, 0, 1, 1, 1], [0], [0]>} : vector<2x8x8xbf16>, vector<2x8x8xbf16>, vector<2x8x8xf32> -> vector<2x8x8xf32>
    "tpu.trace_stop"() : () -> ()
    %cst_35 = arith.constant dense<0xFF800000> : vector<2x8xf32>
    %85 = vector.multi_reduction <maximumf>, %84, %cst_35 [2] : vector<2x8x8xf32> to vector<2x8xf32>
    %86 = vector.shape_cast %85 : vector<2x8xf32> to vector<2x8x1xf32>
    %87 = vector.broadcast %86 : vector<2x8x1xf32> to vector<2x8x8xf32>
    %88 = arith.subf %84, %87 : vector<2x8x8xf32>
    %89 = math.exp %88 : vector<2x8x8xf32>
    %cst_36 = arith.constant dense<0.000000e+00> : vector<2x8xf32>
    %90 = vector.multi_reduction <add>, %89, %cst_36 [2] : vector<2x8x8xf32> to vector<2x8xf32>
    %91 = vector.shape_cast %90 : vector<2x8xf32> to vector<2x8x1xf32>
    %92 = tpu.reciprocal %91 {approx = true} : vector<2x8x1xf32> -> vector<2x8x1xf32>
    %93 = vector.broadcast %92 : vector<2x8x1xf32> to vector<2x8x8xf32>
    %94 = arith.mulf %89, %93 : vector<2x8x8xf32>
    %95 = arith.truncf %94 : vector<2x8x8xf32> to vector<2x8x8xbf16>
    %96 = vector.extract_strided_slice %24 {offsets = [0, 0, 24], sizes = [2, 8, 8], strides = [1, 1, 1]} : vector<2x8x32xbf16> to vector<2x8x8xbf16>
    "tpu.trace_start"() <{level = 10 : i32, message = "bqk,bke->bqe"}> : () -> ()
    %cst_37 = arith.constant dense<0.000000e+00> : vector<2x8x8xf32>
    %97 = tpu.matmul %95, %96, %cst_37 {dimension_numbers = #tpu.dot_dimension_numbers<[2], [1], [1], [2], [0, 0, 0, 1, 1, 2], [0], [0]>} : vector<2x8x8xbf16>, vector<2x8x8xbf16>, vector<2x8x8xf32> -> vector<2x8x8xf32>
    "tpu.trace_stop"() : () -> ()
    %98 = vector.shape_cast %97 : vector<2x8x8xf32> to vector<16x8xf32>
    %99 = arith.truncf %98 : vector<16x8xf32> to vector<16x8xbf16>
    %c0_38 = arith.constant 0 : index
    %c24 = arith.constant 24 : index
    %100 = vector.load %arg25[%c0_38, %c24] : memref<16x32xbf16, #tpu.memory_space<vmem>>, vector<16x8xbf16>
    tpu.vector_store %arg25[%c0_38, %c24], %99 {strides = array<i32>} : memref<16x32xbf16, #tpu.memory_space<vmem>>, vector<16x8xbf16>,
    %c0_39 = arith.constant 0 : index
    %c0_40 = arith.constant 0 : index
    %101 = vector.load %arg25[%c0_39, %c0_40] : memref<16x32xbf16, #tpu.memory_space<vmem>>, vector<16x32xbf16>
    %cst_41 = arith.constant dense<0.000000e+00> : vector<16x32xf32>
    %102 = tpu.matmul %101, %10, %cst_41 {dimension_numbers = #tpu.dot_dimension_numbers<[1], [0], [0], [1], [0, 0, 1, 1], [], []>} : vector<16x32xbf16>, vector<32x32xbf16>, vector<16x32xf32> -> vector<16x32xf32>
    %103 = vector.broadcast %12 : vector<1x32xf32> to vector<16x32xf32>
    %104 = arith.addf %102, %103 : vector<16x32xf32>
    %105 = vector.shape_cast %104 : vector<16x32xf32> to vector<2x8x32xf32>
    %106 = arith.addf %3, %105 : vector<2x8x32xf32>
    %c0_42 = arith.constant 0 : index
    %c0_43 = arith.constant 0 : index
    %c0_44 = arith.constant 0 : index
    %107 = vector.load %arg18[%c0_42, %c0_43, %c0_44] : memref<1x1x32xf32, #tpu.memory_space<vmem>>, vector<1x1x32xf32>
    %108 = vector.shape_cast %107 : vector<1x1x32xf32> to vector<1x32xf32>
    %c0_45 = arith.constant 0 : index
    %c0_46 = arith.constant 0 : index
    %c0_47 = arith.constant 0 : index
    %109 = vector.load %arg19[%c0_45, %c0_46, %c0_47] : memref<1x1x32xf32, #tpu.memory_space<vmem>>, vector<1x1x32xf32>
    %110 = vector.shape_cast %109 : vector<1x1x32xf32> to vector<1x32xf32>
    %cst_48 = arith.constant dense<0.000000e+00> : vector<2x8xf32>
    %111 = vector.multi_reduction <add>, %106, %cst_48 [2] : vector<2x8x32xf32> to vector<2x8xf32>
    %112 = vector.shape_cast %111 : vector<2x8xf32> to vector<2x8x1xf32>
    %cst_49 = arith.constant 3.200000e+01 : f32
    %113 = vector.broadcast %cst_49 : f32 to vector<2x8x1xf32>
    %114 = arith.divf %112, %113 : vector<2x8x1xf32>
    %115 = vector.broadcast %114 : vector<2x8x1xf32> to vector<2x8x32xf32>
    %116 = arith.subf %106, %115 : vector<2x8x32xf32>
    %117 = arith.mulf %116, %116 : vector<2x8x32xf32>
    %cst_50 = arith.constant dense<0.000000e+00> : vector<2x8xf32>
    %118 = vector.multi_reduction <add>, %117, %cst_50 [2] : vector<2x8x32xf32> to vector<2x8xf32>
    %119 = vector.shape_cast %118 : vector<2x8xf32> to vector<2x8x1xf32>
    %cst_51 = arith.constant 3.200000e+01 : f32
    %120 = vector.broadcast %cst_51 : f32 to vector<2x8x1xf32>
    %121 = arith.divf %119, %120 : vector<2x8x1xf32>
    %122 = vector.broadcast %114 : vector<2x8x1xf32> to vector<2x8x32xf32>
    %123 = arith.subf %106, %122 : vector<2x8x32xf32>
    %cst_52 = arith.constant 9.99999974E-6 : f32
    %124 = vector.broadcast %cst_52 : f32 to vector<2x8x1xf32>
    %125 = arith.addf %121, %124 : vector<2x8x1xf32>
    %126 = math.rsqrt %125 : vector<2x8x1xf32>
    %127 = vector.broadcast %126 : vector<2x8x1xf32> to vector<2x8x32xf32>
    %128 = arith.mulf %123, %127 : vector<2x8x32xf32>
    %129 = vector.shape_cast %108 : vector<1x32xf32> to vector<1x1x32xf32>
    %130 = vector.broadcast %129 : vector<1x1x32xf32> to vector<2x8x32xf32>
    %131 = arith.mulf %128, %130 : vector<2x8x32xf32>
    %132 = vector.shape_cast %110 : vector<1x32xf32> to vector<1x1x32xf32>
    %133 = vector.broadcast %132 : vector<1x1x32xf32> to vector<2x8x32xf32>
    %134 = arith.addf %131, %133 : vector<2x8x32xf32>
    %c0_53 = arith.constant 0 : index
    %c0_54 = arith.constant 0 : index
    %c0_55 = arith.constant 0 : index
    %135 = vector.load %arg8[%c0_53, %c0_54, %c0_55] : memref<1x32x32xbf16, #tpu.memory_space<vmem>>, vector<1x32x32xbf16>
    %136 = vector.shape_cast %135 : vector<1x32x32xbf16> to vector<32x32xbf16>
    %c0_56 = arith.constant 0 : index
    %c0_57 = arith.constant 0 : index
    %c0_58 = arith.constant 0 : index
    %137 = vector.load %arg9[%c0_56, %c0_57, %c0_58] : memref<1x1x32xf32, #tpu.memory_space<vmem>>, vector<1x1x32xf32>
    %138 = vector.shape_cast %137 : vector<1x1x32xf32> to vector<1x32xf32>
    %c0_59 = arith.constant 0 : index
    %c0_60 = arith.constant 0 : index
    %c0_61 = arith.constant 0 : index
    %139 = vector.load %arg10[%c0_59, %c0_60, %c0_61] : memref<1x32x64xbf16, #tpu.memory_space<vmem>>, vector<1x32x64xbf16>
    %140 = vector.shape_cast %139 : vector<1x32x64xbf16> to vector<32x64xbf16>
    %c0_62 = arith.constant 0 : index
    %c0_63 = arith.constant 0 : index
    %c0_64 = arith.constant 0 : index
    %141 = vector.load %arg11[%c0_62, %c0_63, %c0_64] : memref<1x1x64xf32, #tpu.memory_space<vmem>>, vector<1x1x64xf32>
    %142 = vector.shape_cast %141 : vector<1x1x64xf32> to vector<1x64xf32>
    %c0_65 = arith.constant 0 : index
    %c0_66 = arith.constant 0 : index
    %c0_67 = arith.constant 0 : index
    %143 = vector.load %arg12[%c0_65, %c0_66, %c0_67] : memref<1x32x32xbf16, #tpu.memory_space<vmem>>, vector<1x32x32xbf16>
    %144 = vector.shape_cast %143 : vector<1x32x32xbf16> to vector<32x32xbf16>
    %c0_68 = arith.constant 0 : index
    %c0_69 = arith.constant 0 : index
    %c0_70 = arith.constant 0 : index
    %145 = vector.load %arg13[%c0_68, %c0_69, %c0_70] : memref<1x1x32xf32, #tpu.memory_space<vmem>>, vector<1x1x32xf32>
    %146 = vector.shape_cast %145 : vector<1x1x32xf32> to vector<1x32xf32>
    %147 = vector.shape_cast %134 : vector<2x8x32xf32> to vector<16x32xf32>
    %148 = arith.truncf %147 : vector<16x32xf32> to vector<16x32xbf16>
    %cst_71 = arith.constant dense<0.000000e+00> : vector<16x32xf32>
    %149 = tpu.matmul %148, %136, %cst_71 {dimension_numbers = #tpu.dot_dimension_numbers<[1], [0], [0], [1], [0, 0, 1, 1], [], []>} : vector<16x32xbf16>, vector<32x32xbf16>, vector<16x32xf32> -> vector<16x32xf32>
    %150 = vector.broadcast %138 : vector<1x32xf32> to vector<16x32xf32>
    %151 = arith.addf %149, %150 : vector<16x32xf32>
    %152 = arith.truncf %151 : vector<16x32xf32> to vector<16x32xbf16>
    %153 = vector.shape_cast %152 : vector<16x32xbf16> to vector<2x8x32xbf16>
    %154 = vector.shape_cast %4 : vector<2x16x32xbf16> to vector<32x32xbf16>
    %cst_72 = arith.constant dense<0.000000e+00> : vector<32x64xf32>
    %155 = tpu.matmul %154, %140, %cst_72 {dimension_numbers = #tpu.dot_dimension_numbers<[1], [0], [0], [1], [0, 0, 1, 1], [], []>} : vector<32x32xbf16>, vector<32x64xbf16>, vector<32x64xf32> -> vector<32x64xf32>
    %156 = vector.broadcast %142 : vector<1x64xf32> to vector<32x64xf32>
    %157 = arith.addf %155, %156 : vector<32x64xf32>
    %158 = arith.truncf %157 : vector<32x64xf32> to vector<32x64xbf16>
    %159 = vector.extract_strided_slice %158 {offsets = [0, 0], sizes = [32, 32], strides = [1, 1]} : vector<32x64xbf16> to vector<32x32xbf16>
    %160 = vector.shape_cast %159 : vector<32x32xbf16> to vector<2x16x32xbf16>
    %161 = vector.extract_strided_slice %158 {offsets = [0, 32], sizes = [32, 32], strides = [1, 1]} : vector<32x64xbf16> to vector<32x32xbf16>
    %162 = vector.shape_cast %161 : vector<32x32xbf16> to vector<2x16x32xbf16>
    %163 = vector.extract_strided_slice %153 {offsets = [0, 0, 0], sizes = [2, 8, 8], strides = [1, 1, 1]} : vector<2x8x32xbf16> to vector<2x8x8xbf16>
    %164 = vector.extract_strided_slice %160 {offsets = [0, 0, 0], sizes = [2, 16, 8], strides = [1, 1, 1]} : vector<2x16x32xbf16> to vector<2x16x8xbf16>
    "tpu.trace_start"() <{level = 10 : i32, message = "bqe,bke->bqk"}> : () -> ()
    %cst_73 = arith.constant dense<0.000000e+00> : vector<2x8x16xf32>
    %165 = tpu.matmul %163, %164, %cst_73 {dimension_numbers = #tpu.dot_dimension_numbers<[2], [2], [1], [1], [0, 0, 0, 1, 1, 1], [0], [0]>} : vector<2x8x8xbf16>, vector<2x16x8xbf16>, vector<2x8x16xf32> -> vector<2x8x16xf32>
    "tpu.trace_stop"() : () -> ()
    %cst_74 = arith.constant dense<0xFF800000> : vector<2x8xf32>
    %166 = vector.multi_reduction <maximumf>, %165, %cst_74 [2] : vector<2x8x16xf32> to vector<2x8xf32>
    %167 = vector.shape_cast %166 : vector<2x8xf32> to vector<2x8x1xf32>
    %168 = vector.broadcast %167 : vector<2x8x1xf32> to vector<2x8x16xf32>
    %169 = arith.subf %165, %168 : vector<2x8x16xf32>
    %170 = math.exp %169 : vector<2x8x16xf32>
    %cst_75 = arith.constant dense<0.000000e+00> : vector<2x8xf32>
    %171 = vector.multi_reduction <add>, %170, %cst_75 [2] : vector<2x8x16xf32> to vector<2x8xf32>
    %172 = vector.shape_cast %171 : vector<2x8xf32> to vector<2x8x1xf32>
    %173 = tpu.reciprocal %172 {approx = true} : vector<2x8x1xf32> -> vector<2x8x1xf32>
    %174 = vector.broadcast %173 : vector<2x8x1xf32> to vector<2x8x16xf32>
    %175 = arith.mulf %170, %174 : vector<2x8x16xf32>
    %176 = arith.truncf %175 : vector<2x8x16xf32> to vector<2x8x16xbf16>
    %177 = vector.extract_strided_slice %162 {offsets = [0, 0, 0], sizes = [2, 16, 8], strides = [1, 1, 1]} : vector<2x16x32xbf16> to vector<2x16x8xbf16>
    "tpu.trace_start"() <{level = 10 : i32, message = "bqk,bke->bqe"}> : () -> ()
    %cst_76 = arith.constant dense<0.000000e+00> : vector<2x8x8xf32>
    %178 = tpu.matmul %176, %177, %cst_76 {dimension_numbers = #tpu.dot_dimension_numbers<[2], [1], [1], [2], [0, 0, 0, 1, 1, 2], [0], [0]>} : vector<2x8x16xbf16>, vector<2x16x8xbf16>, vector<2x8x8xf32> -> vector<2x8x8xf32>
    "tpu.trace_stop"() : () -> ()
    %179 = vector.shape_cast %178 : vector<2x8x8xf32> to vector<16x8xf32>
    %180 = arith.truncf %179 : vector<16x8xf32> to vector<16x8xbf16>
    %c0_77 = arith.constant 0 : index
    %c0_78 = arith.constant 0 : index
    %181 = vector.load %arg25[%c0_77, %c0_78] : memref<16x32xbf16, #tpu.memory_space<vmem>>, vector<16x8xbf16>
    tpu.vector_store %arg25[%c0_77, %c0_78], %180 {strides = array<i32>} : memref<16x32xbf16, #tpu.memory_space<vmem>>, vector<16x8xbf16>,
    %182 = vector.extract_strided_slice %153 {offsets = [0, 0, 8], sizes = [2, 8, 8], strides = [1, 1, 1]} : vector<2x8x32xbf16> to vector<2x8x8xbf16>
    %183 = vector.extract_strided_slice %160 {offsets = [0, 0, 8], sizes = [2, 16, 8], strides = [1, 1, 1]} : vector<2x16x32xbf16> to vector<2x16x8xbf16>
    "tpu.trace_start"() <{level = 10 : i32, message = "bqe,bke->bqk"}> : () -> ()
    %cst_79 = arith.constant dense<0.000000e+00> : vector<2x8x16xf32>
    %184 = tpu.matmul %182, %183, %cst_79 {dimension_numbers = #tpu.dot_dimension_numbers<[2], [2], [1], [1], [0, 0, 0, 1, 1, 1], [0], [0]>} : vector<2x8x8xbf16>, vector<2x16x8xbf16>, vector<2x8x16xf32> -> vector<2x8x16xf32>
    "tpu.trace_stop"() : () -> ()
    %cst_80 = arith.constant dense<0xFF800000> : vector<2x8xf32>
    %185 = vector.multi_reduction <maximumf>, %184, %cst_80 [2] : vector<2x8x16xf32> to vector<2x8xf32>
    %186 = vector.shape_cast %185 : vector<2x8xf32> to vector<2x8x1xf32>
    %187 = vector.broadcast %186 : vector<2x8x1xf32> to vector<2x8x16xf32>
    %188 = arith.subf %184, %187 : vector<2x8x16xf32>
    %189 = math.exp %188 : vector<2x8x16xf32>
    %cst_81 = arith.constant dense<0.000000e+00> : vector<2x8xf32>
    %190 = vector.multi_reduction <add>, %189, %cst_81 [2] : vector<2x8x16xf32> to vector<2x8xf32>
    %191 = vector.shape_cast %190 : vector<2x8xf32> to vector<2x8x1xf32>
    %192 = tpu.reciprocal %191 {approx = true} : vector<2x8x1xf32> -> vector<2x8x1xf32>
    %193 = vector.broadcast %192 : vector<2x8x1xf32> to vector<2x8x16xf32>
    %194 = arith.mulf %189, %193 : vector<2x8x16xf32>
    %195 = arith.truncf %194 : vector<2x8x16xf32> to vector<2x8x16xbf16>
    %196 = vector.extract_strided_slice %162 {offsets = [0, 0, 8], sizes = [2, 16, 8], strides = [1, 1, 1]} : vector<2x16x32xbf16> to vector<2x16x8xbf16>
    "tpu.trace_start"() <{level = 10 : i32, message = "bqk,bke->bqe"}> : () -> ()
    %cst_82 = arith.constant dense<0.000000e+00> : vector<2x8x8xf32>
    %197 = tpu.matmul %195, %196, %cst_82 {dimension_numbers = #tpu.dot_dimension_numbers<[2], [1], [1], [2], [0, 0, 0, 1, 1, 2], [0], [0]>} : vector<2x8x16xbf16>, vector<2x16x8xbf16>, vector<2x8x8xf32> -> vector<2x8x8xf32>
    "tpu.trace_stop"() : () -> ()
    %198 = vector.shape_cast %197 : vector<2x8x8xf32> to vector<16x8xf32>
    %199 = arith.truncf %198 : vector<16x8xf32> to vector<16x8xbf16>
    %c0_83 = arith.constant 0 : index
    %c8_84 = arith.constant 8 : index
    %200 = vector.load %arg25[%c0_83, %c8_84] : memref<16x32xbf16, #tpu.memory_space<vmem>>, vector<16x8xbf16>
    tpu.vector_store %arg25[%c0_83, %c8_84], %199 {strides = array<i32>} : memref<16x32xbf16, #tpu.memory_space<vmem>>, vector<16x8xbf16>,
    %201 = vector.extract_strided_slice %153 {offsets = [0, 0, 16], sizes = [2, 8, 8], strides = [1, 1, 1]} : vector<2x8x32xbf16> to vector<2x8x8xbf16>
    %202 = vector.extract_strided_slice %160 {offsets = [0, 0, 16], sizes = [2, 16, 8], strides = [1, 1, 1]} : vector<2x16x32xbf16> to vector<2x16x8xbf16>
    "tpu.trace_start"() <{level = 10 : i32, message = "bqe,bke->bqk"}> : () -> ()
    %cst_85 = arith.constant dense<0.000000e+00> : vector<2x8x16xf32>
    %203 = tpu.matmul %201, %202, %cst_85 {dimension_numbers = #tpu.dot_dimension_numbers<[2], [2], [1], [1], [0, 0, 0, 1, 1, 1], [0], [0]>} : vector<2x8x8xbf16>, vector<2x16x8xbf16>, vector<2x8x16xf32> -> vector<2x8x16xf32>
    "tpu.trace_stop"() : () -> ()
    %cst_86 = arith.constant dense<0xFF800000> : vector<2x8xf32>
    %204 = vector.multi_reduction <maximumf>, %203, %cst_86 [2] : vector<2x8x16xf32> to vector<2x8xf32>
    %205 = vector.shape_cast %204 : vector<2x8xf32> to vector<2x8x1xf32>
    %206 = vector.broadcast %205 : vector<2x8x1xf32> to vector<2x8x16xf32>
    %207 = arith.subf %203, %206 : vector<2x8x16xf32>
    %208 = math.exp %207 : vector<2x8x16xf32>
    %cst_87 = arith.constant dense<0.000000e+00> : vector<2x8xf32>
    %209 = vector.multi_reduction <add>, %208, %cst_87 [2] : vector<2x8x16xf32> to vector<2x8xf32>
    %210 = vector.shape_cast %209 : vector<2x8xf32> to vector<2x8x1xf32>
    %211 = tpu.reciprocal %210 {approx = true} : vector<2x8x1xf32> -> vector<2x8x1xf32>
    %212 = vector.broadcast %211 : vector<2x8x1xf32> to vector<2x8x16xf32>
    %213 = arith.mulf %208, %212 : vector<2x8x16xf32>
    %214 = arith.truncf %213 : vector<2x8x16xf32> to vector<2x8x16xbf16>
    %215 = vector.extract_strided_slice %162 {offsets = [0, 0, 16], sizes = [2, 16, 8], strides = [1, 1, 1]} : vector<2x16x32xbf16> to vector<2x16x8xbf16>
    "tpu.trace_start"() <{level = 10 : i32, message = "bqk,bke->bqe"}> : () -> ()
    %cst_88 = arith.constant dense<0.000000e+00> : vector<2x8x8xf32>
    %216 = tpu.matmul %214, %215, %cst_88 {dimension_numbers = #tpu.dot_dimension_numbers<[2], [1], [1], [2], [0, 0, 0, 1, 1, 2], [0], [0]>} : vector<2x8x16xbf16>, vector<2x16x8xbf16>, vector<2x8x8xf32> -> vector<2x8x8xf32>
    "tpu.trace_stop"() : () -> ()
    %217 = vector.shape_cast %216 : vector<2x8x8xf32> to vector<16x8xf32>
    %218 = arith.truncf %217 : vector<16x8xf32> to vector<16x8xbf16>
    %c0_89 = arith.constant 0 : index
    %c16_90 = arith.constant 16 : index
    %219 = vector.load %arg25[%c0_89, %c16_90] : memref<16x32xbf16, #tpu.memory_space<vmem>>, vector<16x8xbf16>
    tpu.vector_store %arg25[%c0_89, %c16_90], %218 {strides = array<i32>} : memref<16x32xbf16, #tpu.memory_space<vmem>>, vector<16x8xbf16>,
    %220 = vector.extract_strided_slice %153 {offsets = [0, 0, 24], sizes = [2, 8, 8], strides = [1, 1, 1]} : vector<2x8x32xbf16> to vector<2x8x8xbf16>
    %221 = vector.extract_strided_slice %160 {offsets = [0, 0, 24], sizes = [2, 16, 8], strides = [1, 1, 1]} : vector<2x16x32xbf16> to vector<2x16x8xbf16>
    "tpu.trace_start"() <{level = 10 : i32, message = "bqe,bke->bqk"}> : () -> ()
    %cst_91 = arith.constant dense<0.000000e+00> : vector<2x8x16xf32>
    %222 = tpu.matmul %220, %221, %cst_91 {dimension_numbers = #tpu.dot_dimension_numbers<[2], [2], [1], [1], [0, 0, 0, 1, 1, 1], [0], [0]>} : vector<2x8x8xbf16>, vector<2x16x8xbf16>, vector<2x8x16xf32> -> vector<2x8x16xf32>
    "tpu.trace_stop"() : () -> ()
    %cst_92 = arith.constant dense<0xFF800000> : vector<2x8xf32>
    %223 = vector.multi_reduction <maximumf>, %222, %cst_92 [2] : vector<2x8x16xf32> to vector<2x8xf32>
    %224 = vector.shape_cast %223 : vector<2x8xf32> to vector<2x8x1xf32>
    %225 = vector.broadcast %224 : vector<2x8x1xf32> to vector<2x8x16xf32>
    %226 = arith.subf %222, %225 : vector<2x8x16xf32>
    %227 = math.exp %226 : vector<2x8x16xf32>
    %cst_93 = arith.constant dense<0.000000e+00> : vector<2x8xf32>
    %228 = vector.multi_reduction <add>, %227, %cst_93 [2] : vector<2x8x16xf32> to vector<2x8xf32>
    %229 = vector.shape_cast %228 : vector<2x8xf32> to vector<2x8x1xf32>
    %230 = tpu.reciprocal %229 {approx = true} : vector<2x8x1xf32> -> vector<2x8x1xf32>
    %231 = vector.broadcast %230 : vector<2x8x1xf32> to vector<2x8x16xf32>
    %232 = arith.mulf %227, %231 : vector<2x8x16xf32>
    %233 = arith.truncf %232 : vector<2x8x16xf32> to vector<2x8x16xbf16>
    %234 = vector.extract_strided_slice %162 {offsets = [0, 0, 24], sizes = [2, 16, 8], strides = [1, 1, 1]} : vector<2x16x32xbf16> to vector<2x16x8xbf16>
    "tpu.trace_start"() <{level = 10 : i32, message = "bqk,bke->bqe"}> : () -> ()
    %cst_94 = arith.constant dense<0.000000e+00> : vector<2x8x8xf32>
    %235 = tpu.matmul %233, %234, %cst_94 {dimension_numbers = #tpu.dot_dimension_numbers<[2], [1], [1], [2], [0, 0, 0, 1, 1, 2], [0], [0]>} : vector<2x8x16xbf16>, vector<2x16x8xbf16>, vector<2x8x8xf32> -> vector<2x8x8xf32>
    "tpu.trace_stop"() : () -> ()
    %236 = vector.shape_cast %235 : vector<2x8x8xf32> to vector<16x8xf32>
    %237 = arith.truncf %236 : vector<16x8xf32> to vector<16x8xbf16>
    %c0_95 = arith.constant 0 : index
    %c24_96 = arith.constant 24 : index
    %238 = vector.load %arg25[%c0_95, %c24_96] : memref<16x32xbf16, #tpu.memory_space<vmem>>, vector<16x8xbf16>
    tpu.vector_store %arg25[%c0_95, %c24_96], %237 {strides = array<i32>} : memref<16x32xbf16, #tpu.memory_space<vmem>>, vector<16x8xbf16>,
    %c0_97 = arith.constant 0 : index
    %c0_98 = arith.constant 0 : index
    %239 = vector.load %arg25[%c0_97, %c0_98] : memref<16x32xbf16, #tpu.memory_space<vmem>>, vector<16x32xbf16>
    %cst_99 = arith.constant dense<0.000000e+00> : vector<16x32xf32>
    %240 = tpu.matmul %239, %144, %cst_99 {dimension_numbers = #tpu.dot_dimension_numbers<[1], [0], [0], [1], [0, 0, 1, 1], [], []>} : vector<16x32xbf16>, vector<32x32xbf16>, vector<16x32xf32> -> vector<16x32xf32>
    %241 = vector.broadcast %146 : vector<1x32xf32> to vector<16x32xf32>
    %242 = arith.addf %240, %241 : vector<16x32xf32>
    %243 = vector.shape_cast %242 : vector<16x32xf32> to vector<2x8x32xf32>
    %244 = arith.addf %134, %243 : vector<2x8x32xf32>
    %c0_100 = arith.constant 0 : index
    %c0_101 = arith.constant 0 : index
    %c0_102 = arith.constant 0 : index
    %245 = vector.load %arg20[%c0_100, %c0_101, %c0_102] : memref<1x1x32xf32, #tpu.memory_space<vmem>>, vector<1x1x32xf32>
    %246 = vector.shape_cast %245 : vector<1x1x32xf32> to vector<1x32xf32>
    %c0_103 = arith.constant 0 : index
    %c0_104 = arith.constant 0 : index
    %c0_105 = arith.constant 0 : index
    %247 = vector.load %arg21[%c0_103, %c0_104, %c0_105] : memref<1x1x32xf32, #tpu.memory_space<vmem>>, vector<1x1x32xf32>
    %248 = vector.shape_cast %247 : vector<1x1x32xf32> to vector<1x32xf32>
    %cst_106 = arith.constant dense<0.000000e+00> : vector<2x8xf32>
    %249 = vector.multi_reduction <add>, %244, %cst_106 [2] : vector<2x8x32xf32> to vector<2x8xf32>
    %250 = vector.shape_cast %249 : vector<2x8xf32> to vector<2x8x1xf32>
    %cst_107 = arith.constant 3.200000e+01 : f32
    %251 = vector.broadcast %cst_107 : f32 to vector<2x8x1xf32>
    %252 = arith.divf %250, %251 : vector<2x8x1xf32>
    %253 = vector.broadcast %252 : vector<2x8x1xf32> to vector<2x8x32xf32>
    %254 = arith.subf %244, %253 : vector<2x8x32xf32>
    %255 = arith.mulf %254, %254 : vector<2x8x32xf32>
    %cst_108 = arith.constant dense<0.000000e+00> : vector<2x8xf32>
    %256 = vector.multi_reduction <add>, %255, %cst_108 [2] : vector<2x8x32xf32> to vector<2x8xf32>
    %257 = vector.shape_cast %256 : vector<2x8xf32> to vector<2x8x1xf32>
    %cst_109 = arith.constant 3.200000e+01 : f32
    %258 = vector.broadcast %cst_109 : f32 to vector<2x8x1xf32>
    %259 = arith.divf %257, %258 : vector<2x8x1xf32>
    %260 = vector.broadcast %252 : vector<2x8x1xf32> to vector<2x8x32xf32>
    %261 = arith.subf %244, %260 : vector<2x8x32xf32>
    %cst_110 = arith.constant 9.99999974E-6 : f32
    %262 = vector.broadcast %cst_110 : f32 to vector<2x8x1xf32>
    %263 = arith.addf %259, %262 : vector<2x8x1xf32>
    %264 = math.rsqrt %263 : vector<2x8x1xf32>
    %265 = vector.broadcast %264 : vector<2x8x1xf32> to vector<2x8x32xf32>
    %266 = arith.mulf %261, %265 : vector<2x8x32xf32>
    %267 = vector.shape_cast %246 : vector<1x32xf32> to vector<1x1x32xf32>
    %268 = vector.broadcast %267 : vector<1x1x32xf32> to vector<2x8x32xf32>
    %269 = arith.mulf %266, %268 : vector<2x8x32xf32>
    %270 = vector.shape_cast %248 : vector<1x32xf32> to vector<1x1x32xf32>
    %271 = vector.broadcast %270 : vector<1x1x32xf32> to vector<2x8x32xf32>
    %272 = arith.addf %269, %271 : vector<2x8x32xf32>
    %273 = vector.shape_cast %272 : vector<2x8x32xf32> to vector<16x32xf32>
    %274 = arith.truncf %273 : vector<16x32xf32> to vector<16x32xbf16>
    %c0_111 = arith.constant 0 : index
    %c0_112 = arith.constant 0 : index
    %c0_113 = arith.constant 0 : index
    %275 = vector.load %arg14[%c0_111, %c0_112, %c0_113] : memref<1x32x64xbf16, #tpu.memory_space<vmem>>, vector<1x32x64xbf16>
    %276 = vector.shape_cast %275 : vector<1x32x64xbf16> to vector<32x64xbf16>
    %cst_114 = arith.constant dense<0.000000e+00> : vector<16x64xf32>
    %277 = tpu.matmul %274, %276, %cst_114 {dimension_numbers = #tpu.dot_dimension_numbers<[1], [0], [0], [1], [0, 0, 1, 1], [], []>} : vector<16x32xbf16>, vector<32x64xbf16>, vector<16x64xf32> -> vector<16x64xf32>
    %c0_115 = arith.constant 0 : index
    %c0_116 = arith.constant 0 : index
    %c0_117 = arith.constant 0 : index
    %278 = vector.load %arg15[%c0_115, %c0_116, %c0_117] : memref<1x1x64xf32, #tpu.memory_space<vmem>>, vector<1x1x64xf32>
    %279 = vector.shape_cast %278 : vector<1x1x64xf32> to vector<1x64xf32>
    %280 = vector.broadcast %279 : vector<1x64xf32> to vector<16x64xf32>
    %281 = arith.addf %277, %280 : vector<16x64xf32>
    %cst_118 = arith.constant 0.000000e+00 : f32
    %282 = vector.broadcast %cst_118 : f32 to vector<16x64xf32>
    %283 = arith.maximumf %281, %282 : vector<16x64xf32>
    %284 = arith.truncf %283 : vector<16x64xf32> to vector<16x64xbf16>
    %c0_119 = arith.constant 0 : index
    %c0_120 = arith.constant 0 : index
    %c0_121 = arith.constant 0 : index
    %285 = vector.load %arg16[%c0_119, %c0_120, %c0_121] : memref<1x64x32xbf16, #tpu.memory_space<vmem>>, vector<1x64x32xbf16>
    %286 = vector.shape_cast %285 : vector<1x64x32xbf16> to vector<64x32xbf16>
    %cst_122 = arith.constant dense<0.000000e+00> : vector<16x32xf32>
    %287 = tpu.matmul %284, %286, %cst_122 {dimension_numbers = #tpu.dot_dimension_numbers<[1], [0], [0], [1], [0, 0, 1, 1], [], []>} : vector<16x64xbf16>, vector<64x32xbf16>, vector<16x32xf32> -> vector<16x32xf32>
    %c0_123 = arith.constant 0 : index
    %c0_124 = arith.constant 0 : index
    %c0_125 = arith.constant 0 : index
    %288 = vector.load %arg17[%c0_123, %c0_124, %c0_125] : memref<1x1x32xf32, #tpu.memory_space<vmem>>, vector<1x1x32xf32>
    %289 = vector.shape_cast %288 : vector<1x1x32xf32> to vector<1x32xf32>
    %290 = vector.broadcast %289 : vector<1x32xf32> to vector<16x32xf32>
    %291 = arith.addf %287, %290 : vector<16x32xf32>
    %292 = vector.shape_cast %291 : vector<16x32xf32> to vector<2x8x32xf32>
    %293 = arith.addf %272, %292 : vector<2x8x32xf32>
    %c0_126 = arith.constant 0 : index
    %c0_127 = arith.constant 0 : index
    %c0_128 = arith.constant 0 : index
    %294 = vector.load %arg22[%c0_126, %c0_127, %c0_128] : memref<1x1x32xf32, #tpu.memory_space<vmem>>, vector<1x1x32xf32>
    %295 = vector.shape_cast %294 : vector<1x1x32xf32> to vector<1x32xf32>
    %c0_129 = arith.constant 0 : index
    %c0_130 = arith.constant 0 : index
    %c0_131 = arith.constant 0 : index
    %296 = vector.load %arg23[%c0_129, %c0_130, %c0_131] : memref<1x1x32xf32, #tpu.memory_space<vmem>>, vector<1x1x32xf32>
    %297 = vector.shape_cast %296 : vector<1x1x32xf32> to vector<1x32xf32>
    %cst_132 = arith.constant dense<0.000000e+00> : vector<2x8xf32>
    %298 = vector.multi_reduction <add>, %293, %cst_132 [2] : vector<2x8x32xf32> to vector<2x8xf32>
    %299 = vector.shape_cast %298 : vector<2x8xf32> to vector<2x8x1xf32>
    %cst_133 = arith.constant 3.200000e+01 : f32
    %300 = vector.broadcast %cst_133 : f32 to vector<2x8x1xf32>
    %301 = arith.divf %299, %300 : vector<2x8x1xf32>
    %302 = vector.broadcast %301 : vector<2x8x1xf32> to vector<2x8x32xf32>
    %303 = arith.subf %293, %302 : vector<2x8x32xf32>
    %304 = arith.mulf %303, %303 : vector<2x8x32xf32>
    %cst_134 = arith.constant dense<0.000000e+00> : vector<2x8xf32>
    %305 = vector.multi_reduction <add>, %304, %cst_134 [2] : vector<2x8x32xf32> to vector<2x8xf32>
    %306 = vector.shape_cast %305 : vector<2x8xf32> to vector<2x8x1xf32>
    %cst_135 = arith.constant 3.200000e+01 : f32
    %307 = vector.broadcast %cst_135 : f32 to vector<2x8x1xf32>
    %308 = arith.divf %306, %307 : vector<2x8x1xf32>
    %309 = vector.broadcast %301 : vector<2x8x1xf32> to vector<2x8x32xf32>
    %310 = arith.subf %293, %309 : vector<2x8x32xf32>
    %cst_136 = arith.constant 9.99999974E-6 : f32
    %311 = vector.broadcast %cst_136 : f32 to vector<2x8x1xf32>
    %312 = arith.addf %308, %311 : vector<2x8x1xf32>
    %313 = math.rsqrt %312 : vector<2x8x1xf32>
    %314 = vector.broadcast %313 : vector<2x8x1xf32> to vector<2x8x32xf32>
    %315 = arith.mulf %310, %314 : vector<2x8x32xf32>
    %316 = vector.shape_cast %295 : vector<1x32xf32> to vector<1x1x32xf32>
    %317 = vector.broadcast %316 : vector<1x1x32xf32> to vector<2x8x32xf32>
    %318 = arith.mulf %315, %317 : vector<2x8x32xf32>
    %319 = vector.shape_cast %297 : vector<1x32xf32> to vector<1x1x32xf32>
    %320 = vector.broadcast %319 : vector<1x1x32xf32> to vector<2x8x32xf32>
    %321 = arith.addf %318, %320 : vector<2x8x32xf32>
    %c0_137 = arith.constant 0 : index
    %c0_138 = arith.constant 0 : index
    %c0_139 = arith.constant 0 : index
    %322 = vector.load %arg24[%c0_137, %c0_138, %c0_139] : memref<2x8x32xf32, #tpu.memory_space<vmem>>, vector<2x8x32xf32>
    tpu.vector_store %arg24[%c0_137, %c0_138, %c0_139], %321 {strides = array<i32>} : memref<2x8x32xf32, #tpu.memory_space<vmem>>, vector<2x8x32xf32>,
    return
  }
  func.func @transform_0(%arg0: i32, %arg1: i32) -> (i32, i32, i32) {
    %c0_i32 = arith.constant 0 : i32
    %c0_i32_0 = arith.constant 0 : i32
    %c0_i32_1 = arith.constant 0 : i32
    %c0_i32_2 = arith.constant 0 : i32
    return %c0_i32, %c0_i32_0, %c0_i32_1 : i32, i32, i32
  }
  func.func @transform_1(%arg0: i32, %arg1: i32) -> (i32, i32, i32) {
    %c0_i32 = arith.constant 0 : i32
    %c0_i32_0 = arith.constant 0 : i32
    %c0_i32_1 = arith.constant 0 : i32
    return %arg0, %c0_i32, %c0_i32_0 : i32, i32, i32
  }
  func.func @transform_2(%arg0: i32, %arg1: i32) -> (i32, i32, i32) {
    %c0_i32 = arith.constant 0 : i32
    %c0_i32_0 = arith.constant 0 : i32
    %c0_i32_1 = arith.constant 0 : i32
    return %arg1, %c0_i32, %c0_i32_0 : i32, i32, i32
  }
  func.func @transform_3(%arg0: i32, %arg1: i32) -> (i32, i32, i32) {
    %c0_i32 = arith.constant 0 : i32
    %c0_i32_0 = arith.constant 0 : i32
    %c0_i32_1 = arith.constant 0 : i32
    return %arg1, %c0_i32, %c0_i32_0 : i32, i32, i32
  }
  func.func @transform_4(%arg0: i32, %arg1: i32) -> (i32, i32, i32) {
    %c0_i32 = arith.constant 0 : i32
    %c0_i32_0 = arith.constant 0 : i32
    %c0_i32_1 = arith.constant 0 : i32
    return %arg1, %c0_i32, %c0_i32_0 : i32, i32, i32
  }
  func.func @transform_5(%arg0: i32, %arg1: i32) -> (i32, i32, i32) {
    %c0_i32 = arith.constant 0 : i32
    %c0_i32_0 = arith.constant 0 : i32
    %c0_i32_1 = arith.constant 0 : i32
    return %arg1, %c0_i32, %c0_i32_0 : i32, i32, i32
  }
  func.func @transform_6(%arg0: i32, %arg1: i32) -> (i32, i32, i32) {
    %c0_i32 = arith.constant 0 : i32
    %c0_i32_0 = arith.constant 0 : i32
    %c0_i32_1 = arith.constant 0 : i32
    return %arg1, %c0_i32, %c0_i32_0 : i32, i32, i32
  }
  func.func @transform_7(%arg0: i32, %arg1: i32) -> (i32, i32, i32) {
    %c0_i32 = arith.constant 0 : i32
    %c0_i32_0 = arith.constant 0 : i32
    %c0_i32_1 = arith.constant 0 : i32
    return %arg1, %c0_i32, %c0_i32_0 : i32, i32, i32
  }
  func.func @transform_8(%arg0: i32, %arg1: i32) -> (i32, i32, i32) {
    %c0_i32 = arith.constant 0 : i32
    %c0_i32_0 = arith.constant 0 : i32
    %c0_i32_1 = arith.constant 0 : i32
    return %arg1, %c0_i32, %c0_i32_0 : i32, i32, i32
  }
  func.func @transform_9(%arg0: i32, %arg1: i32) -> (i32, i32, i32) {
    %c0_i32 = arith.constant 0 : i32
    %c0_i32_0 = arith.constant 0 : i32
    %c0_i32_1 = arith.constant 0 : i32
    return %arg1, %c0_i32, %c0_i32_0 : i32, i32, i32
  }
  func.func @transform_10(%arg0: i32, %arg1: i32) -> (i32, i32, i32) {
    %c0_i32 = arith.constant 0 : i32
    %c0_i32_0 = arith.constant 0 : i32
    %c0_i32_1 = arith.constant 0 : i32
    return %arg1, %c0_i32, %c0_i32_0 : i32, i32, i32
  }
  func.func @transform_11(%arg0: i32, %arg1: i32) -> (i32, i32, i32) {
    %c0_i32 = arith.constant 0 : i32
    %c0_i32_0 = arith.constant 0 : i32
    %c0_i32_1 = arith.constant 0 : i32
    return %arg1, %c0_i32, %c0_i32_0 : i32, i32, i32
  }
  func.func @transform_12(%arg0: i32, %arg1: i32) -> (i32, i32, i32) {
    %c0_i32 = arith.constant 0 : i32
    %c0_i32_0 = arith.constant 0 : i32
    %c0_i32_1 = arith.constant 0 : i32
    return %arg1, %c0_i32, %c0_i32_0 : i32, i32, i32
  }
  func.func @transform_13(%arg0: i32, %arg1: i32) -> (i32, i32, i32) {
    %c0_i32 = arith.constant 0 : i32
    %c0_i32_0 = arith.constant 0 : i32
    %c0_i32_1 = arith.constant 0 : i32
    return %arg1, %c0_i32, %c0_i32_0 : i32, i32, i32
  }
  func.func @transform_14(%arg0: i32, %arg1: i32) -> (i32, i32, i32) {
    %c0_i32 = arith.constant 0 : i32
    %c0_i32_0 = arith.constant 0 : i32
    %c0_i32_1 = arith.constant 0 : i32
    return %arg1, %c0_i32, %c0_i32_0 : i32, i32, i32
  }
  func.func @transform_15(%arg0: i32, %arg1: i32) -> (i32, i32, i32) {
    %c0_i32 = arith.constant 0 : i32
    %c0_i32_0 = arith.constant 0 : i32
    %c0_i32_1 = arith.constant 0 : i32
    return %arg1, %c0_i32, %c0_i32_0 : i32, i32, i32
  }
  func.func @transform_16(%arg0: i32, %arg1: i32) -> (i32, i32, i32) {
    %c0_i32 = arith.constant 0 : i32
    %c0_i32_0 = arith.constant 0 : i32
    %c0_i32_1 = arith.constant 0 : i32
    return %arg1, %c0_i32, %c0_i32_0 : i32, i32, i32
  }
  func.func @transform_17(%arg0: i32, %arg1: i32) -> (i32, i32, i32) {
    %c0_i32 = arith.constant 0 : i32
    %c0_i32_0 = arith.constant 0 : i32
    %c0_i32_1 = arith.constant 0 : i32
    return %arg1, %c0_i32, %c0_i32_0 : i32, i32, i32
  }
  func.func @transform_18(%arg0: i32, %arg1: i32) -> (i32, i32, i32) {
    %c0_i32 = arith.constant 0 : i32
    %c0_i32_0 = arith.constant 0 : i32
    %c0_i32_1 = arith.constant 0 : i32
    return %arg1, %c0_i32, %c0_i32_0 : i32, i32, i32
  }
  func.func @transform_19(%arg0: i32, %arg1: i32) -> (i32, i32, i32) {
    %c0_i32 = arith.constant 0 : i32
    %c0_i32_0 = arith.constant 0 : i32
    %c0_i32_1 = arith.constant 0 : i32
    return %arg1, %c0_i32, %c0_i32_0 : i32, i32, i32
  }
  func.func @transform_20(%arg0: i32, %arg1: i32) -> (i32, i32, i32) {
    %c0_i32 = arith.constant 0 : i32
    %c0_i32_0 = arith.constant 0 : i32
    %c0_i32_1 = arith.constant 0 : i32
    return %arg1, %c0_i32, %c0_i32_0 : i32, i32, i32
  }
  func.func @transform_21(%arg0: i32, %arg1: i32) -> (i32, i32, i32) {
    %c0_i32 = arith.constant 0 : i32
    %c0_i32_0 = arith.constant 0 : i32
    %c0_i32_1 = arith.constant 0 : i32
    return %arg1, %c0_i32, %c0_i32_0 : i32, i32, i32
  }
  func.func @transform_22(%arg0: i32, %arg1: i32) -> (i32, i32, i32) {
    %c0_i32 = arith.constant 0 : i32
    %c0_i32_0 = arith.constant 0 : i32
    %c0_i32_1 = arith.constant 0 : i32
    return %arg0, %c0_i32, %c0_i32_0 : i32, i32, i32
  }
}

</mosaic_0001>

<llo_original>
// kernel: tpu_custom_call.1
$region0: #{tpu_custom_call.1}
  #allocation0 [shape = 'u32[]', space=smem, size = 0x4, offset = 0x4, fixed_abs, tag = 'smem constant byte address 0x4 - core index']
  #allocation1 [shape = 'u32[144,128]{1,0:T(1,128)}', space=vmem, size = 0x12000, scoped, tag = 'internal scratch']
  #allocation2 [shape = 'bf16[16,32]{1,0:T(16,128)(2,1)}', space=vmem, size = 0x1000, scoped, tag = 'scratch operand']
  %s0 = inlined_call_operand.hbm [shape: f32[1,8,32], index: 0, kind: input, shape index: {}]
  %s1 = inlined_call_operand.hbm [shape: bf16[2,16,32], index: 1, kind: input, shape index: {}]
  %s2 = inlined_call_operand.hbm [shape: bf16[2,32,96], index: 2, kind: input, shape index: {}]
  %s3 = inlined_call_operand.hbm [shape: f32[2,1,96], index: 3, kind: input, shape index: {}]
  %s4 = inlined_call_operand.hbm [shape: bf16[2,32,32], index: 4, kind: input, shape index: {}]
  %s5 = inlined_call_operand.hbm [shape: f32[2,1,32], index: 5, kind: input, shape index: {}]
  %s6 = inlined_call_operand.hbm [shape: bf16[2,32,32], index: 6, kind: input, shape index: {}]
  %s7 = inlined_call_operand.hbm [shape: f32[2,1,32], index: 7, kind: input, shape index: {}]
  %s8 = inlined_call_operand.hbm [shape: bf16[2,32,64], index: 8, kind: input, shape index: {}]
  %s9 = inlined_call_operand.hbm [shape: f32[2,1,64], index: 9, kind: input, shape index: {}]
  %s10 = inlined_call_operand.hbm [shape: bf16[2,32,32], index: 10, kind: input, shape index: {}]
  %s11 = inlined_call_operand.hbm [shape: f32[2,1,32], index: 11, kind: input, shape index: {}]
  %s12 = inlined_call_operand.hbm [shape: bf16[2,32,64], index: 12, kind: input, shape index: {}]
  %s13 = inlined_call_operand.hbm [shape: f32[2,1,64], index: 13, kind: input, shape index: {}]
  %s14 = inlined_call_operand.hbm [shape: bf16[2,64,32], index: 14, kind: input, shape index: {}]
  %s15 = inlined_call_operand.hbm [shape: f32[2,1,32], index: 15, kind: input, shape index: {}]
  %s16 = inlined_call_operand.hbm [shape: f32[2,1,32], index: 16, kind: input, shape index: {}]
  %s17 = inlined_call_operand.hbm [shape: f32[2,1,32], index: 17, kind: input, shape index: {}]
  %s18 = inlined_call_operand.hbm [shape: f32[2,1,32], index: 18, kind: input, shape index: {}]
  %s19 = inlined_call_operand.hbm [shape: f32[2,1,32], index: 19, kind: input, shape index: {}]
  %s20 = inlined_call_operand.hbm [shape: f32[2,1,32], index: 20, kind: input, shape index: {}]
  %s21 = inlined_call_operand.hbm [shape: f32[2,1,32], index: 21, kind: input, shape index: {}]
  %s22 = inlined_call_operand.hbm [shape: f32[2,8,32], index: 22, kind: output, shape index: {}]
  %s23 = sld [smem:[#allocation0]]
  $region213: #{tpu_custom_call.1} parent=0
    _
  %s25 = ssub.s32 1, %s23
  %s26 = scalar_select 0, %s25, %s23
  $region1: #{tpu_custom_call.1} parent=0
    #allocation3 [shape = 'u8[4096]{0}', space=vmem, size = 0x1000, scoped, tag = 'input window, operand 0, single buffered']
    #allocation4 [shape = 's32[2]{0}', space=sflag, size = 0x8, scoped, tag = 'scoped memory for tpu_custom_call.1']
    #allocation5 [shape = 's32[2]{0}', space=sflag, size = 0x8, scoped, tag = 'scoped memory for tpu_custom_call.1']
    #allocation6 [shape = 'u8[8192]{0}', space=vmem, size = 0x2000, scoped, tag = 'input window, operand 1, single buffered']
    #allocation7 [shape = 's32[1]{0}', space=sflag, size = 0x4, scoped, tag = 'scoped memory for tpu_custom_call.1']
    #allocation8 [shape = 'u8[16384]{0}', space=vmem, size = 0x4000, scoped, tag = 'input window, operand 2']
    #allocation9 [shape = 'u8[1024]{0}', space=vmem, size = 0x400, scoped, tag = 'input window, operand 3']
    #allocation10 [shape = 'u8[16384]{0}', space=vmem, size = 0x4000, scoped, tag = 'input window, operand 4']
    #allocation11 [shape = 'u8[1024]{0}', space=vmem, size = 0x400, scoped, tag = 'input window, operand 5']
    #allocation12 [shape = 'u8[16384]{0}', space=vmem, size = 0x4000, scoped, tag = 'input window, operand 6']
    #allocation13 [shape = 'u8[1024]{0}', space=vmem, size = 0x400, scoped, tag = 'input window, operand 7']
    #allocation14 [shape = 'u8[16384]{0}', space=vmem, size = 0x4000, scoped, tag = 'input window, operand 8']
    #allocation15 [shape = 'u8[1024]{0}', space=vmem, size = 0x400, scoped, tag = 'input window, operand 9']
    #allocation16 [shape = 'u8[16384]{0}', space=vmem, size = 0x4000, scoped, tag = 'input window, operand 10']
    #allocation17 [shape = 'u8[1024]{0}', space=vmem, size = 0x400, scoped, tag = 'input window, operand 11']
    #allocation18 [shape = 'u8[16384]{0}', space=vmem, size = 0x4000, scoped, tag = 'input window, operand 12']
    #allocation19 [shape = 'u8[1024]{0}', space=vmem, size = 0x400, scoped, tag = 'input window, operand 13']
    #allocation20 [shape = 'u8[32768]{0}', space=vmem, size = 0x8000, scoped, tag = 'input window, operand 14']
    #allocation21 [shape = 'u8[1024]{0}', space=vmem, size = 0x400, scoped, tag = 'input window, operand 15']
    #allocation22 [shape = 'u8[1024]{0}', space=vmem, size = 0x400, scoped, tag = 'input window, operand 16']
    #allocation23 [shape = 'u8[1024]{0}', space=vmem, size = 0x400, scoped, tag = 'input window, operand 17']
    #allocation24 [shape = 'u8[1024]{0}', space=vmem, size = 0x400, scoped, tag = 'input window, operand 18']
    #allocation25 [shape = 'u8[1024]{0}', space=vmem, size = 0x400, scoped, tag = 'input window, operand 19']
    #allocation26 [shape = 'u8[1024]{0}', space=vmem, size = 0x400, scoped, tag = 'input window, operand 20']
    #allocation27 [shape = 'u8[1024]{0}', space=vmem, size = 0x400, scoped, tag = 'input window, operand 21']
    #allocation28 [shape = 'u8[8192]{0}', space=vmem, size = 0x2000, scoped, tag = 'output window, operand 0, single buffered']
    %27 = vsyncpa [#allocation4], 0
    %28 = vsyncpa [#allocation7], 0
    %29 = vsyncpa [#allocation5], 0
    loop: start=0, step=1, limit=4
    $region2: #{tpu_custom_call.1} parent=1 // loop_pre_header
      _
    $region3: #{tpu_custom_call.1} parent=1 // loop_header
      %s31 = sphi 0, %s35
      %p32 = scmp.ge.s32.totalorder %s31, 4
      %s38 = sphi 0, %s50
      %s39 = sphi 0, %s46
      %s40 = sphi 0, %s38
      %s41 = sphi 0, %s39
      %s42 = sphi 0, %s40
      %s43 = sphi 0, %s41
      %s51 = sphi 0, %s51
      %s53 = sphi 0, %s51
      %s54 = sphi 0, %s53
      %s68 = sphi 0, %s54
      %s74 = sphi 0, %s76
      %s77 = sphi 0, %s74
      %s78 = sphi 0, %s77
      %s94 = sphi 0, %s78
      %s100 = sphi 0, %s102
      %s103 = sphi 0, %s100
      %s104 = sphi 0, %s103
      %s120 = sphi 0, %s104
      %s126 = sphi 0, %s128
      %s129 = sphi 0, %s126
      %s130 = sphi 0, %s129
      %s146 = sphi 0, %s130
      %s152 = sphi 0, %s154
      %s155 = sphi 0, %s152
      %s156 = sphi 0, %s155
      %s172 = sphi 0, %s156
      %s178 = sphi 0, %s180
      %s181 = sphi 0, %s178
      %s182 = sphi 0, %s181
      %s198 = sphi 0, %s182
      %s204 = sphi 0, %s206
      %s207 = sphi 0, %s204
      %s208 = sphi 0, %s207
      %s224 = sphi 0, %s208
      %s230 = sphi 0, %s232
      %s233 = sphi 0, %s230
      %s234 = sphi 0, %s233
      %s250 = sphi 0, %s234
      %s256 = sphi 0, %s258
      %s259 = sphi 0, %s256
      %s260 = sphi 0, %s259
      %s276 = sphi 0, %s260
      %s282 = sphi 0, %s284
      %s285 = sphi 0, %s282
      %s286 = sphi 0, %s285
      %s302 = sphi 0, %s286
      %s308 = sphi 0, %s310
      %s311 = sphi 0, %s308
      %s312 = sphi 0, %s311
      %s328 = sphi 0, %s312
      %s334 = sphi 0, %s336
      %s337 = sphi 0, %s334
      %s338 = sphi 0, %s337
      %s354 = sphi 0, %s338
      %s360 = sphi 0, %s362
      %s363 = sphi 0, %s360
      %s364 = sphi 0, %s363
      %s380 = sphi 0, %s364
      %s386 = sphi 0, %s388
      %s389 = sphi 0, %s386
      %s390 = sphi 0, %s389
      %s406 = sphi 0, %s390
      %s412 = sphi 0, %s414
      %s415 = sphi 0, %s412
      %s416 = sphi 0, %s415
      %s432 = sphi 0, %s416
      %s438 = sphi 0, %s440
      %s441 = sphi 0, %s438
      %s442 = sphi 0, %s441
      %s458 = sphi 0, %s442
      %s464 = sphi 0, %s466
      %s467 = sphi 0, %s464
      %s468 = sphi 0, %s467
      %s484 = sphi 0, %s468
      %s490 = sphi 0, %s492
      %s493 = sphi 0, %s490
      %s494 = sphi 0, %s493
      %s510 = sphi 0, %s494
      %s516 = sphi 0, %s518
      %s519 = sphi 0, %s516
      %s520 = sphi 0, %s519
      %s536 = sphi 0, %s520
      %s542 = sphi 0, %s544
      %s545 = sphi 0, %s542
      %s546 = sphi 0, %s545
      %s562 = sphi 0, %s546
      %s568 = sphi 0, %s570
      %s571 = sphi 0, %s568
      %s572 = sphi 0, %s571
      %s588 = sphi 0, %s572
      %s594 = sphi 0, %s596
      %s597 = sphi 0, %s594
      %s598 = sphi 0, %s597
      %s614 = sphi 0, %s598
      %s620 = sphi 0, %s622
      %s623 = sphi 0, %s620
      %s624 = sphi 0, %s623
      %s640 = sphi 0, %s624
    $region4: #{tpu_custom_call.1} parent=1 // loop_header_branch
      %34 = sbr.rel (%p32) target = $region8
    $region5: #{tpu_custom_call.1} parent=1 // loop_body
      %s36 = ssub.s32 %s31, 1
      %s37 = ssub.s32 %s31, 2
      %s44 = sadd.s32 1, %s39
      %p45 = scmp.ge.s32.totalorder %s44, 2
      %s46 = scalar_select %p45, 0, %s44
      %s47 = sadd.s32 1, %s38
      %s48 = scalar_select %p45, %s47, %s38
      %p49 = scmp.ge.s32.totalorder %s48, 1
      %s50 = scalar_select %p49, 0, %s48
      %s52 = sadd.s32 %s51, 1
      %p55 = scmp.eq.s32.totalorder %s31, 1
      %p56 = scmp.ne.s32.totalorder %s51, %s53
      %p57 = scmp.eq.s32.totalorder %s31, 0
      %p58 = por %p56, %p57
      %p59 = scmp.ne.s32.totalorder %s51, %s53
      %p60 = scmp.eq.s32.totalorder %s36, 1
      %p61 = por %p59, %p60
      %p62 = scmp.ne.s32.totalorder %s53, %s54
      %p63 = scmp.eq.s32.totalorder %s36, 0
      %p64 = por %p62, %p63
      %p65 = scmp.ne.s32.totalorder %s53, %s54
      %p66 = scmp.eq.s32.totalorder %s37, 1
      %p67 = por %p65, %p66
      %p69 = scmp.ne.s32.totalorder %s54, %s68
      %p70 = scmp.eq.s32.totalorder %s37, 0
      %p71 = por %p69, %p70
      %s72 = ssub.s32 %s38, %s50
      %p73 = scmp.eq.s32.totalorder %s72, 0
      %s75 = sadd.s32 %s74, 1
      %s76 = scalar_select %p73, %s74, %s75
      %p79 = pneg %p73
      %p80 = scmp.eq.s32.totalorder %s31, 1
      %p81 = por %p79, %p80
      %p82 = scmp.ne.s32.totalorder %s74, %s77
      %p83 = scmp.eq.s32.totalorder %s31, 0
      %p84 = por %p82, %p83
      %p85 = scmp.ne.s32.totalorder %s74, %s77
      %p86 = scmp.eq.s32.totalorder %s36, 1
      %p87 = por %p85, %p86
      %p88 = scmp.ne.s32.totalorder %s77, %s78
      %p89 = scmp.eq.s32.totalorder %s36, 0
      %p90 = por %p88, %p89
      %p91 = scmp.ne.s32.totalorder %s77, %s78
      %p92 = scmp.eq.s32.totalorder %s37, 1
      %p93 = por %p91, %p92
      %p95 = scmp.ne.s32.totalorder %s78, %s94
      %p96 = scmp.eq.s32.totalorder %s37, 0
      %p97 = por %p95, %p96
      %s98 = ssub.s32 %s39, %s46
      %p99 = scmp.eq.s32.totalorder %s98, 0
      %s101 = sadd.s32 %s100, 1
      %s102 = scalar_select %p99, %s100, %s101
      %p105 = pneg %p99
      %p106 = scmp.eq.s32.totalorder %s31, 1
      %p107 = por %p105, %p106
      %p108 = scmp.ne.s32.totalorder %s100, %s103
      %p109 = scmp.eq.s32.totalorder %s31, 0
      %p110 = por %p108, %p109
      %p111 = scmp.ne.s32.totalorder %s100, %s103
      %p112 = scmp.eq.s32.totalorder %s36, 1
      %p113 = por %p111, %p112
      %p114 = scmp.ne.s32.totalorder %s103, %s104
      %p115 = scmp.eq.s32.totalorder %s36, 0
      %p116 = por %p114, %p115
      %p117 = scmp.ne.s32.totalorder %s103, %s104
      %p118 = scmp.eq.s32.totalorder %s37, 1
      %p119 = por %p117, %p118
      %p121 = scmp.ne.s32.totalorder %s104, %s120
      %p122 = scmp.eq.s32.totalorder %s37, 0
      %p123 = por %p121, %p122
      %s124 = ssub.s32 %s39, %s46
      %p125 = scmp.eq.s32.totalorder %s124, 0
      %s127 = sadd.s32 %s126, 1
      %s128 = scalar_select %p125, %s126, %s127
      %p131 = pneg %p125
      %p132 = scmp.eq.s32.totalorder %s31, 1
      %p133 = por %p131, %p132
      %p134 = scmp.ne.s32.totalorder %s126, %s129
      %p135 = scmp.eq.s32.totalorder %s31, 0
      %p136 = por %p134, %p135
      %p137 = scmp.ne.s32.totalorder %s126, %s129
      %p138 = scmp.eq.s32.totalorder %s36, 1
      %p139 = por %p137, %p138
      %p140 = scmp.ne.s32.totalorder %s129, %s130
      %p141 = scmp.eq.s32.totalorder %s36, 0
      %p142 = por %p140, %p141
      %p143 = scmp.ne.s32.totalorder %s129, %s130
      %p144 = scmp.eq.s32.totalorder %s37, 1
      %p145 = por %p143, %p144
      %p147 = scmp.ne.s32.totalorder %s130, %s146
      %p148 = scmp.eq.s32.totalorder %s37, 0
      %p149 = por %p147, %p148
      %s150 = ssub.s32 %s39, %s46
      %p151 = scmp.eq.s32.totalorder %s150, 0
      %s153 = sadd.s32 %s152, 1
      %s154 = scalar_select %p151, %s152, %s153
      %p157 = pneg %p151
      %p158 = scmp.eq.s32.totalorder %s31, 1
      %p159 = por %p157, %p158
      %p160 = scmp.ne.s32.totalorder %s152, %s155
      %p161 = scmp.eq.s32.totalorder %s31, 0
      %p162 = por %p160, %p161
      %p163 = scmp.ne.s32.totalorder %s152, %s155
      %p164 = scmp.eq.s32.totalorder %s36, 1
      %p165 = por %p163, %p164
      %p166 = scmp.ne.s32.totalorder %s155, %s156
      %p167 = scmp.eq.s32.totalorder %s36, 0
      %p168 = por %p166, %p167
      %p169 = scmp.ne.s32.totalorder %s155, %s156
      %p170 = scmp.eq.s32.totalorder %s37, 1
      %p171 = por %p169, %p170
      %p173 = scmp.ne.s32.totalorder %s156, %s172
      %p174 = scmp.eq.s32.totalorder %s37, 0
      %p175 = por %p173, %p174
      %s176 = ssub.s32 %s39, %s46
      %p177 = scmp.eq.s32.totalorder %s176, 0
      %s179 = sadd.s32 %s178, 1
      %s180 = scalar_select %p177, %s178, %s179
      %p183 = pneg %p177
      %p184 = scmp.eq.s32.totalorder %s31, 1
      %p185 = por %p183, %p184
      %p186 = scmp.ne.s32.totalorder %s178, %s181
      %p187 = scmp.eq.s32.totalorder %s31, 0
      %p188 = por %p186, %p187
      %p189 = scmp.ne.s32.totalorder %s178, %s181
      %p190 = scmp.eq.s32.totalorder %s36, 1
      %p191 = por %p189, %p190
      %p192 = scmp.ne.s32.totalorder %s181, %s182
      %p193 = scmp.eq.s32.totalorder %s36, 0
      %p194 = por %p192, %p193
      %p195 = scmp.ne.s32.totalorder %s181, %s182
      %p196 = scmp.eq.s32.totalorder %s37, 1
      %p197 = por %p195, %p196
      %p199 = scmp.ne.s32.totalorder %s182, %s198
      %p200 = scmp.eq.s32.totalorder %s37, 0
      %p201 = por %p199, %p200
      %s202 = ssub.s32 %s39, %s46
      %p203 = scmp.eq.s32.totalorder %s202, 0
      %s205 = sadd.s32 %s204, 1
      %s206 = scalar_select %p203, %s204, %s205
      %p209 = pneg %p203
      %p210 = scmp.eq.s32.totalorder %s31, 1
      %p211 = por %p209, %p210
      %p212 = scmp.ne.s32.totalorder %s204, %s207
      %p213 = scmp.eq.s32.totalorder %s31, 0
      %p214 = por %p212, %p213
      %p215 = scmp.ne.s32.totalorder %s204, %s207
      %p216 = scmp.eq.s32.totalorder %s36, 1
      %p217 = por %p215, %p216
      %p218 = scmp.ne.s32.totalorder %s207, %s208
      %p219 = scmp.eq.s32.totalorder %s36, 0
      %p220 = por %p218, %p219
      %p221 = scmp.ne.s32.totalorder %s207, %s208
      %p222 = scmp.eq.s32.totalorder %s37, 1
      %p223 = por %p221, %p222
      %p225 = scmp.ne.s32.totalorder %s208, %s224
      %p226 = scmp.eq.s32.totalorder %s37, 0
      %p227 = por %p225, %p226
      %s228 = ssub.s32 %s39, %s46
      %p229 = scmp.eq.s32.totalorder %s228, 0
      %s231 = sadd.s32 %s230, 1
      %s232 = scalar_select %p229, %s230, %s231
      %p235 = pneg %p229
      %p236 = scmp.eq.s32.totalorder %s31, 1
      %p237 = por %p235, %p236
      %p238 = scmp.ne.s32.totalorder %s230, %s233
      %p239 = scmp.eq.s32.totalorder %s31, 0
      %p240 = por %p238, %p239
      %p241 = scmp.ne.s32.totalorder %s230, %s233
      %p242 = scmp.eq.s32.totalorder %s36, 1
      %p243 = por %p241, %p242
      %p244 = scmp.ne.s32.totalorder %s233, %s234
      %p245 = scmp.eq.s32.totalorder %s36, 0
      %p246 = por %p244, %p245
      %p247 = scmp.ne.s32.totalorder %s233, %s234
      %p248 = scmp.eq.s32.totalorder %s37, 1
      %p249 = por %p247, %p248
      %p251 = scmp.ne.s32.totalorder %s234, %s250
      %p252 = scmp.eq.s32.totalorder %s37, 0
      %p253 = por %p251, %p252
      %s254 = ssub.s32 %s39, %s46
      %p255 = scmp.eq.s32.totalorder %s254, 0
      %s257 = sadd.s32 %s256, 1
      %s258 = scalar_select %p255, %s256, %s257
      %p261 = pneg %p255
      %p262 = scmp.eq.s32.totalorder %s31, 1
      %p263 = por %p261, %p262
      %p264 = scmp.ne.s32.totalorder %s256, %s259
      %p265 = scmp.eq.s32.totalorder %s31, 0
      %p266 = por %p264, %p265
      %p267 = scmp.ne.s32.totalorder %s256, %s259
      %p268 = scmp.eq.s32.totalorder %s36, 1
      %p269 = por %p267, %p268
      %p270 = scmp.ne.s32.totalorder %s259, %s260
      %p271 = scmp.eq.s32.totalorder %s36, 0
      %p272 = por %p270, %p271
      %p273 = scmp.ne.s32.totalorder %s259, %s260
      %p274 = scmp.eq.s32.totalorder %s37, 1
      %p275 = por %p273, %p274
      %p277 = scmp.ne.s32.totalorder %s260, %s276
      %p278 = scmp.eq.s32.totalorder %s37, 0
      %p279 = por %p277, %p278
      %s280 = ssub.s32 %s39, %s46
      %p281 = scmp.eq.s32.totalorder %s280, 0
      %s283 = sadd.s32 %s282, 1
      %s284 = scalar_select %p281, %s282, %s283
      %p287 = pneg %p281
      %p288 = scmp.eq.s32.totalorder %s31, 1
      %p289 = por %p287, %p288
      %p290 = scmp.ne.s32.totalorder %s282, %s285
      %p291 = scmp.eq.s32.totalorder %s31, 0
      %p292 = por %p290, %p291
      %p293 = scmp.ne.s32.totalorder %s282, %s285
      %p294 = scmp.eq.s32.totalorder %s36, 1
      %p295 = por %p293, %p294
      %p296 = scmp.ne.s32.totalorder %s285, %s286
      %p297 = scmp.eq.s32.totalorder %s36, 0
      %p298 = por %p296, %p297
      %p299 = scmp.ne.s32.totalorder %s285, %s286
      %p300 = scmp.eq.s32.totalorder %s37, 1
      %p301 = por %p299, %p300
      %p303 = scmp.ne.s32.totalorder %s286, %s302
      %p304 = scmp.eq.s32.totalorder %s37, 0
      %p305 = por %p303, %p304
      %s306 = ssub.s32 %s39, %s46
      %p307 = scmp.eq.s32.totalorder %s306, 0
      %s309 = sadd.s32 %s308, 1
      %s310 = scalar_select %p307, %s308, %s309
      %p313 = pneg %p307
      %p314 = scmp.eq.s32.totalorder %s31, 1
      %p315 = por %p313, %p314
      %p316 = scmp.ne.s32.totalorder %s308, %s311
      %p317 = scmp.eq.s32.totalorder %s31, 0
      %p318 = por %p316, %p317
      %p319 = scmp.ne.s32.totalorder %s308, %s311
      %p320 = scmp.eq.s32.totalorder %s36, 1
      %p321 = por %p319, %p320
      %p322 = scmp.ne.s32.totalorder %s311, %s312
      %p323 = scmp.eq.s32.totalorder %s36, 0
      %p324 = por %p322, %p323
      %p325 = scmp.ne.s32.totalorder %s311, %s312
      %p326 = scmp.eq.s32.totalorder %s37, 1
      %p327 = por %p325, %p326
      %p329 = scmp.ne.s32.totalorder %s312, %s328
      %p330 = scmp.eq.s32.totalorder %s37, 0
      %p331 = por %p329, %p330
      %s332 = ssub.s32 %s39, %s46
      %p333 = scmp.eq.s32.totalorder %s332, 0
      %s335 = sadd.s32 %s334, 1
      %s336 = scalar_select %p333, %s334, %s335
      %p339 = pneg %p333
      %p340 = scmp.eq.s32.totalorder %s31, 1
      %p341 = por %p339, %p340
      %p342 = scmp.ne.s32.totalorder %s334, %s337
      %p343 = scmp.eq.s32.totalorder %s31, 0
      %p344 = por %p342, %p343
      %p345 = scmp.ne.s32.totalorder %s334, %s337
      %p346 = scmp.eq.s32.totalorder %s36, 1
      %p347 = por %p345, %p346
      %p348 = scmp.ne.s32.totalorder %s337, %s338
      %p349 = scmp.eq.s32.totalorder %s36, 0
      %p350 = por %p348, %p349
      %p351 = scmp.ne.s32.totalorder %s337, %s338
      %p352 = scmp.eq.s32.totalorder %s37, 1
      %p353 = por %p351, %p352
      %p355 = scmp.ne.s32.totalorder %s338, %s354
      %p356 = scmp.eq.s32.totalorder %s37, 0
      %p357 = por %p355, %p356
      %s358 = ssub.s32 %s39, %s46
      %p359 = scmp.eq.s32.totalorder %s358, 0
      %s361 = sadd.s32 %s360, 1
      %s362 = scalar_select %p359, %s360, %s361
      %p365 = pneg %p359
      %p366 = scmp.eq.s32.totalorder %s31, 1
      %p367 = por %p365, %p366
      %p368 = scmp.ne.s32.totalorder %s360, %s363
      %p369 = scmp.eq.s32.totalorder %s31, 0
      %p370 = por %p368, %p369
      %p371 = scmp.ne.s32.totalorder %s360, %s363
      %p372 = scmp.eq.s32.totalorder %s36, 1
      %p373 = por %p371, %p372
      %p374 = scmp.ne.s32.totalorder %s363, %s364
      %p375 = scmp.eq.s32.totalorder %s36, 0
      %p376 = por %p374, %p375
      %p377 = scmp.ne.s32.totalorder %s363, %s364
      %p378 = scmp.eq.s32.totalorder %s37, 1
      %p379 = por %p377, %p378
      %p381 = scmp.ne.s32.totalorder %s364, %s380
      %p382 = scmp.eq.s32.totalorder %s37, 0
      %p383 = por %p381, %p382
      %s384 = ssub.s32 %s39, %s46
      %p385 = scmp.eq.s32.totalorder %s384, 0
      %s387 = sadd.s32 %s386, 1
      %s388 = scalar_select %p385, %s386, %s387
      %p391 = pneg %p385
      %p392 = scmp.eq.s32.totalorder %s31, 1
      %p393 = por %p391, %p392
      %p394 = scmp.ne.s32.totalorder %s386, %s389
      %p395 = scmp.eq.s32.totalorder %s31, 0
      %p396 = por %p394, %p395
      %p397 = scmp.ne.s32.totalorder %s386, %s389
      %p398 = scmp.eq.s32.totalorder %s36, 1
      %p399 = por %p397, %p398
      %p400 = scmp.ne.s32.totalorder %s389, %s390
      %p401 = scmp.eq.s32.totalorder %s36, 0
      %p402 = por %p400, %p401
      %p403 = scmp.ne.s32.totalorder %s389, %s390
      %p404 = scmp.eq.s32.totalorder %s37, 1
      %p405 = por %p403, %p404
      %p407 = scmp.ne.s32.totalorder %s390, %s406
      %p408 = scmp.eq.s32.totalorder %s37, 0
      %p409 = por %p407, %p408
      %s410 = ssub.s32 %s39, %s46
      %p411 = scmp.eq.s32.totalorder %s410, 0
      %s413 = sadd.s32 %s412, 1
      %s414 = scalar_select %p411, %s412, %s413
      %p417 = pneg %p411
      %p418 = scmp.eq.s32.totalorder %s31, 1
      %p419 = por %p417, %p418
      %p420 = scmp.ne.s32.totalorder %s412, %s415
      %p421 = scmp.eq.s32.totalorder %s31, 0
      %p422 = por %p420, %p421
      %p423 = scmp.ne.s32.totalorder %s412, %s415
      %p424 = scmp.eq.s32.totalorder %s36, 1
      %p425 = por %p423, %p424
      %p426 = scmp.ne.s32.totalorder %s415, %s416
      %p427 = scmp.eq.s32.totalorder %s36, 0
      %p428 = por %p426, %p427
      %p429 = scmp.ne.s32.totalorder %s415, %s416
      %p430 = scmp.eq.s32.totalorder %s37, 1
      %p431 = por %p429, %p430
      %p433 = scmp.ne.s32.totalorder %s416, %s432
      %p434 = scmp.eq.s32.totalorder %s37, 0
      %p435 = por %p433, %p434
      %s436 = ssub.s32 %s39, %s46
      %p437 = scmp.eq.s32.totalorder %s436, 0
      %s439 = sadd.s32 %s438, 1
      %s440 = scalar_select %p437, %s438, %s439
      %p443 = pneg %p437
      %p444 = scmp.eq.s32.totalorder %s31, 1
      %p445 = por %p443, %p444
      %p446 = scmp.ne.s32.totalorder %s438, %s441
      %p447 = scmp.eq.s32.totalorder %s31, 0
      %p448 = por %p446, %p447
      %p449 = scmp.ne.s32.totalorder %s438, %s441
      %p450 = scmp.eq.s32.totalorder %s36, 1
      %p451 = por %p449, %p450
      %p452 = scmp.ne.s32.totalorder %s441, %s442
      %p453 = scmp.eq.s32.totalorder %s36, 0
      %p454 = por %p452, %p453
      %p455 = scmp.ne.s32.totalorder %s441, %s442
      %p456 = scmp.eq.s32.totalorder %s37, 1
      %p457 = por %p455, %p456
      %p459 = scmp.ne.s32.totalorder %s442, %s458
      %p460 = scmp.eq.s32.totalorder %s37, 0
      %p461 = por %p459, %p460
      %s462 = ssub.s32 %s39, %s46
      %p463 = scmp.eq.s32.totalorder %s462, 0
      %s465 = sadd.s32 %s464, 1
      %s466 = scalar_select %p463, %s464, %s465
      %p469 = pneg %p463
      %p470 = scmp.eq.s32.totalorder %s31, 1
      %p471 = por %p469, %p470
      %p472 = scmp.ne.s32.totalorder %s464, %s467
      %p473 = scmp.eq.s32.totalorder %s31, 0
      %p474 = por %p472, %p473
      %p475 = scmp.ne.s32.totalorder %s464, %s467
      %p476 = scmp.eq.s32.totalorder %s36, 1
      %p477 = por %p475, %p476
      %p478 = scmp.ne.s32.totalorder %s467, %s468
      %p479 = scmp.eq.s32.totalorder %s36, 0
      %p480 = por %p478, %p479
      %p481 = scmp.ne.s32.totalorder %s467, %s468
      %p482 = scmp.eq.s32.totalorder %s37, 1
      %p483 = por %p481, %p482
      %p485 = scmp.ne.s32.totalorder %s468, %s484
      %p486 = scmp.eq.s32.totalorder %s37, 0
      %p487 = por %p485, %p486
      %s488 = ssub.s32 %s39, %s46
      %p489 = scmp.eq.s32.totalorder %s488, 0
      %s491 = sadd.s32 %s490, 1
      %s492 = scalar_select %p489, %s490, %s491
      %p495 = pneg %p489
      %p496 = scmp.eq.s32.totalorder %s31, 1
      %p497 = por %p495, %p496
      %p498 = scmp.ne.s32.totalorder %s490, %s493
      %p499 = scmp.eq.s32.totalorder %s31, 0
      %p500 = por %p498, %p499
      %p501 = scmp.ne.s32.totalorder %s490, %s493
      %p502 = scmp.eq.s32.totalorder %s36, 1
      %p503 = por %p501, %p502
      %p504 = scmp.ne.s32.totalorder %s493, %s494
      %p505 = scmp.eq.s32.totalorder %s36, 0
      %p506 = por %p504, %p505
      %p507 = scmp.ne.s32.totalorder %s493, %s494
      %p508 = scmp.eq.s32.totalorder %s37, 1
      %p509 = por %p507, %p508
      %p511 = scmp.ne.s32.totalorder %s494, %s510
      %p512 = scmp.eq.s32.totalorder %s37, 0
      %p513 = por %p511, %p512
      %s514 = ssub.s32 %s39, %s46
      %p515 = scmp.eq.s32.totalorder %s514, 0
      %s517 = sadd.s32 %s516, 1
      %s518 = scalar_select %p515, %s516, %s517
      %p521 = pneg %p515
      %p522 = scmp.eq.s32.totalorder %s31, 1
      %p523 = por %p521, %p522
      %p524 = scmp.ne.s32.totalorder %s516, %s519
      %p525 = scmp.eq.s32.totalorder %s31, 0
      %p526 = por %p524, %p525
      %p527 = scmp.ne.s32.totalorder %s516, %s519
      %p528 = scmp.eq.s32.totalorder %s36, 1
      %p529 = por %p527, %p528
      %p530 = scmp.ne.s32.totalorder %s519, %s520
      %p531 = scmp.eq.s32.totalorder %s36, 0
      %p532 = por %p530, %p531
      %p533 = scmp.ne.s32.totalorder %s519, %s520
      %p534 = scmp.eq.s32.totalorder %s37, 1
      %p535 = por %p533, %p534
      %p537 = scmp.ne.s32.totalorder %s520, %s536
      %p538 = scmp.eq.s32.totalorder %s37, 0
      %p539 = por %p537, %p538
      %s540 = ssub.s32 %s39, %s46
      %p541 = scmp.eq.s32.totalorder %s540, 0
      %s543 = sadd.s32 %s542, 1
      %s544 = scalar_select %p541, %s542, %s543
      %p547 = pneg %p541
      %p548 = scmp.eq.s32.totalorder %s31, 1
      %p549 = por %p547, %p548
      %p550 = scmp.ne.s32.totalorder %s542, %s545
      %p551 = scmp.eq.s32.totalorder %s31, 0
      %p552 = por %p550, %p551
      %p553 = scmp.ne.s32.totalorder %s542, %s545
      %p554 = scmp.eq.s32.totalorder %s36, 1
      %p555 = por %p553, %p554
      %p556 = scmp.ne.s32.totalorder %s545, %s546
      %p557 = scmp.eq.s32.totalorder %s36, 0
      %p558 = por %p556, %p557
      %p559 = scmp.ne.s32.totalorder %s545, %s546
      %p560 = scmp.eq.s32.totalorder %s37, 1
      %p561 = por %p559, %p560
      %p563 = scmp.ne.s32.totalorder %s546, %s562
      %p564 = scmp.eq.s32.totalorder %s37, 0
      %p565 = por %p563, %p564
      %s566 = ssub.s32 %s39, %s46
      %p567 = scmp.eq.s32.totalorder %s566, 0
      %s569 = sadd.s32 %s568, 1
      %s570 = scalar_select %p567, %s568, %s569
      %p573 = pneg %p567
      %p574 = scmp.eq.s32.totalorder %s31, 1
      %p575 = por %p573, %p574
      %p576 = scmp.ne.s32.totalorder %s568, %s571
      %p577 = scmp.eq.s32.totalorder %s31, 0
      %p578 = por %p576, %p577
      %p579 = scmp.ne.s32.totalorder %s568, %s571
      %p580 = scmp.eq.s32.totalorder %s36, 1
      %p581 = por %p579, %p580
      %p582 = scmp.ne.s32.totalorder %s571, %s572
      %p583 = scmp.eq.s32.totalorder %s36, 0
      %p584 = por %p582, %p583
      %p585 = scmp.ne.s32.totalorder %s571, %s572
      %p586 = scmp.eq.s32.totalorder %s37, 1
      %p587 = por %p585, %p586
      %p589 = scmp.ne.s32.totalorder %s572, %s588
      %p590 = scmp.eq.s32.totalorder %s37, 0
      %p591 = por %p589, %p590
      %s592 = ssub.s32 %s39, %s46
      %p593 = scmp.eq.s32.totalorder %s592, 0
      %s595 = sadd.s32 %s594, 1
      %s596 = scalar_select %p593, %s594, %s595
      %p599 = pneg %p593
      %p600 = scmp.eq.s32.totalorder %s31, 1
      %p601 = por %p599, %p600
      %p602 = scmp.ne.s32.totalorder %s594, %s597
      %p603 = scmp.eq.s32.totalorder %s31, 0
      %p604 = por %p602, %p603
      %p605 = scmp.ne.s32.totalorder %s594, %s597
      %p606 = scmp.eq.s32.totalorder %s36, 1
      %p607 = por %p605, %p606
      %p608 = scmp.ne.s32.totalorder %s597, %s598
      %p609 = scmp.eq.s32.totalorder %s36, 0
      %p610 = por %p608, %p609
      %p611 = scmp.ne.s32.totalorder %s597, %s598
      %p612 = scmp.eq.s32.totalorder %s37, 1
      %p613 = por %p611, %p612
      %p615 = scmp.ne.s32.totalorder %s598, %s614
      %p616 = scmp.eq.s32.totalorder %s37, 0
      %p617 = por %p615, %p616
      %s618 = ssub.s32 %s38, %s50
      %p619 = scmp.eq.s32.totalorder %s618, 0
      %s621 = sadd.s32 %s620, 1
      %s622 = scalar_select %p619, %s620, %s621
      %p625 = pneg %p619
      %p626 = scmp.eq.s32.totalorder %s31, 1
      %p627 = por %p625, %p626
      %p628 = scmp.ne.s32.totalorder %s620, %s623
      %p629 = scmp.eq.s32.totalorder %s31, 0
      %p630 = por %p628, %p629
      %p631 = scmp.ne.s32.totalorder %s620, %s623
      %p632 = scmp.eq.s32.totalorder %s36, 1
      %p633 = por %p631, %p632
      %p634 = scmp.ne.s32.totalorder %s623, %s624
      %p635 = scmp.eq.s32.totalorder %s36, 0
      %p636 = por %p634, %p635
      %p637 = scmp.ne.s32.totalorder %s623, %s624
      %p638 = scmp.eq.s32.totalorder %s37, 1
      %p639 = por %p637, %p638
      %p641 = scmp.ne.s32.totalorder %s624, %s640
      %p642 = scmp.eq.s32.totalorder %s37, 0
      %p643 = por %p641, %p642
      %p644 = scmp.le.s32.totalorder 1, %s31
      %p645 = scmp.lt.s32.totalorder %s31, 3
      %p646 = pnand %p644, %p645
      %p647 = pneg %p646
      // Predicated region
      $region9: #{tpu_custom_call.1} parent=5 // pred_check
        _
      $region10: #{tpu_custom_call.1} parent=5 // pred_check_branch
        %649 = sbr.rel (%p646) target = $region12
      $region11: #{tpu_custom_call.1} parent=5 // pred_region
        %s650 = ssub.s32 %s31, 1
        // Predicated region
        $region13: #{tpu_custom_call.1} parent=11 // pred_check
          %p651 = pneg %p64
        $region14: #{tpu_custom_call.1} parent=11 // pred_check_branch
          %653 = sbr.rel (%p651) target = $region16
        $region15: #{tpu_custom_call.1} parent=11 // pred_region
          %s655 = ssub.s32 128, 128
          %656 = vsyncadd [#allocation4], %s655
          %s658 = sshll.u32 [#allocation3], 4
          %s659 = int_to_ptr.vmem [resolvable:$true] %s658
          %661 = dma.hbm_to_vmem [thread:$0]  %s0, 128, %s659, [#allocation4]
        $region16: #{tpu_custom_call.1} parent=11 // pred_fallthru
          _
        // Predicated region
        $region17: #{tpu_custom_call.1} parent=11 // pred_check
          %p662 = pneg %p90
        $region18: #{tpu_custom_call.1} parent=11 // pred_check_branch
          %664 = sbr.rel (%p662) target = $region20
        $region19: #{tpu_custom_call.1} parent=11 // pred_region
          %s665 = smul.u32 2, %s40
          %s667 = ssub.s32 256, 256
          %668 = vsyncadd [#allocation7], %s667
          %s669 = smul.addr %s665, 2
          %s670 = smul.addr %s669, 64
          %s671 = scalar_lea.hbm %s1, %s670
          %s672 = sshll.u32 [#allocation6], 4
          %s673 = int_to_ptr.vmem [resolvable:$true] %s672
          %678 = dma.hbm_to_vmem [thread:$0]  %s671, 256, %s673, [#allocation7], 64, 64, 4
        $region20: #{tpu_custom_call.1} parent=11 // pred_fallthru
          _
      $region12: #{tpu_custom_call.1} parent=5 // pred_fallthru
        _
      %p679 = scmp.lt.s32.totalorder %s31, 2
      // Predicated region
      $region21: #{tpu_custom_call.1} parent=5 // pred_check
        %p680 = pneg %p679
      $region22: #{tpu_custom_call.1} parent=5 // pred_check_branch
        %682 = sbr.rel (%p680) target = $region24
      $region23: #{tpu_custom_call.1} parent=5 // pred_region
        // Predicated region
        $region25: #{tpu_custom_call.1} parent=23 // pred_check
          %p683 = pneg %p110
        $region26: #{tpu_custom_call.1} parent=23 // pred_check_branch
          %685 = sbr.rel (%p683) target = $region28
        $region27: #{tpu_custom_call.1} parent=23 // pred_region
          %s686 = sand.u32 %s31, 1
          %s687 = scalar_lea.sflag [#allocation4], %s686
          %s688 = sand.u32 %s100, 1
          %s689 = smul.addr %s688, 16
          %s690 = scalar_lea.vmem [#allocation8], %s689
          %s692 = ssub.s32 256, 256
          %693 = vsyncadd %s687, %s692
          %s694 = smul.addr %s39, 4
          %s695 = smul.addr %s694, 64
          %s696 = scalar_lea.hbm %s2, %s695
          %s697 = sshll.u32 %s690, 4
          %s698 = int_to_ptr.vmem [resolvable:$true] %s697
          %703 = dma.hbm_to_vmem [thread:$0]  %s696, 256, %s698, %s687, 64, 64, 4
        $region28: #{tpu_custom_call.1} parent=23 // pred_fallthru
          _
        // Predicated region
        $region29: #{tpu_custom_call.1} parent=23 // pred_check
          %p704 = pneg %p136
        $region30: #{tpu_custom_call.1} parent=23 // pred_check_branch
          %706 = sbr.rel (%p704) target = $region32
        $region31: #{tpu_custom_call.1} parent=23 // pred_region
          %s707 = sand.u32 %s31, 1
          %s708 = scalar_lea.sflag [#allocation4], %s707
          %s709 = sand.u32 %s126, 1
          %s710 = scalar_lea.vmem [#allocation9], %s709
          %s712 = ssub.s32 16, 16
          %713 = vsyncadd %s708, %s712
          %s714 = smul.addr %s39, 16
          %s715 = scalar_lea.hbm %s3, %s714
          %s717 = sshll.u32 %s710, 4
          %s718 = int_to_ptr.vmem [resolvable:$true] %s717
          %720 = dma.hbm_to_vmem [thread:$0]  %s715, 16, %s718, %s708
        $region32: #{tpu_custom_call.1} parent=23 // pred_fallthru
          _
        // Predicated region
        $region33: #{tpu_custom_call.1} parent=23 // pred_check
          %p721 = pneg %p162
        $region34: #{tpu_custom_call.1} parent=23 // pred_check_branch
          %723 = sbr.rel (%p721) target = $region36
        $region35: #{tpu_custom_call.1} parent=23 // pred_region
          %s724 = sand.u32 %s31, 1
          %s725 = scalar_lea.sflag [#allocation4], %s724
          %s726 = sand.u32 %s152, 1
          %s727 = smul.addr %s726, 16
          %s728 = scalar_lea.vmem [#allocation10], %s727
          %s730 = ssub.s32 256, 256
          %731 = vsyncadd %s725, %s730
          %s732 = smul.addr %s39, 4
          %s733 = smul.addr %s732, 64
          %s734 = scalar_lea.hbm %s4, %s733
          %s735 = sshll.u32 %s728, 4
          %s736 = int_to_ptr.vmem [resolvable:$true] %s735
          %741 = dma.hbm_to_vmem [thread:$0]  %s734, 256, %s736, %s725, 64, 64, 4
        $region36: #{tpu_custom_call.1} parent=23 // pred_fallthru
          _
        // Predicated region
        $region37: #{tpu_custom_call.1} parent=23 // pred_check
          %p742 = pneg %p188
        $region38: #{tpu_custom_call.1} parent=23 // pred_check_branch
          %744 = sbr.rel (%p742) target = $region40
        $region39: #{tpu_custom_call.1} parent=23 // pred_region
          %s745 = sand.u32 %s31, 1
          %s746 = scalar_lea.sflag [#allocation4], %s745
          %s747 = sand.u32 %s178, 1
          %s748 = scalar_lea.vmem [#allocation11], %s747
          %s750 = ssub.s32 16, 16
          %751 = vsyncadd %s746, %s750
          %s752 = smul.addr %s39, 16
          %s753 = scalar_lea.hbm %s5, %s752
          %s755 = sshll.u32 %s748, 4
          %s756 = int_to_ptr.vmem [resolvable:$true] %s755
          %758 = dma.hbm_to_vmem [thread:$0]  %s753, 16, %s756, %s746
        $region40: #{tpu_custom_call.1} parent=23 // pred_fallthru
          _
        // Predicated region
        $region41: #{tpu_custom_call.1} parent=23 // pred_check
          %p759 = pneg %p214
        $region42: #{tpu_custom_call.1} parent=23 // pred_check_branch
          %761 = sbr.rel (%p759) target = $region44
        $region43: #{tpu_custom_call.1} parent=23 // pred_region
          %s762 = sand.u32 %s31, 1
          %s763 = scalar_lea.sflag [#allocation4], %s762
          %s764 = sand.u32 %s204, 1
          %s765 = smul.addr %s764, 16
          %s766 = scalar_lea.vmem [#allocation12], %s765
          %s768 = ssub.s32 256, 256
          %769 = vsyncadd %s763, %s768
          %s770 = smul.addr %s39, 4
          %s771 = smul.addr %s770, 64
          %s772 = scalar_lea.hbm %s6, %s771
          %s773 = sshll.u32 %s766, 4
          %s774 = int_to_ptr.vmem [resolvable:$true] %s773
          %779 = dma.hbm_to_vmem [thread:$0]  %s772, 256, %s774, %s763, 64, 64, 4
        $region44: #{tpu_custom_call.1} parent=23 // pred_fallthru
          _
        // Predicated region
        $region45: #{tpu_custom_call.1} parent=23 // pred_check
          %p780 = pneg %p240
        $region46: #{tpu_custom_call.1} parent=23 // pred_check_branch
          %782 = sbr.rel (%p780) target = $region48
        $region47: #{tpu_custom_call.1} parent=23 // pred_region
          %s783 = sand.u32 %s31, 1
          %s784 = scalar_lea.sflag [#allocation4], %s783
          %s785 = sand.u32 %s230, 1
          %s786 = scalar_lea.vmem [#allocation13], %s785
          %s788 = ssub.s32 16, 16
          %789 = vsyncadd %s784, %s788
          %s790 = smul.addr %s39, 16
          %s791 = scalar_lea.hbm %s7, %s790
          %s793 = sshll.u32 %s786, 4
          %s794 = int_to_ptr.vmem [resolvable:$true] %s793
          %796 = dma.hbm_to_vmem [thread:$0]  %s791, 16, %s794, %s784
        $region48: #{tpu_custom_call.1} parent=23 // pred_fallthru
          _
        // Predicated region
        $region49: #{tpu_custom_call.1} parent=23 // pred_check
          %p797 = pneg %p266
        $region50: #{tpu_custom_call.1} parent=23 // pred_check_branch
          %799 = sbr.rel (%p797) target = $region52
        $region51: #{tpu_custom_call.1} parent=23 // pred_region
          %s800 = sand.u32 %s31, 1
          %s801 = scalar_lea.sflag [#allocation4], %s800
          %s802 = sand.u32 %s256, 1
          %s803 = smul.addr %s802, 16
          %s804 = scalar_lea.vmem [#allocation14], %s803
          %s806 = ssub.s32 256, 256
          %807 = vsyncadd %s801, %s806
          %s808 = smul.addr %s39, 4
          %s809 = smul.addr %s808, 64
          %s810 = scalar_lea.hbm %s8, %s809
          %s811 = sshll.u32 %s804, 4
          %s812 = int_to_ptr.vmem [resolvable:$true] %s811
          %817 = dma.hbm_to_vmem [thread:$0]  %s810, 256, %s812, %s801, 64, 64, 4
        $region52: #{tpu_custom_call.1} parent=23 // pred_fallthru
          _
        // Predicated region
        $region53: #{tpu_custom_call.1} parent=23 // pred_check
          %p818 = pneg %p292
        $region54: #{tpu_custom_call.1} parent=23 // pred_check_branch
          %820 = sbr.rel (%p818) target = $region56
        $region55: #{tpu_custom_call.1} parent=23 // pred_region
          %s821 = sand.u32 %s31, 1
          %s822 = scalar_lea.sflag [#allocation4], %s821
          %s823 = sand.u32 %s282, 1
          %s824 = scalar_lea.vmem [#allocation15], %s823
          %s826 = ssub.s32 16, 16
          %827 = vsyncadd %s822, %s826
          %s828 = smul.addr %s39, 16
          %s829 = scalar_lea.hbm %s9, %s828
          %s831 = sshll.u32 %s824, 4
          %s832 = int_to_ptr.vmem [resolvable:$true] %s831
          %834 = dma.hbm_to_vmem [thread:$0]  %s829, 16, %s832, %s822
        $region56: #{tpu_custom_call.1} parent=23 // pred_fallthru
          _
        // Predicated region
        $region57: #{tpu_custom_call.1} parent=23 // pred_check
          %p835 = pneg %p318
        $region58: #{tpu_custom_call.1} parent=23 // pred_check_branch
          %837 = sbr.rel (%p835) target = $region60
        $region59: #{tpu_custom_call.1} parent=23 // pred_region
          %s838 = sand.u32 %s31, 1
          %s839 = scalar_lea.sflag [#allocation4], %s838
          %s840 = sand.u32 %s308, 1
          %s841 = smul.addr %s840, 16
          %s842 = scalar_lea.vmem [#allocation16], %s841
          %s844 = ssub.s32 256, 256
          %845 = vsyncadd %s839, %s844
          %s846 = smul.addr %s39, 4
          %s847 = smul.addr %s846, 64
          %s848 = scalar_lea.hbm %s10, %s847
          %s849 = sshll.u32 %s842, 4
          %s850 = int_to_ptr.vmem [resolvable:$true] %s849
          %855 = dma.hbm_to_vmem [thread:$0]  %s848, 256, %s850, %s839, 64, 64, 4
        $region60: #{tpu_custom_call.1} parent=23 // pred_fallthru
          _
        // Predicated region
        $region61: #{tpu_custom_call.1} parent=23 // pred_check
          %p856 = pneg %p344
        $region62: #{tpu_custom_call.1} parent=23 // pred_check_branch
          %858 = sbr.rel (%p856) target = $region64
        $region63: #{tpu_custom_call.1} parent=23 // pred_region
          %s859 = sand.u32 %s31, 1
          %s860 = scalar_lea.sflag [#allocation4], %s859
          %s861 = sand.u32 %s334, 1
          %s862 = scalar_lea.vmem [#allocation17], %s861
          %s864 = ssub.s32 16, 16
          %865 = vsyncadd %s860, %s864
          %s866 = smul.addr %s39, 16
          %s867 = scalar_lea.hbm %s11, %s866
          %s869 = sshll.u32 %s862, 4
          %s870 = int_to_ptr.vmem [resolvable:$true] %s869
          %872 = dma.hbm_to_vmem [thread:$0]  %s867, 16, %s870, %s860
        $region64: #{tpu_custom_call.1} parent=23 // pred_fallthru
          _
        // Predicated region
        $region65: #{tpu_custom_call.1} parent=23 // pred_check
          %p873 = pneg %p370
        $region66: #{tpu_custom_call.1} parent=23 // pred_check_branch
          %875 = sbr.rel (%p873) target = $region68
        $region67: #{tpu_custom_call.1} parent=23 // pred_region
          %s876 = sand.u32 %s31, 1
          %s877 = scalar_lea.sflag [#allocation4], %s876
          %s878 = sand.u32 %s360, 1
          %s879 = smul.addr %s878, 16
          %s880 = scalar_lea.vmem [#allocation18], %s879
          %s882 = ssub.s32 256, 256
          %883 = vsyncadd %s877, %s882
          %s884 = smul.addr %s39, 4
          %s885 = smul.addr %s884, 64
          %s886 = scalar_lea.hbm %s12, %s885
          %s887 = sshll.u32 %s880, 4
          %s888 = int_to_ptr.vmem [resolvable:$true] %s887
          %893 = dma.hbm_to_vmem [thread:$0]  %s886, 256, %s888, %s877, 64, 64, 4
        $region68: #{tpu_custom_call.1} parent=23 // pred_fallthru
          _
        // Predicated region
        $region69: #{tpu_custom_call.1} parent=23 // pred_check
          %p894 = pneg %p396
        $region70: #{tpu_custom_call.1} parent=23 // pred_check_branch
          %896 = sbr.rel (%p894) target = $region72
        $region71: #{tpu_custom_call.1} parent=23 // pred_region
          %s897 = sand.u32 %s31, 1
          %s898 = scalar_lea.sflag [#allocation4], %s897
          %s899 = sand.u32 %s386, 1
          %s900 = scalar_lea.vmem [#allocation19], %s899
          %s902 = ssub.s32 16, 16
          %903 = vsyncadd %s898, %s902
          %s904 = smul.addr %s39, 16
          %s905 = scalar_lea.hbm %s13, %s904
          %s907 = sshll.u32 %s900, 4
          %s908 = int_to_ptr.vmem [resolvable:$true] %s907
          %910 = dma.hbm_to_vmem [thread:$0]  %s905, 16, %s908, %s898
        $region72: #{tpu_custom_call.1} parent=23 // pred_fallthru
          _
        // Predicated region
        $region73: #{tpu_custom_call.1} parent=23 // pred_check
          %p911 = pneg %p422
        $region74: #{tpu_custom_call.1} parent=23 // pred_check_branch
          %913 = sbr.rel (%p911) target = $region76
        $region75: #{tpu_custom_call.1} parent=23 // pred_region
          %s914 = sand.u32 %s31, 1
          %s915 = scalar_lea.sflag [#allocation4], %s914
          %s916 = sand.u32 %s412, 1
          %s917 = smul.addr %s916, 32
          %s918 = scalar_lea.vmem [#allocation20], %s917
          %s920 = ssub.s32 512, 512
          %921 = vsyncadd %s915, %s920
          %s922 = smul.addr %s39, 8
          %s923 = smul.addr %s922, 64
          %s924 = scalar_lea.hbm %s14, %s923
          %s925 = sshll.u32 %s918, 4
          %s926 = int_to_ptr.vmem [resolvable:$true] %s925
          %931 = dma.hbm_to_vmem [thread:$0]  %s924, 512, %s926, %s915, 64, 64, 4
        $region76: #{tpu_custom_call.1} parent=23 // pred_fallthru
          _
        // Predicated region
        $region77: #{tpu_custom_call.1} parent=23 // pred_check
          %p932 = pneg %p448
        $region78: #{tpu_custom_call.1} parent=23 // pred_check_branch
          %934 = sbr.rel (%p932) target = $region80
        $region79: #{tpu_custom_call.1} parent=23 // pred_region
          %s935 = sand.u32 %s31, 1
          %s936 = scalar_lea.sflag [#allocation4], %s935
          %s937 = sand.u32 %s438, 1
          %s938 = scalar_lea.vmem [#allocation21], %s937
          %s940 = ssub.s32 16, 16
          %941 = vsyncadd %s936, %s940
          %s942 = smul.addr %s39, 16
          %s943 = scalar_lea.hbm %s15, %s942
          %s945 = sshll.u32 %s938, 4
          %s946 = int_to_ptr.vmem [resolvable:$true] %s945
          %948 = dma.hbm_to_vmem [thread:$0]  %s943, 16, %s946, %s936
        $region80: #{tpu_custom_call.1} parent=23 // pred_fallthru
          _
        // Predicated region
        $region81: #{tpu_custom_call.1} parent=23 // pred_check
          %p949 = pneg %p474
        $region82: #{tpu_custom_call.1} parent=23 // pred_check_branch
          %951 = sbr.rel (%p949) target = $region84
        $region83: #{tpu_custom_call.1} parent=23 // pred_region
          %s952 = sand.u32 %s31, 1
          %s953 = scalar_lea.sflag [#allocation4], %s952
          %s954 = sand.u32 %s464, 1
          %s955 = scalar_lea.vmem [#allocation22], %s954
          %s957 = ssub.s32 16, 16
          %958 = vsyncadd %s953, %s957
          %s959 = smul.addr %s39, 16
          %s960 = scalar_lea.hbm %s16, %s959
          %s962 = sshll.u32 %s955, 4
          %s963 = int_to_ptr.vmem [resolvable:$true] %s962
          %965 = dma.hbm_to_vmem [thread:$0]  %s960, 16, %s963, %s953
        $region84: #{tpu_custom_call.1} parent=23 // pred_fallthru
          _
        // Predicated region
        $region85: #{tpu_custom_call.1} parent=23 // pred_check
          %p966 = pneg %p500
        $region86: #{tpu_custom_call.1} parent=23 // pred_check_branch
          %968 = sbr.rel (%p966) target = $region88
        $region87: #{tpu_custom_call.1} parent=23 // pred_region
          %s969 = sand.u32 %s31, 1
          %s970 = scalar_lea.sflag [#allocation4], %s969
          %s971 = sand.u32 %s490, 1
          %s972 = scalar_lea.vmem [#allocation23], %s971
          %s974 = ssub.s32 16, 16
          %975 = vsyncadd %s970, %s974
          %s976 = smul.addr %s39, 16
          %s977 = scalar_lea.hbm %s17, %s976
          %s979 = sshll.u32 %s972, 4
          %s980 = int_to_ptr.vmem [resolvable:$true] %s979
          %982 = dma.hbm_to_vmem [thread:$0]  %s977, 16, %s980, %s970
        $region88: #{tpu_custom_call.1} parent=23 // pred_fallthru
          _
        // Predicated region
        $region89: #{tpu_custom_call.1} parent=23 // pred_check
          %p983 = pneg %p526
        $region90: #{tpu_custom_call.1} parent=23 // pred_check_branch
          %985 = sbr.rel (%p983) target = $region92
        $region91: #{tpu_custom_call.1} parent=23 // pred_region
          %s986 = sand.u32 %s31, 1
          %s987 = scalar_lea.sflag [#allocation4], %s986
          %s988 = sand.u32 %s516, 1
          %s989 = scalar_lea.vmem [#allocation24], %s988
          %s991 = ssub.s32 16, 16
          %992 = vsyncadd %s987, %s991
          %s993 = smul.addr %s39, 16
          %s994 = scalar_lea.hbm %s18, %s993
          %s996 = sshll.u32 %s989, 4
          %s997 = int_to_ptr.vmem [resolvable:$true] %s996
          %999 = dma.hbm_to_vmem [thread:$0]  %s994, 16, %s997, %s987
        $region92: #{tpu_custom_call.1} parent=23 // pred_fallthru
          _
        // Predicated region
        $region93: #{tpu_custom_call.1} parent=23 // pred_check
          %p1000 = pneg %p552
        $region94: #{tpu_custom_call.1} parent=23 // pred_check_branch
          %1002 = sbr.rel (%p1000) target = $region96
        $region95: #{tpu_custom_call.1} parent=23 // pred_region
          %s1003 = sand.u32 %s31, 1
          %s1004 = scalar_lea.sflag [#allocation4], %s1003
          %s1005 = sand.u32 %s542, 1
          %s1006 = scalar_lea.vmem [#allocation25], %s1005
          %s1008 = ssub.s32 16, 16
          %1009 = vsyncadd %s1004, %s1008
          %s1010 = smul.addr %s39, 16
          %s1011 = scalar_lea.hbm %s19, %s1010
          %s1013 = sshll.u32 %s1006, 4
          %s1014 = int_to_ptr.vmem [resolvable:$true] %s1013
          %1016 = dma.hbm_to_vmem [thread:$0]  %s1011, 16, %s1014, %s1004
        $region96: #{tpu_custom_call.1} parent=23 // pred_fallthru
          _
        // Predicated region
        $region97: #{tpu_custom_call.1} parent=23 // pred_check
          %p1017 = pneg %p578
        $region98: #{tpu_custom_call.1} parent=23 // pred_check_branch
          %1019 = sbr.rel (%p1017) target = $region100
        $region99: #{tpu_custom_call.1} parent=23 // pred_region
          %s1020 = sand.u32 %s31, 1
          %s1021 = scalar_lea.sflag [#allocation4], %s1020
          %s1022 = sand.u32 %s568, 1
          %s1023 = scalar_lea.vmem [#allocation26], %s1022
          %s1025 = ssub.s32 16, 16
          %1026 = vsyncadd %s1021, %s1025
          %s1027 = smul.addr %s39, 16
          %s1028 = scalar_lea.hbm %s20, %s1027
          %s1030 = sshll.u32 %s1023, 4
          %s1031 = int_to_ptr.vmem [resolvable:$true] %s1030
          %1033 = dma.hbm_to_vmem [thread:$0]  %s1028, 16, %s1031, %s1021
        $region100: #{tpu_custom_call.1} parent=23 // pred_fallthru
          _
        // Predicated region
        $region101: #{tpu_custom_call.1} parent=23 // pred_check
          %p1034 = pneg %p604
        $region102: #{tpu_custom_call.1} parent=23 // pred_check_branch
          %1036 = sbr.rel (%p1034) target = $region104
        $region103: #{tpu_custom_call.1} parent=23 // pred_region
          %s1037 = sand.u32 %s31, 1
          %s1038 = scalar_lea.sflag [#allocation4], %s1037
          %s1039 = sand.u32 %s594, 1
          %s1040 = scalar_lea.vmem [#allocation27], %s1039
          %s1042 = ssub.s32 16, 16
          %1043 = vsyncadd %s1038, %s1042
          %s1044 = smul.addr %s39, 16
          %s1045 = scalar_lea.hbm %s21, %s1044
          %s1047 = sshll.u32 %s1040, 4
          %s1048 = int_to_ptr.vmem [resolvable:$true] %s1047
          %1050 = dma.hbm_to_vmem [thread:$0]  %s1045, 16, %s1048, %s1038
        $region104: #{tpu_custom_call.1} parent=23 // pred_fallthru
          _
      $region24: #{tpu_custom_call.1} parent=5 // pred_fallthru
        _
      %p1051 = scmp.le.s32.totalorder 1, %s31
      %p1052 = scmp.lt.s32.totalorder %s31, 3
      %p1053 = pnand %p1051, %p1052
      %p1054 = pneg %p1053
      // Predicated region
      $region105: #{tpu_custom_call.1} parent=5 // pred_check
        _
      $region106: #{tpu_custom_call.1} parent=5 // pred_check_branch
        %1056 = sbr.rel (%p1053) target = $region108
      $region107: #{tpu_custom_call.1} parent=5 // pred_region
        %s1057 = ssub.s32 %s31, 1
        // Predicated region
        $region109: #{tpu_custom_call.1} parent=107 // pred_check
          %p1058 = pneg %p64
        $region110: #{tpu_custom_call.1} parent=107 // pred_check_branch
          %1060 = sbr.rel (%p1058) target = $region112
        $region111: #{tpu_custom_call.1} parent=107 // pred_region
          %1061 = dma.done [#allocation4], 128
        $region112: #{tpu_custom_call.1} parent=107 // pred_fallthru
          _
        // Predicated region
        $region113: #{tpu_custom_call.1} parent=107 // pred_check
          %p1062 = pneg %p90
        $region114: #{tpu_custom_call.1} parent=107 // pred_check_branch
          %1064 = sbr.rel (%p1062) target = $region116
        $region115: #{tpu_custom_call.1} parent=107 // pred_region
          %1065 = dma.done [#allocation7], 256
        $region116: #{tpu_custom_call.1} parent=107 // pred_fallthru
          _
        %s1066 = sand.u32 %s36, 1
        %s1067 = scalar_lea.sflag [#allocation4], %s1066
        %s1068 = sand.u32 %s103, 1
        %s1069 = smul.addr %s1068, 16
        %s1070 = scalar_lea.vmem [#allocation8], %s1069
        // Predicated region
        $region117: #{tpu_custom_call.1} parent=107 // pred_check
          %p1071 = pneg %p116
        $region118: #{tpu_custom_call.1} parent=107 // pred_check_branch
          %1073 = sbr.rel (%p1071) target = $region120
        $region119: #{tpu_custom_call.1} parent=107 // pred_region
          %1074 = dma.done %s1067, 256
        $region120: #{tpu_custom_call.1} parent=107 // pred_fallthru
          _
        %s1075 = sand.u32 %s36, 1
        %s1076 = scalar_lea.sflag [#allocation4], %s1075
        %s1077 = sand.u32 %s129, 1
        %s1078 = scalar_lea.vmem [#allocation9], %s1077
        // Predicated region
        $region121: #{tpu_custom_call.1} parent=107 // pred_check
          %p1079 = pneg %p142
        $region122: #{tpu_custom_call.1} parent=107 // pred_check_branch
          %1081 = sbr.rel (%p1079) target = $region124
        $region123: #{tpu_custom_call.1} parent=107 // pred_region
          %1082 = dma.done %s1076, 16
        $region124: #{tpu_custom_call.1} parent=107 // pred_fallthru
          _
        %s1083 = sand.u32 %s36, 1
        %s1084 = scalar_lea.sflag [#allocation4], %s1083
        %s1085 = sand.u32 %s155, 1
        %s1086 = smul.addr %s1085, 16
        %s1087 = scalar_lea.vmem [#allocation10], %s1086
        // Predicated region
        $region125: #{tpu_custom_call.1} parent=107 // pred_check
          %p1088 = pneg %p168
        $region126: #{tpu_custom_call.1} parent=107 // pred_check_branch
          %1090 = sbr.rel (%p1088) target = $region128
        $region127: #{tpu_custom_call.1} parent=107 // pred_region
          %1091 = dma.done %s1084, 256
        $region128: #{tpu_custom_call.1} parent=107 // pred_fallthru
          _
        %s1092 = sand.u32 %s36, 1
        %s1093 = scalar_lea.sflag [#allocation4], %s1092
        %s1094 = sand.u32 %s181, 1
        %s1095 = scalar_lea.vmem [#allocation11], %s1094
        // Predicated region
        $region129: #{tpu_custom_call.1} parent=107 // pred_check
          %p1096 = pneg %p194
        $region130: #{tpu_custom_call.1} parent=107 // pred_check_branch
          %1098 = sbr.rel (%p1096) target = $region132
        $region131: #{tpu_custom_call.1} parent=107 // pred_region
          %1099 = dma.done %s1093, 16
        $region132: #{tpu_custom_call.1} parent=107 // pred_fallthru
          _
        %s1100 = sand.u32 %s36, 1
        %s1101 = scalar_lea.sflag [#allocation4], %s1100
        %s1102 = sand.u32 %s207, 1
        %s1103 = smul.addr %s1102, 16
        %s1104 = scalar_lea.vmem [#allocation12], %s1103
        // Predicated region
        $region133: #{tpu_custom_call.1} parent=107 // pred_check
          %p1105 = pneg %p220
        $region134: #{tpu_custom_call.1} parent=107 // pred_check_branch
          %1107 = sbr.rel (%p1105) target = $region136
        $region135: #{tpu_custom_call.1} parent=107 // pred_region
          %1108 = dma.done %s1101, 256
        $region136: #{tpu_custom_call.1} parent=107 // pred_fallthru
          _
        %s1109 = sand.u32 %s36, 1
        %s1110 = scalar_lea.sflag [#allocation4], %s1109
        %s1111 = sand.u32 %s233, 1
        %s1112 = scalar_lea.vmem [#allocation13], %s1111
        // Predicated region
        $region137: #{tpu_custom_call.1} parent=107 // pred_check
          %p1113 = pneg %p246
        $region138: #{tpu_custom_call.1} parent=107 // pred_check_branch
          %1115 = sbr.rel (%p1113) target = $region140
        $region139: #{tpu_custom_call.1} parent=107 // pred_region
          %1116 = dma.done %s1110, 16
        $region140: #{tpu_custom_call.1} parent=107 // pred_fallthru
          _
        %s1117 = sand.u32 %s36, 1
        %s1118 = scalar_lea.sflag [#allocation4], %s1117
        %s1119 = sand.u32 %s259, 1
        %s1120 = smul.addr %s1119, 16
        %s1121 = scalar_lea.vmem [#allocation14], %s1120
        // Predicated region
        $region141: #{tpu_custom_call.1} parent=107 // pred_check
          %p1122 = pneg %p272
        $region142: #{tpu_custom_call.1} parent=107 // pred_check_branch
          %1124 = sbr.rel (%p1122) target = $region144
        $region143: #{tpu_custom_call.1} parent=107 // pred_region
          %1125 = dma.done %s1118, 256
        $region144: #{tpu_custom_call.1} parent=107 // pred_fallthru
          _
        %s1126 = sand.u32 %s36, 1
        %s1127 = scalar_lea.sflag [#allocation4], %s1126
        %s1128 = sand.u32 %s285, 1
        %s1129 = scalar_lea.vmem [#allocation15], %s1128
        // Predicated region
        $region145: #{tpu_custom_call.1} parent=107 // pred_check
          %p1130 = pneg %p298
        $region146: #{tpu_custom_call.1} parent=107 // pred_check_branch
          %1132 = sbr.rel (%p1130) target = $region148
        $region147: #{tpu_custom_call.1} parent=107 // pred_region
          %1133 = dma.done %s1127, 16
        $region148: #{tpu_custom_call.1} parent=107 // pred_fallthru
          _
        %s1134 = sand.u32 %s36, 1
        %s1135 = scalar_lea.sflag [#allocation4], %s1134
        %s1136 = sand.u32 %s311, 1
        %s1137 = smul.addr %s1136, 16
        %s1138 = scalar_lea.vmem [#allocation16], %s1137
        // Predicated region
        $region149: #{tpu_custom_call.1} parent=107 // pred_check
          %p1139 = pneg %p324
        $region150: #{tpu_custom_call.1} parent=107 // pred_check_branch
          %1141 = sbr.rel (%p1139) target = $region152
        $region151: #{tpu_custom_call.1} parent=107 // pred_region
          %1142 = dma.done %s1135, 256
        $region152: #{tpu_custom_call.1} parent=107 // pred_fallthru
          _
        %s1143 = sand.u32 %s36, 1
        %s1144 = scalar_lea.sflag [#allocation4], %s1143
        %s1145 = sand.u32 %s337, 1
        %s1146 = scalar_lea.vmem [#allocation17], %s1145
        // Predicated region
        $region153: #{tpu_custom_call.1} parent=107 // pred_check
          %p1147 = pneg %p350
        $region154: #{tpu_custom_call.1} parent=107 // pred_check_branch
          %1149 = sbr.rel (%p1147) target = $region156
        $region155: #{tpu_custom_call.1} parent=107 // pred_region
          %1150 = dma.done %s1144, 16
        $region156: #{tpu_custom_call.1} parent=107 // pred_fallthru
          _
        %s1151 = sand.u32 %s36, 1
        %s1152 = scalar_lea.sflag [#allocation4], %s1151
        %s1153 = sand.u32 %s363, 1
        %s1154 = smul.addr %s1153, 16
        %s1155 = scalar_lea.vmem [#allocation18], %s1154
        // Predicated region
        $region157: #{tpu_custom_call.1} parent=107 // pred_check
          %p1156 = pneg %p376
        $region158: #{tpu_custom_call.1} parent=107 // pred_check_branch
          %1158 = sbr.rel (%p1156) target = $region160
        $region159: #{tpu_custom_call.1} parent=107 // pred_region
          %1159 = dma.done %s1152, 256
        $region160: #{tpu_custom_call.1} parent=107 // pred_fallthru
          _
        %s1160 = sand.u32 %s36, 1
        %s1161 = scalar_lea.sflag [#allocation4], %s1160
        %s1162 = sand.u32 %s389, 1
        %s1163 = scalar_lea.vmem [#allocation19], %s1162
        // Predicated region
        $region161: #{tpu_custom_call.1} parent=107 // pred_check
          %p1164 = pneg %p402
        $region162: #{tpu_custom_call.1} parent=107 // pred_check_branch
          %1166 = sbr.rel (%p1164) target = $region164
        $region163: #{tpu_custom_call.1} parent=107 // pred_region
          %1167 = dma.done %s1161, 16
        $region164: #{tpu_custom_call.1} parent=107 // pred_fallthru
          _
        %s1168 = sand.u32 %s36, 1
        %s1169 = scalar_lea.sflag [#allocation4], %s1168
        %s1170 = sand.u32 %s415, 1
        %s1171 = smul.addr %s1170, 32
        %s1172 = scalar_lea.vmem [#allocation20], %s1171
        // Predicated region
        $region165: #{tpu_custom_call.1} parent=107 // pred_check
          %p1173 = pneg %p428
        $region166: #{tpu_custom_call.1} parent=107 // pred_check_branch
          %1175 = sbr.rel (%p1173) target = $region168
        $region167: #{tpu_custom_call.1} parent=107 // pred_region
          %1176 = dma.done %s1169, 512
        $region168: #{tpu_custom_call.1} parent=107 // pred_fallthru
          _
        %s1177 = sand.u32 %s36, 1
        %s1178 = scalar_lea.sflag [#allocation4], %s1177
        %s1179 = sand.u32 %s441, 1
        %s1180 = scalar_lea.vmem [#allocation21], %s1179
        // Predicated region
        $region169: #{tpu_custom_call.1} parent=107 // pred_check
          %p1181 = pneg %p454
        $region170: #{tpu_custom_call.1} parent=107 // pred_check_branch
          %1183 = sbr.rel (%p1181) target = $region172
        $region171: #{tpu_custom_call.1} parent=107 // pred_region
          %1184 = dma.done %s1178, 16
        $region172: #{tpu_custom_call.1} parent=107 // pred_fallthru
          _
        %s1185 = sand.u32 %s36, 1
        %s1186 = scalar_lea.sflag [#allocation4], %s1185
        %s1187 = sand.u32 %s467, 1
        %s1188 = scalar_lea.vmem [#allocation22], %s1187
        // Predicated region
        $region173: #{tpu_custom_call.1} parent=107 // pred_check
          %p1189 = pneg %p480
        $region174: #{tpu_custom_call.1} parent=107 // pred_check_branch
          %1191 = sbr.rel (%p1189) target = $region176
        $region175: #{tpu_custom_call.1} parent=107 // pred_region
          %1192 = dma.done %s1186, 16
        $region176: #{tpu_custom_call.1} parent=107 // pred_fallthru
          _
        %s1193 = sand.u32 %s36, 1
        %s1194 = scalar_lea.sflag [#allocation4], %s1193
        %s1195 = sand.u32 %s493, 1
        %s1196 = scalar_lea.vmem [#allocation23], %s1195
        // Predicated region
        $region177: #{tpu_custom_call.1} parent=107 // pred_check
          %p1197 = pneg %p506
        $region178: #{tpu_custom_call.1} parent=107 // pred_check_branch
          %1199 = sbr.rel (%p1197) target = $region180
        $region179: #{tpu_custom_call.1} parent=107 // pred_region
          %1200 = dma.done %s1194, 16
        $region180: #{tpu_custom_call.1} parent=107 // pred_fallthru
          _
        %s1201 = sand.u32 %s36, 1
        %s1202 = scalar_lea.sflag [#allocation4], %s1201
        %s1203 = sand.u32 %s519, 1
        %s1204 = scalar_lea.vmem [#allocation24], %s1203
        // Predicated region
        $region181: #{tpu_custom_call.1} parent=107 // pred_check
          %p1205 = pneg %p532
        $region182: #{tpu_custom_call.1} parent=107 // pred_check_branch
          %1207 = sbr.rel (%p1205) target = $region184
        $region183: #{tpu_custom_call.1} parent=107 // pred_region
          %1208 = dma.done %s1202, 16
        $region184: #{tpu_custom_call.1} parent=107 // pred_fallthru
          _
        %s1209 = sand.u32 %s36, 1
        %s1210 = scalar_lea.sflag [#allocation4], %s1209
        %s1211 = sand.u32 %s545, 1
        %s1212 = scalar_lea.vmem [#allocation25], %s1211
        // Predicated region
        $region185: #{tpu_custom_call.1} parent=107 // pred_check
          %p1213 = pneg %p558
        $region186: #{tpu_custom_call.1} parent=107 // pred_check_branch
          %1215 = sbr.rel (%p1213) target = $region188
        $region187: #{tpu_custom_call.1} parent=107 // pred_region
          %1216 = dma.done %s1210, 16
        $region188: #{tpu_custom_call.1} parent=107 // pred_fallthru
          _
        %s1217 = sand.u32 %s36, 1
        %s1218 = scalar_lea.sflag [#allocation4], %s1217
        %s1219 = sand.u32 %s571, 1
        %s1220 = scalar_lea.vmem [#allocation26], %s1219
        // Predicated region
        $region189: #{tpu_custom_call.1} parent=107 // pred_check
          %p1221 = pneg %p584
        $region190: #{tpu_custom_call.1} parent=107 // pred_check_branch
          %1223 = sbr.rel (%p1221) target = $region192
        $region191: #{tpu_custom_call.1} parent=107 // pred_region
          %1224 = dma.done %s1218, 16
        $region192: #{tpu_custom_call.1} parent=107 // pred_fallthru
          _
        %s1225 = sand.u32 %s36, 1
        %s1226 = scalar_lea.sflag [#allocation4], %s1225
        %s1227 = sand.u32 %s597, 1
        %s1228 = scalar_lea.vmem [#allocation27], %s1227
        // Predicated region
        $region193: #{tpu_custom_call.1} parent=107 // pred_check
          %p1229 = pneg %p610
        $region194: #{tpu_custom_call.1} parent=107 // pred_check_branch
          %1231 = sbr.rel (%p1229) target = $region196
        $region195: #{tpu_custom_call.1} parent=107 // pred_region
          %1232 = dma.done %s1226, 16
        $region196: #{tpu_custom_call.1} parent=107 // pred_fallthru
          _
        %p1233 = pneg %p64
        %p1234 = pneg %p61
        %p1235 = pneg %p90
        %p1236 = pneg %p87
        %s1237 = sand.u32 %s36, 1
        %s1238 = scalar_lea.sflag [#allocation4], %s1237
        %s1239 = sand.u32 %s103, 1
        %s1240 = smul.addr %s1239, 16
        %s1241 = scalar_lea.vmem [#allocation8], %s1240
        %p1242 = pneg %p116
        %p1243 = pneg %p113
        %s1244 = sand.u32 %s36, 1
        %s1245 = scalar_lea.sflag [#allocation4], %s1244
        %s1246 = sand.u32 %s129, 1
        %s1247 = scalar_lea.vmem [#allocation9], %s1246
        %p1248 = pneg %p142
        %p1249 = pneg %p139
        %s1250 = sand.u32 %s36, 1
        %s1251 = scalar_lea.sflag [#allocation4], %s1250
        %s1252 = sand.u32 %s155, 1
        %s1253 = smul.addr %s1252, 16
        %s1254 = scalar_lea.vmem [#allocation10], %s1253
        %p1255 = pneg %p168
        %p1256 = pneg %p165
        %s1257 = sand.u32 %s36, 1
        %s1258 = scalar_lea.sflag [#allocation4], %s1257
        %s1259 = sand.u32 %s181, 1
        %s1260 = scalar_lea.vmem [#allocation11], %s1259
        %p1261 = pneg %p194
        %p1262 = pneg %p191
        %s1263 = sand.u32 %s36, 1
        %s1264 = scalar_lea.sflag [#allocation4], %s1263
        %s1265 = sand.u32 %s207, 1
        %s1266 = smul.addr %s1265, 16
        %s1267 = scalar_lea.vmem [#allocation12], %s1266
        %p1268 = pneg %p220
        %p1269 = pneg %p217
        %s1270 = sand.u32 %s36, 1
        %s1271 = scalar_lea.sflag [#allocation4], %s1270
        %s1272 = sand.u32 %s233, 1
        %s1273 = scalar_lea.vmem [#allocation13], %s1272
        %p1274 = pneg %p246
        %p1275 = pneg %p243
        %s1276 = sand.u32 %s36, 1
        %s1277 = scalar_lea.sflag [#allocation4], %s1276
        %s1278 = sand.u32 %s259, 1
        %s1279 = smul.addr %s1278, 16
        %s1280 = scalar_lea.vmem [#allocation14], %s1279
        %p1281 = pneg %p272
        %p1282 = pneg %p269
        %s1283 = sand.u32 %s36, 1
        %s1284 = scalar_lea.sflag [#allocation4], %s1283
        %s1285 = sand.u32 %s285, 1
        %s1286 = scalar_lea.vmem [#allocation15], %s1285
        %p1287 = pneg %p298
        %p1288 = pneg %p295
        %s1289 = sand.u32 %s36, 1
        %s1290 = scalar_lea.sflag [#allocation4], %s1289
        %s1291 = sand.u32 %s311, 1
        %s1292 = smul.addr %s1291, 16
        %s1293 = scalar_lea.vmem [#allocation16], %s1292
        %p1294 = pneg %p324
        %p1295 = pneg %p321
        %s1296 = sand.u32 %s36, 1
        %s1297 = scalar_lea.sflag [#allocation4], %s1296
        %s1298 = sand.u32 %s337, 1
        %s1299 = scalar_lea.vmem [#allocation17], %s1298
        %p1300 = pneg %p350
        %p1301 = pneg %p347
        %s1302 = sand.u32 %s36, 1
        %s1303 = scalar_lea.sflag [#allocation4], %s1302
        %s1304 = sand.u32 %s363, 1
        %s1305 = smul.addr %s1304, 16
        %s1306 = scalar_lea.vmem [#allocation18], %s1305
        %p1307 = pneg %p376
        %p1308 = pneg %p373
        %s1309 = sand.u32 %s36, 1
        %s1310 = scalar_lea.sflag [#allocation4], %s1309
        %s1311 = sand.u32 %s389, 1
        %s1312 = scalar_lea.vmem [#allocation19], %s1311
        %p1313 = pneg %p402
        %p1314 = pneg %p399
        %s1315 = sand.u32 %s36, 1
        %s1316 = scalar_lea.sflag [#allocation4], %s1315
        %s1317 = sand.u32 %s415, 1
        %s1318 = smul.addr %s1317, 32
        %s1319 = scalar_lea.vmem [#allocation20], %s1318
        %p1320 = pneg %p428
        %p1321 = pneg %p425
        %s1322 = sand.u32 %s36, 1
        %s1323 = scalar_lea.sflag [#allocation4], %s1322
        %s1324 = sand.u32 %s441, 1
        %s1325 = scalar_lea.vmem [#allocation21], %s1324
        %p1326 = pneg %p454
        %p1327 = pneg %p451
        %s1328 = sand.u32 %s36, 1
        %s1329 = scalar_lea.sflag [#allocation4], %s1328
        %s1330 = sand.u32 %s467, 1
        %s1331 = scalar_lea.vmem [#allocation22], %s1330
        %p1332 = pneg %p480
        %p1333 = pneg %p477
        %s1334 = sand.u32 %s36, 1
        %s1335 = scalar_lea.sflag [#allocation4], %s1334
        %s1336 = sand.u32 %s493, 1
        %s1337 = scalar_lea.vmem [#allocation23], %s1336
        %p1338 = pneg %p506
        %p1339 = pneg %p503
        %s1340 = sand.u32 %s36, 1
        %s1341 = scalar_lea.sflag [#allocation4], %s1340
        %s1342 = sand.u32 %s519, 1
        %s1343 = scalar_lea.vmem [#allocation24], %s1342
        %p1344 = pneg %p532
        %p1345 = pneg %p529
        %s1346 = sand.u32 %s36, 1
        %s1347 = scalar_lea.sflag [#allocation4], %s1346
        %s1348 = sand.u32 %s545, 1
        %s1349 = scalar_lea.vmem [#allocation25], %s1348
        %p1350 = pneg %p558
        %p1351 = pneg %p555
        %s1352 = sand.u32 %s36, 1
        %s1353 = scalar_lea.sflag [#allocation4], %s1352
        %s1354 = sand.u32 %s571, 1
        %s1355 = scalar_lea.vmem [#allocation26], %s1354
        %p1356 = pneg %p584
        %p1357 = pneg %p581
        %s1358 = sand.u32 %s36, 1
        %s1359 = scalar_lea.sflag [#allocation4], %s1358
        %s1360 = sand.u32 %s597, 1
        %s1361 = scalar_lea.vmem [#allocation27], %s1360
        %p1362 = pneg %p610
        %p1363 = pneg %p607
        %p1364 = pneg %p636
        %p1365 = pneg %p633
        %s1366 = smul.u32 2, %s40
        %s1367 = smul.u32 2, %s40
        %p1369 = scmp.eq.s32.totalorder %s41, 0
        // Predicated region
        $region197: #{tpu_custom_call.1} parent=107 // pred_check
          %p1370 = pneg %p1369
        $region198: #{tpu_custom_call.1} parent=107 // pred_check_branch
          %1372 = sbr.rel (%p1370) target = $region200
        $region199: #{tpu_custom_call.1} parent=107 // pred_region
          %v1373 = vld [vmem:[#allocation3] sm:$0xff]
          %vm1374 = vcmask 261120
          %1375 = vst.msk [vmem:[#allocation28] sm:$0xff] %vm1374, %v1373
          %1376 = vst.msk [vmem:[#allocation28 + $0x8] sm:$0xff] %vm1374, %v1373
        $region200: #{tpu_custom_call.1} parent=107 // pred_fallthru
          _
        %v1377 = vld [vmem:[#allocation28] sm:$0xff]
        %v1378 = vld [vmem:[#allocation28 + $0x8] sm:$0xff]
        %v1379 = vld [vmem:[#allocation6] sm:$0xf]
        %v1380 = vld [vmem:[#allocation6 + $0x4] sm:$0xf]
        %v1381 = vld [vmem:[#allocation6 + $0x8] sm:$0xf]
        %v1382 = vld [vmem:[#allocation6 + $0xc] sm:$0xf]
        %v1383 = vld [vmem:[%s1070] sm:$0xf]
        %v1384 = vld [vmem:[%s1070 + $0x4] sm:$0xf]
        %v1385 = vld [vmem:[%s1070 + $0x8] sm:$0xf]
        %v1386 = vld [vmem:[%s1070 + $0xc] sm:$0xf]
        %v1387 = vld [vmem:[%s1078] sm:$0x1]
        %v1388 = vld [vmem:[%s1087] sm:$0xf]
        %v1389 = vld [vmem:[%s1087 + $0x4] sm:$0xf]
        %v1390 = vld [vmem:[%s1087 + $0x8] sm:$0xf]
        %v1391 = vld [vmem:[%s1087 + $0xc] sm:$0xf]
        %v1392 = vld [vmem:[%s1095] sm:$0x1]
        %v1393 = vpack.c.bf16 %v1378, %v1377
        %v1395 = vlaneseq
        %v1396 = vshrl.u32 %v1395, 7
        %v1397 = vsub.s32 0, %v1396
        %v1398 = vrot.slane %v1387, %v1397
        %v1404 = vunpack.c.l.b16 %v1383
        %v1405 = vunpack.c.l.b16 %v1384
        %v1406 = vunpack.c.l.b16 %v1385
        %v1407 = vunpack.c.l.b16 %v1386
        %v1408 = vpack.c.b16 %v1405, %v1404
        %v1409 = vpack.c.b16 %v1407, %v1406
        %vm1412 = vcmask 261120
        %v1414 = vsel %vm1412, %v1393, 0
        %1416 = vmatprep.subr.bf16.mxu0 0
        %1417 = vmatpush1.bf16.msra.mxu0 %v1408
        %1418 = vmatprep.subr.bf16.mxu0 0
        %1419 = vmatpush1.bf16.msra.mxu0 %v1409
        %1420 = vmatprep.subr.bf16.mxu0 0
        %1421 = vmatpush1.bf16.msra.mxu0 0
        %1422 = vmatprep.subr.bf16.mxu0 0
        %1423 = vmatpush1.bf16.msra.mxu0 0
        %1424 = vmatprep.subr.bf16.mxu0 0
        %1425 = vmatpush1.bf16.msra.mxu0 0
        %1426 = vmatprep.subr.bf16.mxu0 0
        %1427 = vmatpush1.bf16.msra.mxu0 0
        %1428 = vmatprep.subr.bf16.mxu0 0
        %1429 = vmatpush1.bf16.msra.mxu0 0
        %1430 = vmatprep.subr.bf16.mxu0 0
        %1431 = vmatpush1.bf16.msra.mxu0 0
        %1432 = vmatprep.subr.bf16.mxu0 0
        %1433 = vmatpush1.bf16.msra.mxu0 0
        %1434 = vmatprep.subr.bf16.mxu0 0
        %1435 = vmatpush1.bf16.msra.mxu0 0
        %1436 = vmatprep.subr.bf16.mxu0 0
        %1437 = vmatpush1.bf16.msra.mxu0 0
        %1438 = vmatprep.subr.bf16.mxu0 0
        %1439 = vmatpush1.bf16.msra.mxu0 0
        %1440 = vmatprep.subr.bf16.mxu0 0
        %1441 = vmatpush1.bf16.msra.mxu0 0
        %1442 = vmatprep.subr.bf16.mxu0 0
        %1443 = vmatpush1.bf16.msra.mxu0 0
        %1444 = vmatprep.subr.bf16.mxu0 0
        %1445 = vmatpush1.bf16.msra.mxu0 0
        %1446 = vmatprep.subr.bf16.mxu0 0
        %1447 = vmatpush1.bf16.msra.mxu0 0
        %1448 = vmatprep.mubr.bf16.mxu0 0
        %1449 = vmatmul.mubr.bf16.gmra.mrb[0].mxu0 %v1414
        %v1450 = vpop.f32.mrb[0].mxu0
        %v1451 = vadd.f32 %v1398, %v1450
        %v1452 = vpop.f32.mrb[0].mxu0
        %v1453 = vpop.f32.mrb[0].mxu0
        %v1454 = vadd.f32 %v1398, %v1453
        %v1455 = vpop.f32.mrb[0].mxu0
        %1456 = vdwg.mxu0
        %v1457 = vpack.c.bf16 %v1454, %v1451
        %v1459 = vunpack.c.l.b16 %v1457
        %v1460 = vunpack.c.h.b16 %v1457
        %v1461 = vpack.c.b16 %v1459, %v1459
        %v1462 = vpack.c.b16 %v1460, %v1460
        %1463 = vrot.lane.b32.xlu0 %v1461, 96
        %v1464 = vpop.permute.xlu0 %1463
        %vm1465 = vcmask 64512
        %v1467 = vsel %vm1465, %v1461, 0
        %v1470 = vsel %vm1465, %v1464, 0
        %1472 = vmatprep.subr.bf16.mxu0 0
        %1473 = vmatpush1.bf16.xpose.msra.mxu0 %v1470
        %1474 = vmatprep.subr.bf16.mxu0 0
        %1475 = vmatpush1.bf16.xpose.msra.mxu0 0
        %1476 = vmatprep.subr.bf16.mxu0 0
        %1477 = vmatpush1.bf16.xpose.msra.mxu0 0
        %1478 = vmatprep.subr.bf16.mxu0 0
        %1479 = vmatpush1.bf16.xpose.msra.mxu0 0
        %1480 = vmatprep.subr.bf16.mxu0 0
        %1481 = vmatpush1.bf16.xpose.msra.mxu0 0
        %1482 = vmatprep.subr.bf16.mxu0 0
        %1483 = vmatpush1.bf16.xpose.msra.mxu0 0
        %1484 = vmatprep.subr.bf16.mxu0 0
        %1485 = vmatpush1.bf16.xpose.msra.mxu0 0
        %1486 = vmatprep.subr.bf16.mxu0 0
        %1487 = vmatpush1.bf16.xpose.msra.mxu0 0
        %1488 = vmatprep.subr.bf16.mxu0 0
        %1489 = vmatpush1.bf16.xpose.msra.mxu0 0
        %1490 = vmatprep.subr.bf16.mxu0 0
        %1491 = vmatpush1.bf16.xpose.msra.mxu0 0
        %1492 = vmatprep.subr.bf16.mxu0 0
        %1493 = vmatpush1.bf16.xpose.msra.mxu0 0
        %1494 = vmatprep.subr.bf16.mxu0 0
        %1495 = vmatpush1.bf16.xpose.msra.mxu0 0
        %1496 = vmatprep.subr.bf16.mxu0 0
        %1497 = vmatpush1.bf16.xpose.msra.mxu0 0
        %1498 = vmatprep.subr.bf16.mxu0 0
        %1499 = vmatpush1.bf16.xpose.msra.mxu0 0
        %1500 = vmatprep.subr.bf16.mxu0 0
        %1501 = vmatpush1.bf16.xpose.msra.mxu0 0
        %1502 = vmatprep.subr.bf16.mxu0 0
        %1503 = vmatpush1.bf16.xpose.msra.mxu0 0
        %1504 = vmatprep.mubr.bf16.mxu0 0
        %1505 = vmatmul.mubr.bf16.gmra.mrb[0].mxu0 %v1467
        %v1506 = vpop.f32.mrb[0].mxu0
        %v1507 = vadd.f32 0.0, %v1506
        %v1508 = vpop.f32.mrb[0].mxu0
        %v1509 = vpop.f32.mrb[0].mxu0
        %v1510 = vpop.f32.mrb[0].mxu0
        %1511 = vdwg.mxu0
        %1512 = vrot.lane.b32.xlu0 %v1462, 96
        %v1513 = vpop.permute.xlu0 %1512
        %v1515 = vsel %vm1465, %v1462, 0
        %v1518 = vsel %vm1465, %v1513, 0
        %1520 = vmatprep.subr.bf16.mxu0 0
        %1521 = vmatpush1.bf16.xpose.msra.mxu0 %v1518
        %1522 = vmatprep.subr.bf16.mxu0 0
        %1523 = vmatpush1.bf16.xpose.msra.mxu0 0
        %1524 = vmatprep.subr.bf16.mxu0 0
        %1525 = vmatpush1.bf16.xpose.msra.mxu0 0
        %1526 = vmatprep.subr.bf16.mxu0 0
        %1527 = vmatpush1.bf16.xpose.msra.mxu0 0
        %1528 = vmatprep.subr.bf16.mxu0 0
        %1529 = vmatpush1.bf16.xpose.msra.mxu0 0
        %1530 = vmatprep.subr.bf16.mxu0 0
        %1531 = vmatpush1.bf16.xpose.msra.mxu0 0
        %1532 = vmatprep.subr.bf16.mxu0 0
        %1533 = vmatpush1.bf16.xpose.msra.mxu0 0
        %1534 = vmatprep.subr.bf16.mxu0 0
        %1535 = vmatpush1.bf16.xpose.msra.mxu0 0
        %1536 = vmatprep.subr.bf16.mxu0 0
        %1537 = vmatpush1.bf16.xpose.msra.mxu0 0
        %1538 = vmatprep.subr.bf16.mxu0 0
        %1539 = vmatpush1.bf16.xpose.msra.mxu0 0
        %1540 = vmatprep.subr.bf16.mxu0 0
        %1541 = vmatpush1.bf16.xpose.msra.mxu0 0
        %1542 = vmatprep.subr.bf16.mxu0 0
        %1543 = vmatpush1.bf16.xpose.msra.mxu0 0
        %1544 = vmatprep.subr.bf16.mxu0 0
        %1545 = vmatpush1.bf16.xpose.msra.mxu0 0
        %1546 = vmatprep.subr.bf16.mxu0 0
        %1547 = vmatpush1.bf16.xpose.msra.mxu0 0
        %1548 = vmatprep.subr.bf16.mxu0 0
        %1549 = vmatpush1.bf16.xpose.msra.mxu0 0
        %1550 = vmatprep.subr.bf16.mxu0 0
        %1551 = vmatpush1.bf16.xpose.msra.mxu0 0
        %1552 = vmatprep.mubr.bf16.mxu0 0
        %1553 = vmatmul.mubr.bf16.gmra.mrb[0].mxu0 %v1515
        %v1554 = vpop.f32.mrb[0].mxu0
        %v1555 = vadd.f32 0.0, %v1554
        %v1556 = vpop.f32.mrb[0].mxu0
        %v1557 = vpop.f32.mrb[0].mxu0
        %v1558 = vpop.f32.mrb[0].mxu0
        %1559 = vdwg.mxu0
        %v1560 = vsel %vm1465, %v1507, -inf
        %1561 = vmax.xlane.f32.xlu0 %v1560
        %v1562 = vpop.xlane.xlu0 %1561
        %v1563 = vsel %vm1465, %v1555, -inf
        %1564 = vmax.xlane.f32.xlu0 %v1563
        %v1565 = vpop.xlane.xlu0 %1564
        %v1566 = vsub.f32 %v1507, %v1562
        %v1567 = vsub.f32 %v1555, %v1565
        %v1568 = vmul.f32 %v1566, 1.442695
        %v1569 = vpow.pop %v1568
        %v1570 = vmul.f32 %v1567, 1.442695
        %v1571 = vpow.pop %v1570
        %v1572 = vsel %vm1465, %v1569, 0.0
        %1573 = vadd.xlane.f32.xlu0 %v1572
        %v1574 = vpop.xlane.xlu0 %1573
        %v1575 = vsel %vm1465, %v1571, 0.0
        %1576 = vadd.xlane.f32.xlu0 %v1575
        %v1577 = vpop.xlane.xlu0 %1576
        %v1578 = vrcp.pop %v1574
        %v1579 = vrcp.pop %v1577
        %v1580 = vmul.f32 %v1569, %v1578
        %v1581 = vmul.f32 %v1571, %v1579
        %v1582 = vpack.c.bf16 %v1580, %v1580
        %v1583 = vpack.c.bf16 %v1581, %v1581
        %1584 = vrot.lane.b32.xlu0 %v1461, 64
        %v1585 = vpop.permute.xlu0 %1584
        %v1587 = vsel %vm1465, %v1582, 0
        %vm1589 = vcmask 1043456
        %v1591 = vsel %vm1589, %v1585, 0
        %1593 = vmatprep.subr.bf16.mxu0 0
        %1594 = vmatpush1.bf16.msra.mxu0 %v1591
        %1595 = vmatprep.subr.bf16.mxu0 0
        %1596 = vmatpush1.bf16.msra.mxu0 0
        %1597 = vmatprep.subr.bf16.mxu0 0
        %1598 = vmatpush1.bf16.msra.mxu0 0
        %1599 = vmatprep.subr.bf16.mxu0 0
        %1600 = vmatpush1.bf16.msra.mxu0 0
        %1601 = vmatprep.subr.bf16.mxu0 0
        %1602 = vmatpush1.bf16.msra.mxu0 0
        %1603 = vmatprep.subr.bf16.mxu0 0
        %1604 = vmatpush1.bf16.msra.mxu0 0
        %1605 = vmatprep.subr.bf16.mxu0 0
        %1606 = vmatpush1.bf16.msra.mxu0 0
        %1607 = vmatprep.subr.bf16.mxu0 0
        %1608 = vmatpush1.bf16.msra.mxu0 0
        %1609 = vmatprep.subr.bf16.mxu0 0
        %1610 = vmatpush1.bf16.msra.mxu0 0
        %1611 = vmatprep.subr.bf16.mxu0 0
        %1612 = vmatpush1.bf16.msra.mxu0 0
        %1613 = vmatprep.subr.bf16.mxu0 0
        %1614 = vmatpush1.bf16.msra.mxu0 0
        %1615 = vmatprep.subr.bf16.mxu0 0
        %1616 = vmatpush1.bf16.msra.mxu0 0
        %1617 = vmatprep.subr.bf16.mxu0 0
        %1618 = vmatpush1.bf16.msra.mxu0 0
        %1619 = vmatprep.subr.bf16.mxu0 0
        %1620 = vmatpush1.bf16.msra.mxu0 0
        %1621 = vmatprep.subr.bf16.mxu0 0
        %1622 = vmatpush1.bf16.msra.mxu0 0
        %1623 = vmatprep.subr.bf16.mxu0 0
        %1624 = vmatpush1.bf16.msra.mxu0 0
        %1625 = vmatprep.mubr.bf16.mxu0 0
        %1626 = vmatmul.mubr.bf16.gmra.mrb[0].mxu0 %v1587
        %v1627 = vpop.f32.mrb[0].mxu0
        %v1628 = vadd.f32 0.0, %v1627
        %v1629 = vpop.f32.mrb[0].mxu0
        %v1630 = vpop.f32.mrb[0].mxu0
        %v1631 = vpop.f32.mrb[0].mxu0
        %1632 = vdwg.mxu0
        %1633 = vrot.lane.b32.xlu0 %v1462, 64
        %v1634 = vpop.permute.xlu0 %1633
        %v1636 = vsel %vm1465, %v1583, 0
        %v1639 = vsel %vm1589, %v1634, 0
        %1641 = vmatprep.subr.bf16.mxu0 0
        %1642 = vmatpush1.bf16.msra.mxu0 %v1639
        %1643 = vmatprep.subr.bf16.mxu0 0
        %1644 = vmatpush1.bf16.msra.mxu0 0
        %1645 = vmatprep.subr.bf16.mxu0 0
        %1646 = vmatpush1.bf16.msra.mxu0 0
        %1647 = vmatprep.subr.bf16.mxu0 0
        %1648 = vmatpush1.bf16.msra.mxu0 0
        %1649 = vmatprep.subr.bf16.mxu0 0
        %1650 = vmatpush1.bf16.msra.mxu0 0
        %1651 = vmatprep.subr.bf16.mxu0 0
        %1652 = vmatpush1.bf16.msra.mxu0 0
        %1653 = vmatprep.subr.bf16.mxu0 0
        %1654 = vmatpush1.bf16.msra.mxu0 0
        %1655 = vmatprep.subr.bf16.mxu0 0
        %1656 = vmatpush1.bf16.msra.mxu0 0
        %1657 = vmatprep.subr.bf16.mxu0 0
        %1658 = vmatpush1.bf16.msra.mxu0 0
        %1659 = vmatprep.subr.bf16.mxu0 0
        %1660 = vmatpush1.bf16.msra.mxu0 0
        %1661 = vmatprep.subr.bf16.mxu0 0
        %1662 = vmatpush1.bf16.msra.mxu0 0
        %1663 = vmatprep.subr.bf16.mxu0 0
        %1664 = vmatpush1.bf16.msra.mxu0 0
        %1665 = vmatprep.subr.bf16.mxu0 0
        %1666 = vmatpush1.bf16.msra.mxu0 0
        %1667 = vmatprep.subr.bf16.mxu0 0
        %1668 = vmatpush1.bf16.msra.mxu0 0
        %1669 = vmatprep.subr.bf16.mxu0 0
        %1670 = vmatpush1.bf16.msra.mxu0 0
        %1671 = vmatprep.subr.bf16.mxu0 0
        %1672 = vmatpush1.bf16.msra.mxu0 0
        %1673 = vmatprep.mubr.bf16.mxu0 0
        %1674 = vmatmul.mubr.bf16.gmra.mrb[0].mxu0 %v1636
        %v1675 = vpop.f32.mrb[0].mxu0
        %v1676 = vadd.f32 0.0, %v1675
        %v1677 = vpop.f32.mrb[0].mxu0
        %v1678 = vpop.f32.mrb[0].mxu0
        %v1679 = vpop.f32.mrb[0].mxu0
        %1680 = vdwg.mxu0
        %v1681 = vpack.c.bf16 %v1676, %v1628
        %1682 = vst.msk [vmem:[#allocation2] sm:$0xff] %vm1465, %v1681
        %1683 = vrot.lane.b32.xlu0 %v1461, 120
        %v1684 = vpop.permute.xlu0 %1683
        %1685 = vrot.lane.b32.xlu0 %v1461, 88
        %v1686 = vpop.permute.xlu0 %1685
        %v1688 = vsel %vm1465, %v1684, 0
        %v1691 = vsel %vm1465, %v1686, 0
        %1693 = vmatprep.subr.bf16.mxu0 0
        %1694 = vmatpush1.bf16.xpose.msra.mxu0 %v1691
        %1695 = vmatprep.subr.bf16.mxu0 0
        %1696 = vmatpush1.bf16.xpose.msra.mxu0 0
        %1697 = vmatprep.subr.bf16.mxu0 0
        %1698 = vmatpush1.bf16.xpose.msra.mxu0 0
        %1699 = vmatprep.subr.bf16.mxu0 0
        %1700 = vmatpush1.bf16.xpose.msra.mxu0 0
        %1701 = vmatprep.subr.bf16.mxu0 0
        %1702 = vmatpush1.bf16.xpose.msra.mxu0 0
        %1703 = vmatprep.subr.bf16.mxu0 0
        %1704 = vmatpush1.bf16.xpose.msra.mxu0 0
        %1705 = vmatprep.subr.bf16.mxu0 0
        %1706 = vmatpush1.bf16.xpose.msra.mxu0 0
        %1707 = vmatprep.subr.bf16.mxu0 0
        %1708 = vmatpush1.bf16.xpose.msra.mxu0 0
        %1709 = vmatprep.subr.bf16.mxu0 0
        %1710 = vmatpush1.bf16.xpose.msra.mxu0 0
        %1711 = vmatprep.subr.bf16.mxu0 0
        %1712 = vmatpush1.bf16.xpose.msra.mxu0 0
        %1713 = vmatprep.subr.bf16.mxu0 0
        %1714 = vmatpush1.bf16.xpose.msra.mxu0 0
        %1715 = vmatprep.subr.bf16.mxu0 0
        %1716 = vmatpush1.bf16.xpose.msra.mxu0 0
        %1717 = vmatprep.subr.bf16.mxu0 0
        %1718 = vmatpush1.bf16.xpose.msra.mxu0 0
        %1719 = vmatprep.subr.bf16.mxu0 0
        %1720 = vmatpush1.bf16.xpose.msra.mxu0 0
        %1721 = vmatprep.subr.bf16.mxu0 0
        %1722 = vmatpush1.bf16.xpose.msra.mxu0 0
        %1723 = vmatprep.subr.bf16.mxu0 0
        %1724 = vmatpush1.bf16.xpose.msra.mxu0 0
        %1725 = vmatprep.mubr.bf16.mxu0 0
        %1726 = vmatmul.mubr.bf16.gmra.mrb[0].mxu0 %v1688
        %v1727 = vpop.f32.mrb[0].mxu0
        %v1728 = vadd.f32 0.0, %v1727
        %v1729 = vpop.f32.mrb[0].mxu0
        %v1730 = vpop.f32.mrb[0].mxu0
        %v1731 = vpop.f32.mrb[0].mxu0
        %1732 = vdwg.mxu0
        %1733 = vrot.lane.b32.xlu0 %v1462, 120
        %v1734 = vpop.permute.xlu0 %1733
        %1735 = vrot.lane.b32.xlu0 %v1462, 88
        %v1736 = vpop.permute.xlu0 %1735
        %v1738 = vsel %vm1465, %v1734, 0
        %v1741 = vsel %vm1465, %v1736, 0
        %1743 = vmatprep.subr.bf16.mxu0 0
        %1744 = vmatpush1.bf16.xpose.msra.mxu0 %v1741
        %1745 = vmatprep.subr.bf16.mxu0 0
        %1746 = vmatpush1.bf16.xpose.msra.mxu0 0
        %1747 = vmatprep.subr.bf16.mxu0 0
        %1748 = vmatpush1.bf16.xpose.msra.mxu0 0
        %1749 = vmatprep.subr.bf16.mxu0 0
        %1750 = vmatpush1.bf16.xpose.msra.mxu0 0
        %1751 = vmatprep.subr.bf16.mxu0 0
        %1752 = vmatpush1.bf16.xpose.msra.mxu0 0
        %1753 = vmatprep.subr.bf16.mxu0 0
        %1754 = vmatpush1.bf16.xpose.msra.mxu0 0
        %1755 = vmatprep.subr.bf16.mxu0 0
        %1756 = vmatpush1.bf16.xpose.msra.mxu0 0
        %1757 = vmatprep.subr.bf16.mxu0 0
        %1758 = vmatpush1.bf16.xpose.msra.mxu0 0
        %1759 = vmatprep.subr.bf16.mxu0 0
        %1760 = vmatpush1.bf16.xpose.msra.mxu0 0
        %1761 = vmatprep.subr.bf16.mxu0 0
        %1762 = vmatpush1.bf16.xpose.msra.mxu0 0
        %1763 = vmatprep.subr.bf16.mxu0 0
        %1764 = vmatpush1.bf16.xpose.msra.mxu0 0
        %1765 = vmatprep.subr.bf16.mxu0 0
        %1766 = vmatpush1.bf16.xpose.msra.mxu0 0
        %1767 = vmatprep.subr.bf16.mxu0 0
        %1768 = vmatpush1.bf16.xpose.msra.mxu0 0
        %1769 = vmatprep.subr.bf16.mxu0 0
        %1770 = vmatpush1.bf16.xpose.msra.mxu0 0
        %1771 = vmatprep.subr.bf16.mxu0 0
        %1772 = vmatpush1.bf16.xpose.msra.mxu0 0
        %1773 = vmatprep.subr.bf16.mxu0 0
        %1774 = vmatpush1.bf16.xpose.msra.mxu0 0
        %1775 = vmatprep.mubr.bf16.mxu0 0
        %1776 = vmatmul.mubr.bf16.gmra.mrb[0].mxu0 %v1738
        %v1777 = vpop.f32.mrb[0].mxu0
        %v1778 = vadd.f32 0.0, %v1777
        %v1779 = vpop.f32.mrb[0].mxu0
        %v1780 = vpop.f32.mrb[0].mxu0
        %v1781 = vpop.f32.mrb[0].mxu0
        %1782 = vdwg.mxu0
        %v1783 = vsel %vm1465, %v1728, -inf
        %1784 = vmax.xlane.f32.xlu0 %v1783
        %v1785 = vpop.xlane.xlu0 %1784
        %v1786 = vsel %vm1465, %v1778, -inf
        %1787 = vmax.xlane.f32.xlu0 %v1786
        %v1788 = vpop.xlane.xlu0 %1787
        %v1789 = vsub.f32 %v1728, %v1785
        %v1790 = vsub.f32 %v1778, %v1788
        %v1791 = vmul.f32 %v1789, 1.442695
        %v1792 = vpow.pop %v1791
        %v1793 = vmul.f32 %v1790, 1.442695
        %v1794 = vpow.pop %v1793
        %v1795 = vsel %vm1465, %v1792, 0.0
        %1796 = vadd.xlane.f32.xlu0 %v1795
        %v1797 = vpop.xlane.xlu0 %1796
        %v1798 = vsel %vm1465, %v1794, 0.0
        %1799 = vadd.xlane.f32.xlu0 %v1798
        %v1800 = vpop.xlane.xlu0 %1799
        %v1801 = vrcp.pop %v1797
        %v1802 = vrcp.pop %v1800
        %v1803 = vmul.f32 %v1792, %v1801
        %v1804 = vmul.f32 %v1794, %v1802
        %v1805 = vpack.c.bf16 %v1803, %v1803
        %v1806 = vpack.c.bf16 %v1804, %v1804
        %1807 = vrot.lane.b32.xlu0 %v1461, 56
        %v1808 = vpop.permute.xlu0 %1807
        %v1810 = vsel %vm1465, %v1805, 0
        %v1813 = vsel %vm1589, %v1808, 0
        %1815 = vmatprep.subr.bf16.mxu0 0
        %1816 = vmatpush1.bf16.msra.mxu0 %v1813
        %1817 = vmatprep.subr.bf16.mxu0 0
        %1818 = vmatpush1.bf16.msra.mxu0 0
        %1819 = vmatprep.subr.bf16.mxu0 0
        %1820 = vmatpush1.bf16.msra.mxu0 0
        %1821 = vmatprep.subr.bf16.mxu0 0
        %1822 = vmatpush1.bf16.msra.mxu0 0
        %1823 = vmatprep.subr.bf16.mxu0 0
        %1824 = vmatpush1.bf16.msra.mxu0 0
        %1825 = vmatprep.subr.bf16.mxu0 0
        %1826 = vmatpush1.bf16.msra.mxu0 0
        %1827 = vmatprep.subr.bf16.mxu0 0
        %1828 = vmatpush1.bf16.msra.mxu0 0
        %1829 = vmatprep.subr.bf16.mxu0 0
        %1830 = vmatpush1.bf16.msra.mxu0 0
        %1831 = vmatprep.subr.bf16.mxu0 0
        %1832 = vmatpush1.bf16.msra.mxu0 0
        %1833 = vmatprep.subr.bf16.mxu0 0
        %1834 = vmatpush1.bf16.msra.mxu0 0
        %1835 = vmatprep.subr.bf16.mxu0 0
        %1836 = vmatpush1.bf16.msra.mxu0 0
        %1837 = vmatprep.subr.bf16.mxu0 0
        %1838 = vmatpush1.bf16.msra.mxu0 0
        %1839 = vmatprep.subr.bf16.mxu0 0
        %1840 = vmatpush1.bf16.msra.mxu0 0
        %1841 = vmatprep.subr.bf16.mxu0 0
        %1842 = vmatpush1.bf16.msra.mxu0 0
        %1843 = vmatprep.subr.bf16.mxu0 0
        %1844 = vmatpush1.bf16.msra.mxu0 0
        %1845 = vmatprep.subr.bf16.mxu0 0
        %1846 = vmatpush1.bf16.msra.mxu0 0
        %1847 = vmatprep.mubr.bf16.mxu0 0
        %1848 = vmatmul.mubr.bf16.gmra.mrb[0].mxu0 %v1810
        %v1849 = vpop.f32.mrb[0].mxu0
        %v1850 = vadd.f32 0.0, %v1849
        %v1851 = vpop.f32.mrb[0].mxu0
        %v1852 = vpop.f32.mrb[0].mxu0
        %v1853 = vpop.f32.mrb[0].mxu0
        %1854 = vdwg.mxu0
        %1855 = vrot.lane.b32.xlu0 %v1462, 56
        %v1856 = vpop.permute.xlu0 %1855
        %v1858 = vsel %vm1465, %v1806, 0
        %v1861 = vsel %vm1589, %v1856, 0
        %1863 = vmatprep.subr.bf16.mxu0 0
        %1864 = vmatpush1.bf16.msra.mxu0 %v1861
        %1865 = vmatprep.subr.bf16.mxu0 0
        %1866 = vmatpush1.bf16.msra.mxu0 0
        %1867 = vmatprep.subr.bf16.mxu0 0
        %1868 = vmatpush1.bf16.msra.mxu0 0
        %1869 = vmatprep.subr.bf16.mxu0 0
        %1870 = vmatpush1.bf16.msra.mxu0 0
        %1871 = vmatprep.subr.bf16.mxu0 0
        %1872 = vmatpush1.bf16.msra.mxu0 0
        %1873 = vmatprep.subr.bf16.mxu0 0
        %1874 = vmatpush1.bf16.msra.mxu0 0
        %1875 = vmatprep.subr.bf16.mxu0 0
        %1876 = vmatpush1.bf16.msra.mxu0 0
        %1877 = vmatprep.subr.bf16.mxu0 0
        %1878 = vmatpush1.bf16.msra.mxu0 0
        %1879 = vmatprep.subr.bf16.mxu0 0
        %1880 = vmatpush1.bf16.msra.mxu0 0
        %1881 = vmatprep.subr.bf16.mxu0 0
        %1882 = vmatpush1.bf16.msra.mxu0 0
        %1883 = vmatprep.subr.bf16.mxu0 0
        %1884 = vmatpush1.bf16.msra.mxu0 0
        %1885 = vmatprep.subr.bf16.mxu0 0
        %1886 = vmatpush1.bf16.msra.mxu0 0
        %1887 = vmatprep.subr.bf16.mxu0 0
        %1888 = vmatpush1.bf16.msra.mxu0 0
        %1889 = vmatprep.subr.bf16.mxu0 0
        %1890 = vmatpush1.bf16.msra.mxu0 0
        %1891 = vmatprep.subr.bf16.mxu0 0
        %1892 = vmatpush1.bf16.msra.mxu0 0
        %1893 = vmatprep.subr.bf16.mxu0 0
        %1894 = vmatpush1.bf16.msra.mxu0 0
        %1895 = vmatprep.mubr.bf16.mxu0 0
        %1896 = vmatmul.mubr.bf16.gmra.mrb[0].mxu0 %v1858
        %v1897 = vpop.f32.mrb[0].mxu0
        %v1898 = vadd.f32 0.0, %v1897
        %v1899 = vpop.f32.mrb[0].mxu0
        %v1900 = vpop.f32.mrb[0].mxu0
        %v1901 = vpop.f32.mrb[0].mxu0
        %1902 = vdwg.mxu0
        %v1903 = vpack.c.bf16 %v1898, %v1850
        %1905 = vrot.lane.b32.xlu0 %v1903, 8
        %v1906 = vpop.permute.xlu0 %1905
        %vm1908 = vcmask 130112
        %1909 = vst.msk [vmem:[#allocation2] sm:$0xff] %vm1908, %v1906
        %1910 = vrot.lane.b32.xlu0 %v1461, 112
        %v1911 = vpop.permute.xlu0 %1910
        %1912 = vrot.lane.b32.xlu0 %v1461, 80
        %v1913 = vpop.permute.xlu0 %1912
        %v1915 = vsel %vm1465, %v1911, 0
        %v1918 = vsel %vm1465, %v1913, 0
        %1920 = vmatprep.subr.bf16.mxu0 0
        %1921 = vmatpush1.bf16.xpose.msra.mxu0 %v1918
        %1922 = vmatprep.subr.bf16.mxu0 0
        %1923 = vmatpush1.bf16.xpose.msra.mxu0 0
        %1924 = vmatprep.subr.bf16.mxu0 0
        %1925 = vmatpush1.bf16.xpose.msra.mxu0 0
        %1926 = vmatprep.subr.bf16.mxu0 0
        %1927 = vmatpush1.bf16.xpose.msra.mxu0 0
        %1928 = vmatprep.subr.bf16.mxu0 0
        %1929 = vmatpush1.bf16.xpose.msra.mxu0 0
        %1930 = vmatprep.subr.bf16.mxu0 0
        %1931 = vmatpush1.bf16.xpose.msra.mxu0 0
        %1932 = vmatprep.subr.bf16.mxu0 0
        %1933 = vmatpush1.bf16.xpose.msra.mxu0 0
        %1934 = vmatprep.subr.bf16.mxu0 0
        %1935 = vmatpush1.bf16.xpose.msra.mxu0 0
        %1936 = vmatprep.subr.bf16.mxu0 0
        %1937 = vmatpush1.bf16.xpose.msra.mxu0 0
        %1938 = vmatprep.subr.bf16.mxu0 0
        %1939 = vmatpush1.bf16.xpose.msra.mxu0 0
        %1940 = vmatprep.subr.bf16.mxu0 0
        %1941 = vmatpush1.bf16.xpose.msra.mxu0 0
        %1942 = vmatprep.subr.bf16.mxu0 0
        %1943 = vmatpush1.bf16.xpose.msra.mxu0 0
        %1944 = vmatprep.subr.bf16.mxu0 0
        %1945 = vmatpush1.bf16.xpose.msra.mxu0 0
        %1946 = vmatprep.subr.bf16.mxu0 0
        %1947 = vmatpush1.bf16.xpose.msra.mxu0 0
        %1948 = vmatprep.subr.bf16.mxu0 0
        %1949 = vmatpush1.bf16.xpose.msra.mxu0 0
        %1950 = vmatprep.subr.bf16.mxu0 0
        %1951 = vmatpush1.bf16.xpose.msra.mxu0 0
        %1952 = vmatprep.mubr.bf16.mxu0 0
        %1953 = vmatmul.mubr.bf16.gmra.mrb[0].mxu0 %v1915
        %v1954 = vpop.f32.mrb[0].mxu0
        %v1955 = vadd.f32 0.0, %v1954
        %v1956 = vpop.f32.mrb[0].mxu0
        %v1957 = vpop.f32.mrb[0].mxu0
        %v1958 = vpop.f32.mrb[0].mxu0
        %1959 = vdwg.mxu0
        %1960 = vrot.lane.b32.xlu0 %v1462, 112
        %v1961 = vpop.permute.xlu0 %1960
        %1962 = vrot.lane.b32.xlu0 %v1462, 80
        %v1963 = vpop.permute.xlu0 %1962
        %v1965 = vsel %vm1465, %v1961, 0
        %v1968 = vsel %vm1465, %v1963, 0
        %1970 = vmatprep.subr.bf16.mxu0 0
        %1971 = vmatpush1.bf16.xpose.msra.mxu0 %v1968
        %1972 = vmatprep.subr.bf16.mxu0 0
        %1973 = vmatpush1.bf16.xpose.msra.mxu0 0
        %1974 = vmatprep.subr.bf16.mxu0 0
        %1975 = vmatpush1.bf16.xpose.msra.mxu0 0
        %1976 = vmatprep.subr.bf16.mxu0 0
        %1977 = vmatpush1.bf16.xpose.msra.mxu0 0
        %1978 = vmatprep.subr.bf16.mxu0 0
        %1979 = vmatpush1.bf16.xpose.msra.mxu0 0
        %1980 = vmatprep.subr.bf16.mxu0 0
        %1981 = vmatpush1.bf16.xpose.msra.mxu0 0
        %1982 = vmatprep.subr.bf16.mxu0 0
        %1983 = vmatpush1.bf16.xpose.msra.mxu0 0
        %1984 = vmatprep.subr.bf16.mxu0 0
        %1985 = vmatpush1.bf16.xpose.msra.mxu0 0
        %1986 = vmatprep.subr.bf16.mxu0 0
        %1987 = vmatpush1.bf16.xpose.msra.mxu0 0
        %1988 = vmatprep.subr.bf16.mxu0 0
        %1989 = vmatpush1.bf16.xpose.msra.mxu0 0
        %1990 = vmatprep.subr.bf16.mxu0 0
        %1991 = vmatpush1.bf16.xpose.msra.mxu0 0
        %1992 = vmatprep.subr.bf16.mxu0 0
        %1993 = vmatpush1.bf16.xpose.msra.mxu0 0
        %1994 = vmatprep.subr.bf16.mxu0 0
        %1995 = vmatpush1.bf16.xpose.msra.mxu0 0
        %1996 = vmatprep.subr.bf16.mxu0 0
        %1997 = vmatpush1.bf16.xpose.msra.mxu0 0
        %1998 = vmatprep.subr.bf16.mxu0 0
        %1999 = vmatpush1.bf16.xpose.msra.mxu0 0
        %2000 = vmatprep.subr.bf16.mxu0 0
        %2001 = vmatpush1.bf16.xpose.msra.mxu0 0
        %2002 = vmatprep.mubr.bf16.mxu0 0
        %2003 = vmatmul.mubr.bf16.gmra.mrb[0].mxu0 %v1965
        %v2004 = vpop.f32.mrb[0].mxu0
        %v2005 = vadd.f32 0.0, %v2004
        %v2006 = vpop.f32.mrb[0].mxu0
        %v2007 = vpop.f32.mrb[0].mxu0
        %v2008 = vpop.f32.mrb[0].mxu0
        %2009 = vdwg.mxu0
        %v2010 = vsel %vm1465, %v1955, -inf
        %2011 = vmax.xlane.f32.xlu0 %v2010
        %v2012 = vpop.xlane.xlu0 %2011
        %v2013 = vsel %vm1465, %v2005, -inf
        %2014 = vmax.xlane.f32.xlu0 %v2013
        %v2015 = vpop.xlane.xlu0 %2014
        %v2016 = vsub.f32 %v1955, %v2012
        %v2017 = vsub.f32 %v2005, %v2015
        %v2018 = vmul.f32 %v2016, 1.442695
        %v2019 = vpow.pop %v2018
        %v2020 = vmul.f32 %v2017, 1.442695
        %v2021 = vpow.pop %v2020
        %v2022 = vsel %vm1465, %v2019, 0.0
        %2023 = vadd.xlane.f32.xlu0 %v2022
        %v2024 = vpop.xlane.xlu0 %2023
        %v2025 = vsel %vm1465, %v2021, 0.0
        %2026 = vadd.xlane.f32.xlu0 %v2025
        %v2027 = vpop.xlane.xlu0 %2026
        %v2028 = vrcp.pop %v2024
        %v2029 = vrcp.pop %v2027
        %v2030 = vmul.f32 %v2019, %v2028
        %v2031 = vmul.f32 %v2021, %v2029
        %v2032 = vpack.c.bf16 %v2030, %v2030
        %v2033 = vpack.c.bf16 %v2031, %v2031
        %2034 = vrot.lane.b32.xlu0 %v1461, 48
        %v2035 = vpop.permute.xlu0 %2034
        %v2037 = vsel %vm1465, %v2032, 0
        %v2040 = vsel %vm1589, %v2035, 0
        %2042 = vmatprep.subr.bf16.mxu0 0
        %2043 = vmatpush1.bf16.msra.mxu0 %v2040
        %2044 = vmatprep.subr.bf16.mxu0 0
        %2045 = vmatpush1.bf16.msra.mxu0 0
        %2046 = vmatprep.subr.bf16.mxu0 0
        %2047 = vmatpush1.bf16.msra.mxu0 0
        %2048 = vmatprep.subr.bf16.mxu0 0
        %2049 = vmatpush1.bf16.msra.mxu0 0
        %2050 = vmatprep.subr.bf16.mxu0 0
        %2051 = vmatpush1.bf16.msra.mxu0 0
        %2052 = vmatprep.subr.bf16.mxu0 0
        %2053 = vmatpush1.bf16.msra.mxu0 0
        %2054 = vmatprep.subr.bf16.mxu0 0
        %2055 = vmatpush1.bf16.msra.mxu0 0
        %2056 = vmatprep.subr.bf16.mxu0 0
        %2057 = vmatpush1.bf16.msra.mxu0 0
        %2058 = vmatprep.subr.bf16.mxu0 0
        %2059 = vmatpush1.bf16.msra.mxu0 0
        %2060 = vmatprep.subr.bf16.mxu0 0
        %2061 = vmatpush1.bf16.msra.mxu0 0
        %2062 = vmatprep.subr.bf16.mxu0 0
        %2063 = vmatpush1.bf16.msra.mxu0 0
        %2064 = vmatprep.subr.bf16.mxu0 0
        %2065 = vmatpush1.bf16.msra.mxu0 0
        %2066 = vmatprep.subr.bf16.mxu0 0
        %2067 = vmatpush1.bf16.msra.mxu0 0
        %2068 = vmatprep.subr.bf16.mxu0 0
        %2069 = vmatpush1.bf16.msra.mxu0 0
        %2070 = vmatprep.subr.bf16.mxu0 0
        %2071 = vmatpush1.bf16.msra.mxu0 0
        %2072 = vmatprep.subr.bf16.mxu0 0
        %2073 = vmatpush1.bf16.msra.mxu0 0
        %2074 = vmatprep.mubr.bf16.mxu0 0
        %2075 = vmatmul.mubr.bf16.gmra.mrb[0].mxu0 %v2037
        %v2076 = vpop.f32.mrb[0].mxu0
        %v2077 = vadd.f32 0.0, %v2076
        %v2078 = vpop.f32.mrb[0].mxu0
        %v2079 = vpop.f32.mrb[0].mxu0
        %v2080 = vpop.f32.mrb[0].mxu0
        %2081 = vdwg.mxu0
        %2082 = vrot.lane.b32.xlu0 %v1462, 48
        %v2083 = vpop.permute.xlu0 %2082
        %v2085 = vsel %vm1465, %v2033, 0
        %v2088 = vsel %vm1589, %v2083, 0
        %2090 = vmatprep.subr.bf16.mxu0 0
        %2091 = vmatpush1.bf16.msra.mxu0 %v2088
        %2092 = vmatprep.subr.bf16.mxu0 0
        %2093 = vmatpush1.bf16.msra.mxu0 0
        %2094 = vmatprep.subr.bf16.mxu0 0
        %2095 = vmatpush1.bf16.msra.mxu0 0
        %2096 = vmatprep.subr.bf16.mxu0 0
        %2097 = vmatpush1.bf16.msra.mxu0 0
        %2098 = vmatprep.subr.bf16.mxu0 0
        %2099 = vmatpush1.bf16.msra.mxu0 0
        %2100 = vmatprep.subr.bf16.mxu0 0
        %2101 = vmatpush1.bf16.msra.mxu0 0
        %2102 = vmatprep.subr.bf16.mxu0 0
        %2103 = vmatpush1.bf16.msra.mxu0 0
        %2104 = vmatprep.subr.bf16.mxu0 0
        %2105 = vmatpush1.bf16.msra.mxu0 0
        %2106 = vmatprep.subr.bf16.mxu0 0
        %2107 = vmatpush1.bf16.msra.mxu0 0
        %2108 = vmatprep.subr.bf16.mxu0 0
        %2109 = vmatpush1.bf16.msra.mxu0 0
        %2110 = vmatprep.subr.bf16.mxu0 0
        %2111 = vmatpush1.bf16.msra.mxu0 0
        %2112 = vmatprep.subr.bf16.mxu0 0
        %2113 = vmatpush1.bf16.msra.mxu0 0
        %2114 = vmatprep.subr.bf16.mxu0 0
        %2115 = vmatpush1.bf16.msra.mxu0 0
        %2116 = vmatprep.subr.bf16.mxu0 0
        %2117 = vmatpush1.bf16.msra.mxu0 0
        %2118 = vmatprep.subr.bf16.mxu0 0
        %2119 = vmatpush1.bf16.msra.mxu0 0
        %2120 = vmatprep.subr.bf16.mxu0 0
        %2121 = vmatpush1.bf16.msra.mxu0 0
        %2122 = vmatprep.mubr.bf16.mxu0 0
        %2123 = vmatmul.mubr.bf16.gmra.mrb[0].mxu0 %v2085
        %v2124 = vpop.f32.mrb[0].mxu0
        %v2125 = vadd.f32 0.0, %v2124
        %v2126 = vpop.f32.mrb[0].mxu0
        %v2127 = vpop.f32.mrb[0].mxu0
        %v2128 = vpop.f32.mrb[0].mxu0
        %2129 = vdwg.mxu0
        %v2130 = vpack.c.bf16 %v2125, %v2077
        %2132 = vrot.lane.b32.xlu0 %v2130, 16
        %v2133 = vpop.permute.xlu0 %2132
        %vm2135 = vcmask 195712
        %2136 = vst.msk [vmem:[#allocation2] sm:$0xff] %vm2135, %v2133
        %2137 = vrot.lane.b32.xlu0 %v1461, 104
        %v2138 = vpop.permute.xlu0 %2137
        %2139 = vrot.lane.b32.xlu0 %v1461, 72
        %v2140 = vpop.permute.xlu0 %2139
        %v2142 = vsel %vm1465, %v2138, 0
        %v2145 = vsel %vm1465, %v2140, 0
        %2147 = vmatprep.subr.bf16.mxu0 0
        %2148 = vmatpush1.bf16.xpose.msra.mxu0 %v2145
        %2149 = vmatprep.subr.bf16.mxu0 0
        %2150 = vmatpush1.bf16.xpose.msra.mxu0 0
        %2151 = vmatprep.subr.bf16.mxu0 0
        %2152 = vmatpush1.bf16.xpose.msra.mxu0 0
        %2153 = vmatprep.subr.bf16.mxu0 0
        %2154 = vmatpush1.bf16.xpose.msra.mxu0 0
        %2155 = vmatprep.subr.bf16.mxu0 0
        %2156 = vmatpush1.bf16.xpose.msra.mxu0 0
        %2157 = vmatprep.subr.bf16.mxu0 0
        %2158 = vmatpush1.bf16.xpose.msra.mxu0 0
        %2159 = vmatprep.subr.bf16.mxu0 0
        %2160 = vmatpush1.bf16.xpose.msra.mxu0 0
        %2161 = vmatprep.subr.bf16.mxu0 0
        %2162 = vmatpush1.bf16.xpose.msra.mxu0 0
        %2163 = vmatprep.subr.bf16.mxu0 0
        %2164 = vmatpush1.bf16.xpose.msra.mxu0 0
        %2165 = vmatprep.subr.bf16.mxu0 0
        %2166 = vmatpush1.bf16.xpose.msra.mxu0 0
        %2167 = vmatprep.subr.bf16.mxu0 0
        %2168 = vmatpush1.bf16.xpose.msra.mxu0 0
        %2169 = vmatprep.subr.bf16.mxu0 0
        %2170 = vmatpush1.bf16.xpose.msra.mxu0 0
        %2171 = vmatprep.subr.bf16.mxu0 0
        %2172 = vmatpush1.bf16.xpose.msra.mxu0 0
        %2173 = vmatprep.subr.bf16.mxu0 0
        %2174 = vmatpush1.bf16.xpose.msra.mxu0 0
        %2175 = vmatprep.subr.bf16.mxu0 0
        %2176 = vmatpush1.bf16.xpose.msra.mxu0 0
        %2177 = vmatprep.subr.bf16.mxu0 0
        %2178 = vmatpush1.bf16.xpose.msra.mxu0 0
        %2179 = vmatprep.mubr.bf16.mxu0 0
        %2180 = vmatmul.mubr.bf16.gmra.mrb[0].mxu0 %v2142
        %v2181 = vpop.f32.mrb[0].mxu0
        %v2182 = vadd.f32 0.0, %v2181
        %v2183 = vpop.f32.mrb[0].mxu0
        %v2184 = vpop.f32.mrb[0].mxu0
        %v2185 = vpop.f32.mrb[0].mxu0
        %2186 = vdwg.mxu0
        %2187 = vrot.lane.b32.xlu0 %v1462, 104
        %v2188 = vpop.permute.xlu0 %2187
        %2189 = vrot.lane.b32.xlu0 %v1462, 72
        %v2190 = vpop.permute.xlu0 %2189
        %v2192 = vsel %vm1465, %v2188, 0
        %v2195 = vsel %vm1465, %v2190, 0
        %2197 = vmatprep.subr.bf16.mxu0 0
        %2198 = vmatpush1.bf16.xpose.msra.mxu0 %v2195
        %2199 = vmatprep.subr.bf16.mxu0 0
        %2200 = vmatpush1.bf16.xpose.msra.mxu0 0
        %2201 = vmatprep.subr.bf16.mxu0 0
        %2202 = vmatpush1.bf16.xpose.msra.mxu0 0
        %2203 = vmatprep.subr.bf16.mxu0 0
        %2204 = vmatpush1.bf16.xpose.msra.mxu0 0
        %2205 = vmatprep.subr.bf16.mxu0 0
        %2206 = vmatpush1.bf16.xpose.msra.mxu0 0
        %2207 = vmatprep.subr.bf16.mxu0 0
        %2208 = vmatpush1.bf16.xpose.msra.mxu0 0
        %2209 = vmatprep.subr.bf16.mxu0 0
        %2210 = vmatpush1.bf16.xpose.msra.mxu0 0
        %2211 = vmatprep.subr.bf16.mxu0 0
        %2212 = vmatpush1.bf16.xpose.msra.mxu0 0
        %2213 = vmatprep.subr.bf16.mxu0 0
        %2214 = vmatpush1.bf16.xpose.msra.mxu0 0
        %2215 = vmatprep.subr.bf16.mxu0 0
        %2216 = vmatpush1.bf16.xpose.msra.mxu0 0
        %2217 = vmatprep.subr.bf16.mxu0 0
        %2218 = vmatpush1.bf16.xpose.msra.mxu0 0
        %2219 = vmatprep.subr.bf16.mxu0 0
        %2220 = vmatpush1.bf16.xpose.msra.mxu0 0
        %2221 = vmatprep.subr.bf16.mxu0 0
        %2222 = vmatpush1.bf16.xpose.msra.mxu0 0
        %2223 = vmatprep.subr.bf16.mxu0 0
        %2224 = vmatpush1.bf16.xpose.msra.mxu0 0
        %2225 = vmatprep.subr.bf16.mxu0 0
        %2226 = vmatpush1.bf16.xpose.msra.mxu0 0
        %2227 = vmatprep.subr.bf16.mxu0 0
        %2228 = vmatpush1.bf16.xpose.msra.mxu0 0
        %2229 = vmatprep.mubr.bf16.mxu0 0
        %2230 = vmatmul.mubr.bf16.gmra.mrb[0].mxu0 %v2192
        %v2231 = vpop.f32.mrb[0].mxu0
        %v2232 = vadd.f32 0.0, %v2231
        %v2233 = vpop.f32.mrb[0].mxu0
        %v2234 = vpop.f32.mrb[0].mxu0
        %v2235 = vpop.f32.mrb[0].mxu0
        %2236 = vdwg.mxu0
        %v2237 = vsel %vm1465, %v2182, -inf
        %2238 = vmax.xlane.f32.xlu0 %v2237
        %v2239 = vpop.xlane.xlu0 %2238
        %v2240 = vsel %vm1465, %v2232, -inf
        %2241 = vmax.xlane.f32.xlu0 %v2240
        %v2242 = vpop.xlane.xlu0 %2241
        %v2243 = vsub.f32 %v2182, %v2239
        %v2244 = vsub.f32 %v2232, %v2242
        %v2245 = vmul.f32 %v2243, 1.442695
        %v2246 = vpow.pop %v2245
        %v2247 = vmul.f32 %v2244, 1.442695
        %v2248 = vpow.pop %v2247
        %v2249 = vsel %vm1465, %v2246, 0.0
        %2250 = vadd.xlane.f32.xlu0 %v2249
        %v2251 = vpop.xlane.xlu0 %2250
        %v2252 = vsel %vm1465, %v2248, 0.0
        %2253 = vadd.xlane.f32.xlu0 %v2252
        %v2254 = vpop.xlane.xlu0 %2253
        %v2255 = vrcp.pop %v2251
        %v2256 = vrcp.pop %v2254
        %v2257 = vmul.f32 %v2246, %v2255
        %v2258 = vmul.f32 %v2248, %v2256
        %v2259 = vpack.c.bf16 %v2257, %v2257
        %v2260 = vpack.c.bf16 %v2258, %v2258
        %2261 = vrot.lane.b32.xlu0 %v1461, 40
        %v2262 = vpop.permute.xlu0 %2261
        %v2264 = vsel %vm1465, %v2259, 0
        %v2267 = vsel %vm1589, %v2262, 0
        %2269 = vmatprep.subr.bf16.mxu0 0
        %2270 = vmatpush1.bf16.msra.mxu0 %v2267
        %2271 = vmatprep.subr.bf16.mxu0 0
        %2272 = vmatpush1.bf16.msra.mxu0 0
        %2273 = vmatprep.subr.bf16.mxu0 0
        %2274 = vmatpush1.bf16.msra.mxu0 0
        %2275 = vmatprep.subr.bf16.mxu0 0
        %2276 = vmatpush1.bf16.msra.mxu0 0
        %2277 = vmatprep.subr.bf16.mxu0 0
        %2278 = vmatpush1.bf16.msra.mxu0 0
        %2279 = vmatprep.subr.bf16.mxu0 0
        %2280 = vmatpush1.bf16.msra.mxu0 0
        %2281 = vmatprep.subr.bf16.mxu0 0
        %2282 = vmatpush1.bf16.msra.mxu0 0
        %2283 = vmatprep.subr.bf16.mxu0 0
        %2284 = vmatpush1.bf16.msra.mxu0 0
        %2285 = vmatprep.subr.bf16.mxu0 0
        %2286 = vmatpush1.bf16.msra.mxu0 0
        %2287 = vmatprep.subr.bf16.mxu0 0
        %2288 = vmatpush1.bf16.msra.mxu0 0
        %2289 = vmatprep.subr.bf16.mxu0 0
        %2290 = vmatpush1.bf16.msra.mxu0 0
        %2291 = vmatprep.subr.bf16.mxu0 0
        %2292 = vmatpush1.bf16.msra.mxu0 0
        %2293 = vmatprep.subr.bf16.mxu0 0
        %2294 = vmatpush1.bf16.msra.mxu0 0
        %2295 = vmatprep.subr.bf16.mxu0 0
        %2296 = vmatpush1.bf16.msra.mxu0 0
        %2297 = vmatprep.subr.bf16.mxu0 0
        %2298 = vmatpush1.bf16.msra.mxu0 0
        %2299 = vmatprep.subr.bf16.mxu0 0
        %2300 = vmatpush1.bf16.msra.mxu0 0
        %2301 = vmatprep.mubr.bf16.mxu0 0
        %2302 = vmatmul.mubr.bf16.gmra.mrb[0].mxu0 %v2264
        %v2303 = vpop.f32.mrb[0].mxu0
        %v2304 = vadd.f32 0.0, %v2303
        %v2305 = vpop.f32.mrb[0].mxu0
        %v2306 = vpop.f32.mrb[0].mxu0
        %v2307 = vpop.f32.mrb[0].mxu0
        %2308 = vdwg.mxu0
        %2309 = vrot.lane.b32.xlu0 %v1462, 40
        %v2310 = vpop.permute.xlu0 %2309
        %v2312 = vsel %vm1465, %v2260, 0
        %v2315 = vsel %vm1589, %v2310, 0
        %2317 = vmatprep.subr.bf16.mxu0 0
        %2318 = vmatpush1.bf16.msra.mxu0 %v2315
        %2319 = vmatprep.subr.bf16.mxu0 0
        %2320 = vmatpush1.bf16.msra.mxu0 0
        %2321 = vmatprep.subr.bf16.mxu0 0
        %2322 = vmatpush1.bf16.msra.mxu0 0
        %2323 = vmatprep.subr.bf16.mxu0 0
        %2324 = vmatpush1.bf16.msra.mxu0 0
        %2325 = vmatprep.subr.bf16.mxu0 0
        %2326 = vmatpush1.bf16.msra.mxu0 0
        %2327 = vmatprep.subr.bf16.mxu0 0
        %2328 = vmatpush1.bf16.msra.mxu0 0
        %2329 = vmatprep.subr.bf16.mxu0 0
        %2330 = vmatpush1.bf16.msra.mxu0 0
        %2331 = vmatprep.subr.bf16.mxu0 0
        %2332 = vmatpush1.bf16.msra.mxu0 0
        %2333 = vmatprep.subr.bf16.mxu0 0
        %2334 = vmatpush1.bf16.msra.mxu0 0
        %2335 = vmatprep.subr.bf16.mxu0 0
        %2336 = vmatpush1.bf16.msra.mxu0 0
        %2337 = vmatprep.subr.bf16.mxu0 0
        %2338 = vmatpush1.bf16.msra.mxu0 0
        %2339 = vmatprep.subr.bf16.mxu0 0
        %2340 = vmatpush1.bf16.msra.mxu0 0
        %2341 = vmatprep.subr.bf16.mxu0 0
        %2342 = vmatpush1.bf16.msra.mxu0 0
        %2343 = vmatprep.subr.bf16.mxu0 0
        %2344 = vmatpush1.bf16.msra.mxu0 0
        %2345 = vmatprep.subr.bf16.mxu0 0
        %2346 = vmatpush1.bf16.msra.mxu0 0
        %2347 = vmatprep.subr.bf16.mxu0 0
        %2348 = vmatpush1.bf16.msra.mxu0 0
        %2349 = vmatprep.mubr.bf16.mxu0 0
        %2350 = vmatmul.mubr.bf16.gmra.mrb[0].mxu0 %v2312
        %v2351 = vpop.f32.mrb[0].mxu0
        %v2352 = vadd.f32 0.0, %v2351
        %v2353 = vpop.f32.mrb[0].mxu0
        %v2354 = vpop.f32.mrb[0].mxu0
        %v2355 = vpop.f32.mrb[0].mxu0
        %2356 = vdwg.mxu0
        %v2357 = vpack.c.bf16 %v2352, %v2304
        %2359 = vrot.lane.b32.xlu0 %v2357, 24
        %v2360 = vpop.permute.xlu0 %2359
        %vm2362 = vcmask 261312
        %2363 = vst.msk [vmem:[#allocation2] sm:$0xff] %vm2362, %v2360
        %v2364 = vld [vmem:[#allocation2] sm:$0xff]
        %v2366 = vlaneseq
        %v2367 = vshrl.u32 %v2366, 7
        %v2368 = vsub.s32 0, %v2367
        %v2369 = vrot.slane %v1392, %v2368
        %v2375 = vunpack.c.l.b16 %v1388
        %v2376 = vunpack.c.l.b16 %v1389
        %v2377 = vunpack.c.l.b16 %v1390
        %v2378 = vunpack.c.l.b16 %v1391
        %v2379 = vpack.c.b16 %v2376, %v2375
        %v2380 = vpack.c.b16 %v2378, %v2377
        %v2384 = vsel %vm1412, %v2364, 0
        %2386 = vmatprep.subr.bf16.mxu0 0
        %2387 = vmatpush1.bf16.msra.mxu0 %v2379
        %2388 = vmatprep.subr.bf16.mxu0 0
        %2389 = vmatpush1.bf16.msra.mxu0 %v2380
        %2390 = vmatprep.subr.bf16.mxu0 0
        %2391 = vmatpush1.bf16.msra.mxu0 0
        %2392 = vmatprep.subr.bf16.mxu0 0
        %2393 = vmatpush1.bf16.msra.mxu0 0
        %2394 = vmatprep.subr.bf16.mxu0 0
        %2395 = vmatpush1.bf16.msra.mxu0 0
        %2396 = vmatprep.subr.bf16.mxu0 0
        %2397 = vmatpush1.bf16.msra.mxu0 0
        %2398 = vmatprep.subr.bf16.mxu0 0
        %2399 = vmatpush1.bf16.msra.mxu0 0
        %2400 = vmatprep.subr.bf16.mxu0 0
        %2401 = vmatpush1.bf16.msra.mxu0 0
        %2402 = vmatprep.subr.bf16.mxu0 0
        %2403 = vmatpush1.bf16.msra.mxu0 0
        %2404 = vmatprep.subr.bf16.mxu0 0
        %2405 = vmatpush1.bf16.msra.mxu0 0
        %2406 = vmatprep.subr.bf16.mxu0 0
        %2407 = vmatpush1.bf16.msra.mxu0 0
        %2408 = vmatprep.subr.bf16.mxu0 0
        %2409 = vmatpush1.bf16.msra.mxu0 0
        %2410 = vmatprep.subr.bf16.mxu0 0
        %2411 = vmatpush1.bf16.msra.mxu0 0
        %2412 = vmatprep.subr.bf16.mxu0 0
        %2413 = vmatpush1.bf16.msra.mxu0 0
        %2414 = vmatprep.subr.bf16.mxu0 0
        %2415 = vmatpush1.bf16.msra.mxu0 0
        %2416 = vmatprep.subr.bf16.mxu0 0
        %2417 = vmatpush1.bf16.msra.mxu0 0
        %2418 = vmatprep.mubr.bf16.mxu0 0
        %2419 = vmatmul.mubr.bf16.gmra.mrb[0].mxu0 %v2384
        %v2420 = vpop.f32.mrb[0].mxu0
        %v2421 = vadd.f32 %v2369, %v2420
        %v2422 = vpop.f32.mrb[0].mxu0
        %v2423 = vpop.f32.mrb[0].mxu0
        %v2424 = vadd.f32 %v2369, %v2423
        %v2425 = vpop.f32.mrb[0].mxu0
        %2426 = vdwg.mxu0
        %v2427 = vadd.f32 %v1377, %v2421
        %v2428 = vadd.f32 %v1378, %v2424
        %v2429 = vld [vmem:[%s1188] sm:$0x1]
        %v2430 = vld [vmem:[%s1196] sm:$0x1]
        %v2431 = vsel %vm1412, %v2427, 0.0
        %2432 = vadd.xlane.f32.xlu0 %v2431
        %v2433 = vpop.xlane.xlu0 %2432
        %v2434 = vsel %vm1412, %v2428, 0.0
        %2435 = vadd.xlane.f32.xlu0 %v2434
        %v2436 = vpop.xlane.xlu0 %2435
        %v2437 = vrcp.pop 32.0
        %v2438 = vmul.f32 %v2433, %v2437
        %v2439 = vmul.f32 %v2436, %v2437
        %v2440 = vsub.f32 %v2427, %v2438
        %v2441 = vsub.f32 %v2428, %v2439
        %v2442 = vmul.f32 %v2440, %v2440
        %v2443 = vmul.f32 %v2441, %v2441
        %v2444 = vsel %vm1412, %v2442, 0.0
        %2445 = vadd.xlane.f32.xlu0 %v2444
        %v2446 = vpop.xlane.xlu0 %2445
        %v2447 = vsel %vm1412, %v2443, 0.0
        %2448 = vadd.xlane.f32.xlu0 %v2447
        %v2449 = vpop.xlane.xlu0 %2448
        %v2450 = vmul.f32 %v2446, %v2437
        %v2451 = vmul.f32 %v2449, %v2437
        %v2452 = vadd.f32 %v2450, 1e-05
        %v2453 = vadd.f32 %v2451, 1e-05
        %v2454 = vrsqrt.pop %v2452
        %v2455 = vrsqrt.pop %v2453
        %v2456 = vmul.f32 %v2440, %v2454
        %v2457 = vmul.f32 %v2441, %v2455
        %v2459 = vlaneseq
        %v2460 = vshrl.u32 %v2459, 7
        %v2461 = vsub.s32 0, %v2460
        %v2462 = vrot.slane %v2429, %v2461
        %v2464 = vmul.f32 %v2456, %v2462
        %v2465 = vmul.f32 %v2457, %v2462
        %v2467 = vlaneseq
        %v2468 = vshrl.u32 %v2467, 7
        %v2469 = vsub.s32 0, %v2468
        %v2470 = vrot.slane %v2430, %v2469
        %v2472 = vadd.f32 %v2464, %v2470
        %v2473 = vadd.f32 %v2465, %v2470
        %v2474 = vld [vmem:[%s1104] sm:$0xf]
        %v2475 = vld [vmem:[%s1104 + $0x4] sm:$0xf]
        %v2476 = vld [vmem:[%s1104 + $0x8] sm:$0xf]
        %v2477 = vld [vmem:[%s1104 + $0xc] sm:$0xf]
        %v2478 = vld [vmem:[%s1112] sm:$0x1]
        %v2479 = vld [vmem:[%s1121] sm:$0xf]
        %v2480 = vld [vmem:[%s1121 + $0x4] sm:$0xf]
        %v2481 = vld [vmem:[%s1121 + $0x8] sm:$0xf]
        %v2482 = vld [vmem:[%s1121 + $0xc] sm:$0xf]
        %v2483 = vld [vmem:[%s1129] sm:$0x1]
        %v2484 = vld [vmem:[%s1138] sm:$0xf]
        %v2485 = vld [vmem:[%s1138 + $0x4] sm:$0xf]
        %v2486 = vld [vmem:[%s1138 + $0x8] sm:$0xf]
        %v2487 = vld [vmem:[%s1138 + $0xc] sm:$0xf]
        %v2488 = vld [vmem:[%s1146] sm:$0x1]
        %v2489 = vpack.c.bf16 %v2473, %v2472
        %v2491 = vlaneseq
        %v2492 = vshrl.u32 %v2491, 7
        %v2493 = vsub.s32 0, %v2492
        %v2494 = vrot.slane %v2478, %v2493
        %v2500 = vunpack.c.l.b16 %v2474
        %v2501 = vunpack.c.l.b16 %v2475
        %v2502 = vunpack.c.l.b16 %v2476
        %v2503 = vunpack.c.l.b16 %v2477
        %v2504 = vpack.c.b16 %v2501, %v2500
        %v2505 = vpack.c.b16 %v2503, %v2502
        %v2509 = vsel %vm1412, %v2489, 0
        %2511 = vmatprep.subr.bf16.mxu0 0
        %2512 = vmatpush1.bf16.msra.mxu0 %v2504
        %2513 = vmatprep.subr.bf16.mxu0 0
        %2514 = vmatpush1.bf16.msra.mxu0 %v2505
        %2515 = vmatprep.subr.bf16.mxu0 0
        %2516 = vmatpush1.bf16.msra.mxu0 0
        %2517 = vmatprep.subr.bf16.mxu0 0
        %2518 = vmatpush1.bf16.msra.mxu0 0
        %2519 = vmatprep.subr.bf16.mxu0 0
        %2520 = vmatpush1.bf16.msra.mxu0 0
        %2521 = vmatprep.subr.bf16.mxu0 0
        %2522 = vmatpush1.bf16.msra.mxu0 0
        %2523 = vmatprep.subr.bf16.mxu0 0
        %2524 = vmatpush1.bf16.msra.mxu0 0
        %2525 = vmatprep.subr.bf16.mxu0 0
        %2526 = vmatpush1.bf16.msra.mxu0 0
        %2527 = vmatprep.subr.bf16.mxu0 0
        %2528 = vmatpush1.bf16.msra.mxu0 0
        %2529 = vmatprep.subr.bf16.mxu0 0
        %2530 = vmatpush1.bf16.msra.mxu0 0
        %2531 = vmatprep.subr.bf16.mxu0 0
        %2532 = vmatpush1.bf16.msra.mxu0 0
        %2533 = vmatprep.subr.bf16.mxu0 0
        %2534 = vmatpush1.bf16.msra.mxu0 0
        %2535 = vmatprep.subr.bf16.mxu0 0
        %2536 = vmatpush1.bf16.msra.mxu0 0
        %2537 = vmatprep.subr.bf16.mxu0 0
        %2538 = vmatpush1.bf16.msra.mxu0 0
        %2539 = vmatprep.subr.bf16.mxu0 0
        %2540 = vmatpush1.bf16.msra.mxu0 0
        %2541 = vmatprep.subr.bf16.mxu0 0
        %2542 = vmatpush1.bf16.msra.mxu0 0
        %2543 = vmatprep.mubr.bf16.mxu0 0
        %2544 = vmatmul.mubr.bf16.gmra.mrb[0].mxu0 %v2509
        %v2545 = vpop.f32.mrb[0].mxu0
        %v2546 = vadd.f32 %v2494, %v2545
        %v2547 = vpop.f32.mrb[0].mxu0
        %v2548 = vpop.f32.mrb[0].mxu0
        %v2549 = vadd.f32 %v2494, %v2548
        %v2550 = vpop.f32.mrb[0].mxu0
        %2551 = vdwg.mxu0
        %v2552 = vpack.c.bf16 %v2549, %v2546
        %v2554 = vunpack.c.l.b16 %v2552
        %v2555 = vunpack.c.h.b16 %v2552
        %v2556 = vpack.c.b16 %v2554, %v2554
        %v2557 = vpack.c.b16 %v2555, %v2555
        %v2559 = vlaneseq
        %v2560 = vshrl.u32 %v2559, 7
        %v2561 = vsub.s32 0, %v2560
        %v2562 = vrot.slane %v2483, %v2561
        %v2568 = vunpack.c.l.b16 %v1379
        %v2569 = vunpack.c.l.b16 %v1380
        %v2570 = vunpack.c.l.b16 %v1381
        %v2571 = vunpack.c.l.b16 %v1382
        %v2572 = vpack.c.b16 %v2569, %v2568
        %v2573 = vpack.c.b16 %v2571, %v2570
        %v2578 = vunpack.c.l.b16 %v2479
        %v2579 = vunpack.c.l.b16 %v2480
        %v2580 = vunpack.c.l.b16 %v2481
        %v2581 = vunpack.c.l.b16 %v2482
        %v2582 = vpack.c.b16 %v2579, %v2578
        %v2583 = vpack.c.b16 %v2581, %v2580
        %v2587 = vsel %vm1412, %v2572, 0
        %v2590 = vsel %vm1412, %v2573, 0
        %2592 = vmatprep.subr.bf16.mxu0 0
        %2593 = vmatpush1.bf16.msra.mxu0 %v2582
        %2594 = vmatprep.subr.bf16.mxu0 0
        %2595 = vmatpush1.bf16.msra.mxu0 %v2583
        %2596 = vmatprep.subr.bf16.mxu0 0
        %2597 = vmatpush1.bf16.msra.mxu0 0
        %2598 = vmatprep.subr.bf16.mxu0 0
        %2599 = vmatpush1.bf16.msra.mxu0 0
        %2600 = vmatprep.subr.bf16.mxu0 0
        %2601 = vmatpush1.bf16.msra.mxu0 0
        %2602 = vmatprep.subr.bf16.mxu0 0
        %2603 = vmatpush1.bf16.msra.mxu0 0
        %2604 = vmatprep.subr.bf16.mxu0 0
        %2605 = vmatpush1.bf16.msra.mxu0 0
        %2606 = vmatprep.subr.bf16.mxu0 0
        %2607 = vmatpush1.bf16.msra.mxu0 0
        %2608 = vmatprep.subr.bf16.mxu0 0
        %2609 = vmatpush1.bf16.msra.mxu0 0
        %2610 = vmatprep.subr.bf16.mxu0 0
        %2611 = vmatpush1.bf16.msra.mxu0 0
        %2612 = vmatprep.subr.bf16.mxu0 0
        %2613 = vmatpush1.bf16.msra.mxu0 0
        %2614 = vmatprep.subr.bf16.mxu0 0
        %2615 = vmatpush1.bf16.msra.mxu0 0
        %2616 = vmatprep.subr.bf16.mxu0 0
        %2617 = vmatpush1.bf16.msra.mxu0 0
        %2618 = vmatprep.subr.bf16.mxu0 0
        %2619 = vmatpush1.bf16.msra.mxu0 0
        %2620 = vmatprep.subr.bf16.mxu0 0
        %2621 = vmatpush1.bf16.msra.mxu0 0
        %2622 = vmatprep.subr.bf16.mxu0 0
        %2623 = vmatpush1.bf16.msra.mxu0 0
        %2624 = vmatprep.mubr.bf16.mxu0 0
        %2625 = vmatmul.mubr.bf16.gmra.mrb[0].mxu0 %v2587
        %v2626 = vpop.f32.mrb[0].mxu0
        %v2627 = vadd.f32 %v2562, %v2626
        %v2628 = vpop.f32.mrb[0].mxu0
        %v2629 = vpop.f32.mrb[0].mxu0
        %v2630 = vadd.f32 %v2562, %v2629
        %v2631 = vpop.f32.mrb[0].mxu0
        %2632 = vmatprep.mubr.bf16.mxu0 0
        %2633 = vmatmul.mubr.bf16.gmra.mrb[0].mxu0 %v2590
        %v2634 = vpop.f32.mrb[0].mxu0
        %v2635 = vadd.f32 %v2562, %v2634
        %v2636 = vpop.f32.mrb[0].mxu0
        %v2637 = vpop.f32.mrb[0].mxu0
        %v2638 = vadd.f32 %v2562, %v2637
        %v2639 = vpop.f32.mrb[0].mxu0
        %2640 = vdwg.mxu0
        %v2641 = vpack.c.bf16 %v2630, %v2627
        %v2642 = vpack.c.bf16 %v2638, %v2635
        %v2644 = vsel %vm1465, %v2556, 0
        %v2647 = vsel %vm1465, %v2641, 0
        %2649 = vmatprep.subr.bf16.mxu0 0
        %2650 = vmatpush1.bf16.xpose.msra.mxu0 %v2647
        %2651 = vmatprep.subr.bf16.mxu0 0
        %2652 = vmatpush1.bf16.xpose.msra.mxu0 0
        %2653 = vmatprep.subr.bf16.mxu0 0
        %2654 = vmatpush1.bf16.xpose.msra.mxu0 0
        %2655 = vmatprep.subr.bf16.mxu0 0
        %2656 = vmatpush1.bf16.xpose.msra.mxu0 0
        %2657 = vmatprep.subr.bf16.mxu0 0
        %2658 = vmatpush1.bf16.xpose.msra.mxu0 0
        %2659 = vmatprep.subr.bf16.mxu0 0
        %2660 = vmatpush1.bf16.xpose.msra.mxu0 0
        %2661 = vmatprep.subr.bf16.mxu0 0
        %2662 = vmatpush1.bf16.xpose.msra.mxu0 0
        %2663 = vmatprep.subr.bf16.mxu0 0
        %2664 = vmatpush1.bf16.xpose.msra.mxu0 0
        %2665 = vmatprep.subr.bf16.mxu0 0
        %2666 = vmatpush1.bf16.xpose.msra.mxu0 0
        %2667 = vmatprep.subr.bf16.mxu0 0
        %2668 = vmatpush1.bf16.xpose.msra.mxu0 0
        %2669 = vmatprep.subr.bf16.mxu0 0
        %2670 = vmatpush1.bf16.xpose.msra.mxu0 0
        %2671 = vmatprep.subr.bf16.mxu0 0
        %2672 = vmatpush1.bf16.xpose.msra.mxu0 0
        %2673 = vmatprep.subr.bf16.mxu0 0
        %2674 = vmatpush1.bf16.xpose.msra.mxu0 0
        %2675 = vmatprep.subr.bf16.mxu0 0
        %2676 = vmatpush1.bf16.xpose.msra.mxu0 0
        %2677 = vmatprep.subr.bf16.mxu0 0
        %2678 = vmatpush1.bf16.xpose.msra.mxu0 0
        %2679 = vmatprep.subr.bf16.mxu0 0
        %2680 = vmatpush1.bf16.xpose.msra.mxu0 0
        %2681 = vmatprep.mubr.bf16.mxu0 0
        %2682 = vmatmul.mubr.bf16.gmra.mrb[0].mxu0 %v2644
        %v2683 = vpop.f32.mrb[0].mxu0
        %v2684 = vadd.f32 0.0, %v2683
        %v2685 = vpop.f32.mrb[0].mxu0
        %v2686 = vpop.f32.mrb[0].mxu0
        %v2687 = vpop.f32.mrb[0].mxu0
        %2688 = vdwg.mxu0
        %v2690 = vsel %vm1465, %v2557, 0
        %v2693 = vsel %vm1465, %v2642, 0
        %2695 = vmatprep.subr.bf16.mxu0 0
        %2696 = vmatpush1.bf16.xpose.msra.mxu0 %v2693
        %2697 = vmatprep.subr.bf16.mxu0 0
        %2698 = vmatpush1.bf16.xpose.msra.mxu0 0
        %2699 = vmatprep.subr.bf16.mxu0 0
        %2700 = vmatpush1.bf16.xpose.msra.mxu0 0
        %2701 = vmatprep.subr.bf16.mxu0 0
        %2702 = vmatpush1.bf16.xpose.msra.mxu0 0
        %2703 = vmatprep.subr.bf16.mxu0 0
        %2704 = vmatpush1.bf16.xpose.msra.mxu0 0
        %2705 = vmatprep.subr.bf16.mxu0 0
        %2706 = vmatpush1.bf16.xpose.msra.mxu0 0
        %2707 = vmatprep.subr.bf16.mxu0 0
        %2708 = vmatpush1.bf16.xpose.msra.mxu0 0
        %2709 = vmatprep.subr.bf16.mxu0 0
        %2710 = vmatpush1.bf16.xpose.msra.mxu0 0
        %2711 = vmatprep.subr.bf16.mxu0 0
        %2712 = vmatpush1.bf16.xpose.msra.mxu0 0
        %2713 = vmatprep.subr.bf16.mxu0 0
        %2714 = vmatpush1.bf16.xpose.msra.mxu0 0
        %2715 = vmatprep.subr.bf16.mxu0 0
        %2716 = vmatpush1.bf16.xpose.msra.mxu0 0
        %2717 = vmatprep.subr.bf16.mxu0 0
        %2718 = vmatpush1.bf16.xpose.msra.mxu0 0
        %2719 = vmatprep.subr.bf16.mxu0 0
        %2720 = vmatpush1.bf16.xpose.msra.mxu0 0
        %2721 = vmatprep.subr.bf16.mxu0 0
        %2722 = vmatpush1.bf16.xpose.msra.mxu0 0
        %2723 = vmatprep.subr.bf16.mxu0 0
        %2724 = vmatpush1.bf16.xpose.msra.mxu0 0
        %2725 = vmatprep.subr.bf16.mxu0 0
        %2726 = vmatpush1.bf16.xpose.msra.mxu0 0
        %2727 = vmatprep.mubr.bf16.mxu0 0
        %2728 = vmatmul.mubr.bf16.gmra.mrb[0].mxu0 %v2690
        %v2729 = vpop.f32.mrb[0].mxu0
        %v2730 = vadd.f32 0.0, %v2729
        %v2731 = vpop.f32.mrb[0].mxu0
        %v2732 = vpop.f32.mrb[0].mxu0
        %v2733 = vpop.f32.mrb[0].mxu0
        %2734 = vdwg.mxu0
        %vm2735 = vcmask 130048
        %v2736 = vsel %vm2735, %v2684, -inf
        %2737 = vmax.xlane.f32.xlu0 %v2736
        %v2738 = vpop.xlane.xlu0 %2737
        %v2739 = vsel %vm2735, %v2730, -inf
        %2740 = vmax.xlane.f32.xlu0 %v2739
        %v2741 = vpop.xlane.xlu0 %2740
        %v2742 = vsub.f32 %v2684, %v2738
        %v2743 = vsub.f32 %v2730, %v2741
        %v2744 = vmul.f32 %v2742, 1.442695
        %v2745 = vpow.pop %v2744
        %v2746 = vmul.f32 %v2743, 1.442695
        %v2747 = vpow.pop %v2746
        %v2748 = vsel %vm2735, %v2745, 0.0
        %2749 = vadd.xlane.f32.xlu0 %v2748
        %v2750 = vpop.xlane.xlu0 %2749
        %v2751 = vsel %vm2735, %v2747, 0.0
        %2752 = vadd.xlane.f32.xlu0 %v2751
        %v2753 = vpop.xlane.xlu0 %2752
        %v2754 = vrcp.pop %v2750
        %v2755 = vrcp.pop %v2753
        %v2756 = vmul.f32 %v2745, %v2754
        %v2757 = vmul.f32 %v2747, %v2755
        %v2758 = vpack.c.bf16 %v2756, %v2756
        %v2759 = vpack.c.bf16 %v2757, %v2757
        %2761 = vrot.lane.b32.xlu0 %v2641, 96
        %v2762 = vpop.permute.xlu0 %2761
        %v2765 = vsel %vm2735, %v2758, 0
        %2767 = vmatprep.subr.bf16.mxu0 0
        %2768 = vmatpush1.bf16.msra.mxu0 %v2762
        %2769 = vmatprep.subr.bf16.mxu0 0
        %2770 = vmatpush1.bf16.msra.mxu0 0
        %2771 = vmatprep.subr.bf16.mxu0 0
        %2772 = vmatpush1.bf16.msra.mxu0 0
        %2773 = vmatprep.subr.bf16.mxu0 0
        %2774 = vmatpush1.bf16.msra.mxu0 0
        %2775 = vmatprep.subr.bf16.mxu0 0
        %2776 = vmatpush1.bf16.msra.mxu0 0
        %2777 = vmatprep.subr.bf16.mxu0 0
        %2778 = vmatpush1.bf16.msra.mxu0 0
        %2779 = vmatprep.subr.bf16.mxu0 0
        %2780 = vmatpush1.bf16.msra.mxu0 0
        %2781 = vmatprep.subr.bf16.mxu0 0
        %2782 = vmatpush1.bf16.msra.mxu0 0
        %2783 = vmatprep.subr.bf16.mxu0 0
        %2784 = vmatpush1.bf16.msra.mxu0 0
        %2785 = vmatprep.subr.bf16.mxu0 0
        %2786 = vmatpush1.bf16.msra.mxu0 0
        %2787 = vmatprep.subr.bf16.mxu0 0
        %2788 = vmatpush1.bf16.msra.mxu0 0
        %2789 = vmatprep.subr.bf16.mxu0 0
        %2790 = vmatpush1.bf16.msra.mxu0 0
        %2791 = vmatprep.subr.bf16.mxu0 0
        %2792 = vmatpush1.bf16.msra.mxu0 0
        %2793 = vmatprep.subr.bf16.mxu0 0
        %2794 = vmatpush1.bf16.msra.mxu0 0
        %2795 = vmatprep.subr.bf16.mxu0 0
        %2796 = vmatpush1.bf16.msra.mxu0 0
        %2797 = vmatprep.subr.bf16.mxu0 0
        %2798 = vmatpush1.bf16.msra.mxu0 0
        %2799 = vmatprep.mubr.bf16.mxu0 0
        %2800 = vmatmul.mubr.bf16.gmra.mrb[0].mxu0 %v2765
        %v2801 = vpop.f32.mrb[0].mxu0
        %v2802 = vadd.f32 0.0, %v2801
        %v2803 = vpop.f32.mrb[0].mxu0
        %v2804 = vpop.f32.mrb[0].mxu0
        %v2805 = vpop.f32.mrb[0].mxu0
        %2806 = vdwg.mxu0
        %2808 = vrot.lane.b32.xlu0 %v2642, 96
        %v2809 = vpop.permute.xlu0 %2808
        %v2812 = vsel %vm2735, %v2759, 0
        %2814 = vmatprep.subr.bf16.mxu0 0
        %2815 = vmatpush1.bf16.msra.mxu0 %v2809
        %2816 = vmatprep.subr.bf16.mxu0 0
        %2817 = vmatpush1.bf16.msra.mxu0 0
        %2818 = vmatprep.subr.bf16.mxu0 0
        %2819 = vmatpush1.bf16.msra.mxu0 0
        %2820 = vmatprep.subr.bf16.mxu0 0
        %2821 = vmatpush1.bf16.msra.mxu0 0
        %2822 = vmatprep.subr.bf16.mxu0 0
        %2823 = vmatpush1.bf16.msra.mxu0 0
        %2824 = vmatprep.subr.bf16.mxu0 0
        %2825 = vmatpush1.bf16.msra.mxu0 0
        %2826 = vmatprep.subr.bf16.mxu0 0
        %2827 = vmatpush1.bf16.msra.mxu0 0
        %2828 = vmatprep.subr.bf16.mxu0 0
        %2829 = vmatpush1.bf16.msra.mxu0 0
        %2830 = vmatprep.subr.bf16.mxu0 0
        %2831 = vmatpush1.bf16.msra.mxu0 0
        %2832 = vmatprep.subr.bf16.mxu0 0
        %2833 = vmatpush1.bf16.msra.mxu0 0
        %2834 = vmatprep.subr.bf16.mxu0 0
        %2835 = vmatpush1.bf16.msra.mxu0 0
        %2836 = vmatprep.subr.bf16.mxu0 0
        %2837 = vmatpush1.bf16.msra.mxu0 0
        %2838 = vmatprep.subr.bf16.mxu0 0
        %2839 = vmatpush1.bf16.msra.mxu0 0
        %2840 = vmatprep.subr.bf16.mxu0 0
        %2841 = vmatpush1.bf16.msra.mxu0 0
        %2842 = vmatprep.subr.bf16.mxu0 0
        %2843 = vmatpush1.bf16.msra.mxu0 0
        %2844 = vmatprep.subr.bf16.mxu0 0
        %2845 = vmatpush1.bf16.msra.mxu0 0
        %2846 = vmatprep.mubr.bf16.mxu0 0
        %2847 = vmatmul.mubr.bf16.gmra.mrb[0].mxu0 %v2812
        %v2848 = vpop.f32.mrb[0].mxu0
        %v2849 = vadd.f32 0.0, %v2848
        %v2850 = vpop.f32.mrb[0].mxu0
        %v2851 = vpop.f32.mrb[0].mxu0
        %v2852 = vpop.f32.mrb[0].mxu0
        %2853 = vdwg.mxu0
        %v2854 = vpack.c.bf16 %v2849, %v2802
        %2855 = vst.msk [vmem:[#allocation2] sm:$0xff] %vm1465, %v2854
        %2856 = vrot.lane.b32.xlu0 %v2556, 120
        %v2857 = vpop.permute.xlu0 %2856
        %2858 = vrot.lane.b32.xlu0 %v2641, 120
        %v2859 = vpop.permute.xlu0 %2858
        %v2861 = vsel %vm1465, %v2857, 0
        %v2864 = vsel %vm1465, %v2859, 0
        %2866 = vmatprep.subr.bf16.mxu0 0
        %2867 = vmatpush1.bf16.xpose.msra.mxu0 %v2864
        %2868 = vmatprep.subr.bf16.mxu0 0
        %2869 = vmatpush1.bf16.xpose.msra.mxu0 0
        %2870 = vmatprep.subr.bf16.mxu0 0
        %2871 = vmatpush1.bf16.xpose.msra.mxu0 0
        %2872 = vmatprep.subr.bf16.mxu0 0
        %2873 = vmatpush1.bf16.xpose.msra.mxu0 0
        %2874 = vmatprep.subr.bf16.mxu0 0
        %2875 = vmatpush1.bf16.xpose.msra.mxu0 0
        %2876 = vmatprep.subr.bf16.mxu0 0
        %2877 = vmatpush1.bf16.xpose.msra.mxu0 0
        %2878 = vmatprep.subr.bf16.mxu0 0
        %2879 = vmatpush1.bf16.xpose.msra.mxu0 0
        %2880 = vmatprep.subr.bf16.mxu0 0
        %2881 = vmatpush1.bf16.xpose.msra.mxu0 0
        %2882 = vmatprep.subr.bf16.mxu0 0
        %2883 = vmatpush1.bf16.xpose.msra.mxu0 0
        %2884 = vmatprep.subr.bf16.mxu0 0
        %2885 = vmatpush1.bf16.xpose.msra.mxu0 0
        %2886 = vmatprep.subr.bf16.mxu0 0
        %2887 = vmatpush1.bf16.xpose.msra.mxu0 0
        %2888 = vmatprep.subr.bf16.mxu0 0
        %2889 = vmatpush1.bf16.xpose.msra.mxu0 0
        %2890 = vmatprep.subr.bf16.mxu0 0
        %2891 = vmatpush1.bf16.xpose.msra.mxu0 0
        %2892 = vmatprep.subr.bf16.mxu0 0
        %2893 = vmatpush1.bf16.xpose.msra.mxu0 0
        %2894 = vmatprep.subr.bf16.mxu0 0
        %2895 = vmatpush1.bf16.xpose.msra.mxu0 0
        %2896 = vmatprep.subr.bf16.mxu0 0
        %2897 = vmatpush1.bf16.xpose.msra.mxu0 0
        %2898 = vmatprep.mubr.bf16.mxu0 0
        %2899 = vmatmul.mubr.bf16.gmra.mrb[0].mxu0 %v2861
        %v2900 = vpop.f32.mrb[0].mxu0
        %v2901 = vadd.f32 0.0, %v2900
        %v2902 = vpop.f32.mrb[0].mxu0
        %v2903 = vpop.f32.mrb[0].mxu0
        %v2904 = vpop.f32.mrb[0].mxu0
        %2905 = vdwg.mxu0
        %2906 = vrot.lane.b32.xlu0 %v2557, 120
        %v2907 = vpop.permute.xlu0 %2906
        %2908 = vrot.lane.b32.xlu0 %v2642, 120
        %v2909 = vpop.permute.xlu0 %2908
        %v2911 = vsel %vm1465, %v2907, 0
        %v2914 = vsel %vm1465, %v2909, 0
        %2916 = vmatprep.subr.bf16.mxu0 0
        %2917 = vmatpush1.bf16.xpose.msra.mxu0 %v2914
        %2918 = vmatprep.subr.bf16.mxu0 0
        %2919 = vmatpush1.bf16.xpose.msra.mxu0 0
        %2920 = vmatprep.subr.bf16.mxu0 0
        %2921 = vmatpush1.bf16.xpose.msra.mxu0 0
        %2922 = vmatprep.subr.bf16.mxu0 0
        %2923 = vmatpush1.bf16.xpose.msra.mxu0 0
        %2924 = vmatprep.subr.bf16.mxu0 0
        %2925 = vmatpush1.bf16.xpose.msra.mxu0 0
        %2926 = vmatprep.subr.bf16.mxu0 0
        %2927 = vmatpush1.bf16.xpose.msra.mxu0 0
        %2928 = vmatprep.subr.bf16.mxu0 0
        %2929 = vmatpush1.bf16.xpose.msra.mxu0 0
        %2930 = vmatprep.subr.bf16.mxu0 0
        %2931 = vmatpush1.bf16.xpose.msra.mxu0 0
        %2932 = vmatprep.subr.bf16.mxu0 0
        %2933 = vmatpush1.bf16.xpose.msra.mxu0 0
        %2934 = vmatprep.subr.bf16.mxu0 0
        %2935 = vmatpush1.bf16.xpose.msra.mxu0 0
        %2936 = vmatprep.subr.bf16.mxu0 0
        %2937 = vmatpush1.bf16.xpose.msra.mxu0 0
        %2938 = vmatprep.subr.bf16.mxu0 0
        %2939 = vmatpush1.bf16.xpose.msra.mxu0 0
        %2940 = vmatprep.subr.bf16.mxu0 0
        %2941 = vmatpush1.bf16.xpose.msra.mxu0 0
        %2942 = vmatprep.subr.bf16.mxu0 0
        %2943 = vmatpush1.bf16.xpose.msra.mxu0 0
        %2944 = vmatprep.subr.bf16.mxu0 0
        %2945 = vmatpush1.bf16.xpose.msra.mxu0 0
        %2946 = vmatprep.subr.bf16.mxu0 0
        %2947 = vmatpush1.bf16.xpose.msra.mxu0 0
        %2948 = vmatprep.mubr.bf16.mxu0 0
        %2949 = vmatmul.mubr.bf16.gmra.mrb[0].mxu0 %v2911
        %v2950 = vpop.f32.mrb[0].mxu0
        %v2951 = vadd.f32 0.0, %v2950
        %v2952 = vpop.f32.mrb[0].mxu0
        %v2953 = vpop.f32.mrb[0].mxu0
        %v2954 = vpop.f32.mrb[0].mxu0
        %2955 = vdwg.mxu0
        %v2956 = vsel %vm2735, %v2901, -inf
        %2957 = vmax.xlane.f32.xlu0 %v2956
        %v2958 = vpop.xlane.xlu0 %2957
        %v2959 = vsel %vm2735, %v2951, -inf
        %2960 = vmax.xlane.f32.xlu0 %v2959
        %v2961 = vpop.xlane.xlu0 %2960
        %v2962 = vsub.f32 %v2901, %v2958
        %v2963 = vsub.f32 %v2951, %v2961
        %v2964 = vmul.f32 %v2962, 1.442695
        %v2965 = vpow.pop %v2964
        %v2966 = vmul.f32 %v2963, 1.442695
        %v2967 = vpow.pop %v2966
        %v2968 = vsel %vm2735, %v2965, 0.0
        %2969 = vadd.xlane.f32.xlu0 %v2968
        %v2970 = vpop.xlane.xlu0 %2969
        %v2971 = vsel %vm2735, %v2967, 0.0
        %2972 = vadd.xlane.f32.xlu0 %v2971
        %v2973 = vpop.xlane.xlu0 %2972
        %v2974 = vrcp.pop %v2970
        %v2975 = vrcp.pop %v2973
        %v2976 = vmul.f32 %v2965, %v2974
        %v2977 = vmul.f32 %v2967, %v2975
        %v2978 = vpack.c.bf16 %v2976, %v2976
        %v2979 = vpack.c.bf16 %v2977, %v2977
        %2980 = vrot.lane.b32.xlu0 %v2641, 88
        %v2981 = vpop.permute.xlu0 %2980
        %v2984 = vsel %vm2735, %v2978, 0
        %2986 = vmatprep.subr.bf16.mxu0 0
        %2987 = vmatpush1.bf16.msra.mxu0 %v2981
        %2988 = vmatprep.subr.bf16.mxu0 0
        %2989 = vmatpush1.bf16.msra.mxu0 0
        %2990 = vmatprep.subr.bf16.mxu0 0
        %2991 = vmatpush1.bf16.msra.mxu0 0
        %2992 = vmatprep.subr.bf16.mxu0 0
        %2993 = vmatpush1.bf16.msra.mxu0 0
        %2994 = vmatprep.subr.bf16.mxu0 0
        %2995 = vmatpush1.bf16.msra.mxu0 0
        %2996 = vmatprep.subr.bf16.mxu0 0
        %2997 = vmatpush1.bf16.msra.mxu0 0
        %2998 = vmatprep.subr.bf16.mxu0 0
        %2999 = vmatpush1.bf16.msra.mxu0 0
        %3000 = vmatprep.subr.bf16.mxu0 0
        %3001 = vmatpush1.bf16.msra.mxu0 0
        %3002 = vmatprep.subr.bf16.mxu0 0
        %3003 = vmatpush1.bf16.msra.mxu0 0
        %3004 = vmatprep.subr.bf16.mxu0 0
        %3005 = vmatpush1.bf16.msra.mxu0 0
        %3006 = vmatprep.subr.bf16.mxu0 0
        %3007 = vmatpush1.bf16.msra.mxu0 0
        %3008 = vmatprep.subr.bf16.mxu0 0
        %3009 = vmatpush1.bf16.msra.mxu0 0
        %3010 = vmatprep.subr.bf16.mxu0 0
        %3011 = vmatpush1.bf16.msra.mxu0 0
        %3012 = vmatprep.subr.bf16.mxu0 0
        %3013 = vmatpush1.bf16.msra.mxu0 0
        %3014 = vmatprep.subr.bf16.mxu0 0
        %3015 = vmatpush1.bf16.msra.mxu0 0
        %3016 = vmatprep.subr.bf16.mxu0 0
        %3017 = vmatpush1.bf16.msra.mxu0 0
        %3018 = vmatprep.mubr.bf16.mxu0 0
        %3019 = vmatmul.mubr.bf16.gmra.mrb[0].mxu0 %v2984
        %v3020 = vpop.f32.mrb[0].mxu0
        %v3021 = vadd.f32 0.0, %v3020
        %v3022 = vpop.f32.mrb[0].mxu0
        %v3023 = vpop.f32.mrb[0].mxu0
        %v3024 = vpop.f32.mrb[0].mxu0
        %3025 = vdwg.mxu0
        %3026 = vrot.lane.b32.xlu0 %v2642, 88
        %v3027 = vpop.permute.xlu0 %3026
        %v3030 = vsel %vm2735, %v2979, 0
        %3032 = vmatprep.subr.bf16.mxu0 0
        %3033 = vmatpush1.bf16.msra.mxu0 %v3027
        %3034 = vmatprep.subr.bf16.mxu0 0
        %3035 = vmatpush1.bf16.msra.mxu0 0
        %3036 = vmatprep.subr.bf16.mxu0 0
        %3037 = vmatpush1.bf16.msra.mxu0 0
        %3038 = vmatprep.subr.bf16.mxu0 0
        %3039 = vmatpush1.bf16.msra.mxu0 0
        %3040 = vmatprep.subr.bf16.mxu0 0
        %3041 = vmatpush1.bf16.msra.mxu0 0
        %3042 = vmatprep.subr.bf16.mxu0 0
        %3043 = vmatpush1.bf16.msra.mxu0 0
        %3044 = vmatprep.subr.bf16.mxu0 0
        %3045 = vmatpush1.bf16.msra.mxu0 0
        %3046 = vmatprep.subr.bf16.mxu0 0
        %3047 = vmatpush1.bf16.msra.mxu0 0
        %3048 = vmatprep.subr.bf16.mxu0 0
        %3049 = vmatpush1.bf16.msra.mxu0 0
        %3050 = vmatprep.subr.bf16.mxu0 0
        %3051 = vmatpush1.bf16.msra.mxu0 0
        %3052 = vmatprep.subr.bf16.mxu0 0
        %3053 = vmatpush1.bf16.msra.mxu0 0
        %3054 = vmatprep.subr.bf16.mxu0 0
        %3055 = vmatpush1.bf16.msra.mxu0 0
        %3056 = vmatprep.subr.bf16.mxu0 0
        %3057 = vmatpush1.bf16.msra.mxu0 0
        %3058 = vmatprep.subr.bf16.mxu0 0
        %3059 = vmatpush1.bf16.msra.mxu0 0
        %3060 = vmatprep.subr.bf16.mxu0 0
        %3061 = vmatpush1.bf16.msra.mxu0 0
        %3062 = vmatprep.subr.bf16.mxu0 0
        %3063 = vmatpush1.bf16.msra.mxu0 0
        %3064 = vmatprep.mubr.bf16.mxu0 0
        %3065 = vmatmul.mubr.bf16.gmra.mrb[0].mxu0 %v3030
        %v3066 = vpop.f32.mrb[0].mxu0
        %v3067 = vadd.f32 0.0, %v3066
        %v3068 = vpop.f32.mrb[0].mxu0
        %v3069 = vpop.f32.mrb[0].mxu0
        %v3070 = vpop.f32.mrb[0].mxu0
        %3071 = vdwg.mxu0
        %v3072 = vpack.c.bf16 %v3067, %v3021
        %3074 = vrot.lane.b32.xlu0 %v3072, 8
        %v3075 = vpop.permute.xlu0 %3074
        %3077 = vst.msk [vmem:[#allocation2] sm:$0xff] %vm1908, %v3075
        %3078 = vrot.lane.b32.xlu0 %v2556, 112
        %v3079 = vpop.permute.xlu0 %3078
        %3080 = vrot.lane.b32.xlu0 %v2641, 112
        %v3081 = vpop.permute.xlu0 %3080
        %v3083 = vsel %vm1465, %v3079, 0
        %v3086 = vsel %vm1465, %v3081, 0
        %3088 = vmatprep.subr.bf16.mxu0 0
        %3089 = vmatpush1.bf16.xpose.msra.mxu0 %v3086
        %3090 = vmatprep.subr.bf16.mxu0 0
        %3091 = vmatpush1.bf16.xpose.msra.mxu0 0
        %3092 = vmatprep.subr.bf16.mxu0 0
        %3093 = vmatpush1.bf16.xpose.msra.mxu0 0
        %3094 = vmatprep.subr.bf16.mxu0 0
        %3095 = vmatpush1.bf16.xpose.msra.mxu0 0
        %3096 = vmatprep.subr.bf16.mxu0 0
        %3097 = vmatpush1.bf16.xpose.msra.mxu0 0
        %3098 = vmatprep.subr.bf16.mxu0 0
        %3099 = vmatpush1.bf16.xpose.msra.mxu0 0
        %3100 = vmatprep.subr.bf16.mxu0 0
        %3101 = vmatpush1.bf16.xpose.msra.mxu0 0
        %3102 = vmatprep.subr.bf16.mxu0 0
        %3103 = vmatpush1.bf16.xpose.msra.mxu0 0
        %3104 = vmatprep.subr.bf16.mxu0 0
        %3105 = vmatpush1.bf16.xpose.msra.mxu0 0
        %3106 = vmatprep.subr.bf16.mxu0 0
        %3107 = vmatpush1.bf16.xpose.msra.mxu0 0
        %3108 = vmatprep.subr.bf16.mxu0 0
        %3109 = vmatpush1.bf16.xpose.msra.mxu0 0
        %3110 = vmatprep.subr.bf16.mxu0 0
        %3111 = vmatpush1.bf16.xpose.msra.mxu0 0
        %3112 = vmatprep.subr.bf16.mxu0 0
        %3113 = vmatpush1.bf16.xpose.msra.mxu0 0
        %3114 = vmatprep.subr.bf16.mxu0 0
        %3115 = vmatpush1.bf16.xpose.msra.mxu0 0
        %3116 = vmatprep.subr.bf16.mxu0 0
        %3117 = vmatpush1.bf16.xpose.msra.mxu0 0
        %3118 = vmatprep.subr.bf16.mxu0 0
        %3119 = vmatpush1.bf16.xpose.msra.mxu0 0
        %3120 = vmatprep.mubr.bf16.mxu0 0
        %3121 = vmatmul.mubr.bf16.gmra.mrb[0].mxu0 %v3083
        %v3122 = vpop.f32.mrb[0].mxu0
        %v3123 = vadd.f32 0.0, %v3122
        %v3124 = vpop.f32.mrb[0].mxu0
        %v3125 = vpop.f32.mrb[0].mxu0
        %v3126 = vpop.f32.mrb[0].mxu0
        %3127 = vdwg.mxu0
        %3128 = vrot.lane.b32.xlu0 %v2557, 112
        %v3129 = vpop.permute.xlu0 %3128
        %3130 = vrot.lane.b32.xlu0 %v2642, 112
        %v3131 = vpop.permute.xlu0 %3130
        %v3133 = vsel %vm1465, %v3129, 0
        %v3136 = vsel %vm1465, %v3131, 0
        %3138 = vmatprep.subr.bf16.mxu0 0
        %3139 = vmatpush1.bf16.xpose.msra.mxu0 %v3136
        %3140 = vmatprep.subr.bf16.mxu0 0
        %3141 = vmatpush1.bf16.xpose.msra.mxu0 0
        %3142 = vmatprep.subr.bf16.mxu0 0
        %3143 = vmatpush1.bf16.xpose.msra.mxu0 0
        %3144 = vmatprep.subr.bf16.mxu0 0
        %3145 = vmatpush1.bf16.xpose.msra.mxu0 0
        %3146 = vmatprep.subr.bf16.mxu0 0
        %3147 = vmatpush1.bf16.xpose.msra.mxu0 0
        %3148 = vmatprep.subr.bf16.mxu0 0
        %3149 = vmatpush1.bf16.xpose.msra.mxu0 0
        %3150 = vmatprep.subr.bf16.mxu0 0
        %3151 = vmatpush1.bf16.xpose.msra.mxu0 0
        %3152 = vmatprep.subr.bf16.mxu0 0
        %3153 = vmatpush1.bf16.xpose.msra.mxu0 0
        %3154 = vmatprep.subr.bf16.mxu0 0
        %3155 = vmatpush1.bf16.xpose.msra.mxu0 0
        %3156 = vmatprep.subr.bf16.mxu0 0
        %3157 = vmatpush1.bf16.xpose.msra.mxu0 0
        %3158 = vmatprep.subr.bf16.mxu0 0
        %3159 = vmatpush1.bf16.xpose.msra.mxu0 0
        %3160 = vmatprep.subr.bf16.mxu0 0
        %3161 = vmatpush1.bf16.xpose.msra.mxu0 0
        %3162 = vmatprep.subr.bf16.mxu0 0
        %3163 = vmatpush1.bf16.xpose.msra.mxu0 0
        %3164 = vmatprep.subr.bf16.mxu0 0
        %3165 = vmatpush1.bf16.xpose.msra.mxu0 0
        %3166 = vmatprep.subr.bf16.mxu0 0
        %3167 = vmatpush1.bf16.xpose.msra.mxu0 0
        %3168 = vmatprep.subr.bf16.mxu0 0
        %3169 = vmatpush1.bf16.xpose.msra.mxu0 0
        %3170 = vmatprep.mubr.bf16.mxu0 0
        %3171 = vmatmul.mubr.bf16.gmra.mrb[0].mxu0 %v3133
        %v3172 = vpop.f32.mrb[0].mxu0
        %v3173 = vadd.f32 0.0, %v3172
        %v3174 = vpop.f32.mrb[0].mxu0
        %v3175 = vpop.f32.mrb[0].mxu0
        %v3176 = vpop.f32.mrb[0].mxu0
        %3177 = vdwg.mxu0
        %v3178 = vsel %vm2735, %v3123, -inf
        %3179 = vmax.xlane.f32.xlu0 %v3178
        %v3180 = vpop.xlane.xlu0 %3179
        %v3181 = vsel %vm2735, %v3173, -inf
        %3182 = vmax.xlane.f32.xlu0 %v3181
        %v3183 = vpop.xlane.xlu0 %3182
        %v3184 = vsub.f32 %v3123, %v3180
        %v3185 = vsub.f32 %v3173, %v3183
        %v3186 = vmul.f32 %v3184, 1.442695
        %v3187 = vpow.pop %v3186
        %v3188 = vmul.f32 %v3185, 1.442695
        %v3189 = vpow.pop %v3188
        %v3190 = vsel %vm2735, %v3187, 0.0
        %3191 = vadd.xlane.f32.xlu0 %v3190
        %v3192 = vpop.xlane.xlu0 %3191
        %v3193 = vsel %vm2735, %v3189, 0.0
        %3194 = vadd.xlane.f32.xlu0 %v3193
        %v3195 = vpop.xlane.xlu0 %3194
        %v3196 = vrcp.pop %v3192
        %v3197 = vrcp.pop %v3195
        %v3198 = vmul.f32 %v3187, %v3196
        %v3199 = vmul.f32 %v3189, %v3197
        %v3200 = vpack.c.bf16 %v3198, %v3198
        %v3201 = vpack.c.bf16 %v3199, %v3199
        %3202 = vrot.lane.b32.xlu0 %v2641, 80
        %v3203 = vpop.permute.xlu0 %3202
        %v3206 = vsel %vm2735, %v3200, 0
        %3208 = vmatprep.subr.bf16.mxu0 0
        %3209 = vmatpush1.bf16.msra.mxu0 %v3203
        %3210 = vmatprep.subr.bf16.mxu0 0
        %3211 = vmatpush1.bf16.msra.mxu0 0
        %3212 = vmatprep.subr.bf16.mxu0 0
        %3213 = vmatpush1.bf16.msra.mxu0 0
        %3214 = vmatprep.subr.bf16.mxu0 0
        %3215 = vmatpush1.bf16.msra.mxu0 0
        %3216 = vmatprep.subr.bf16.mxu0 0
        %3217 = vmatpush1.bf16.msra.mxu0 0
        %3218 = vmatprep.subr.bf16.mxu0 0
        %3219 = vmatpush1.bf16.msra.mxu0 0
        %3220 = vmatprep.subr.bf16.mxu0 0
        %3221 = vmatpush1.bf16.msra.mxu0 0
        %3222 = vmatprep.subr.bf16.mxu0 0
        %3223 = vmatpush1.bf16.msra.mxu0 0
        %3224 = vmatprep.subr.bf16.mxu0 0
        %3225 = vmatpush1.bf16.msra.mxu0 0
        %3226 = vmatprep.subr.bf16.mxu0 0
        %3227 = vmatpush1.bf16.msra.mxu0 0
        %3228 = vmatprep.subr.bf16.mxu0 0
        %3229 = vmatpush1.bf16.msra.mxu0 0
        %3230 = vmatprep.subr.bf16.mxu0 0
        %3231 = vmatpush1.bf16.msra.mxu0 0
        %3232 = vmatprep.subr.bf16.mxu0 0
        %3233 = vmatpush1.bf16.msra.mxu0 0
        %3234 = vmatprep.subr.bf16.mxu0 0
        %3235 = vmatpush1.bf16.msra.mxu0 0
        %3236 = vmatprep.subr.bf16.mxu0 0
        %3237 = vmatpush1.bf16.msra.mxu0 0
        %3238 = vmatprep.subr.bf16.mxu0 0
        %3239 = vmatpush1.bf16.msra.mxu0 0
        %3240 = vmatprep.mubr.bf16.mxu0 0
        %3241 = vmatmul.mubr.bf16.gmra.mrb[0].mxu0 %v3206
        %v3242 = vpop.f32.mrb[0].mxu0
        %v3243 = vadd.f32 0.0, %v3242
        %v3244 = vpop.f32.mrb[0].mxu0
        %v3245 = vpop.f32.mrb[0].mxu0
        %v3246 = vpop.f32.mrb[0].mxu0
        %3247 = vdwg.mxu0
        %3248 = vrot.lane.b32.xlu0 %v2642, 80
        %v3249 = vpop.permute.xlu0 %3248
        %v3252 = vsel %vm2735, %v3201, 0
        %3254 = vmatprep.subr.bf16.mxu0 0
        %3255 = vmatpush1.bf16.msra.mxu0 %v3249
        %3256 = vmatprep.subr.bf16.mxu0 0
        %3257 = vmatpush1.bf16.msra.mxu0 0
        %3258 = vmatprep.subr.bf16.mxu0 0
        %3259 = vmatpush1.bf16.msra.mxu0 0
        %3260 = vmatprep.subr.bf16.mxu0 0
        %3261 = vmatpush1.bf16.msra.mxu0 0
        %3262 = vmatprep.subr.bf16.mxu0 0
        %3263 = vmatpush1.bf16.msra.mxu0 0
        %3264 = vmatprep.subr.bf16.mxu0 0
        %3265 = vmatpush1.bf16.msra.mxu0 0
        %3266 = vmatprep.subr.bf16.mxu0 0
        %3267 = vmatpush1.bf16.msra.mxu0 0
        %3268 = vmatprep.subr.bf16.mxu0 0
        %3269 = vmatpush1.bf16.msra.mxu0 0
        %3270 = vmatprep.subr.bf16.mxu0 0
        %3271 = vmatpush1.bf16.msra.mxu0 0
        %3272 = vmatprep.subr.bf16.mxu0 0
        %3273 = vmatpush1.bf16.msra.mxu0 0
        %3274 = vmatprep.subr.bf16.mxu0 0
        %3275 = vmatpush1.bf16.msra.mxu0 0
        %3276 = vmatprep.subr.bf16.mxu0 0
        %3277 = vmatpush1.bf16.msra.mxu0 0
        %3278 = vmatprep.subr.bf16.mxu0 0
        %3279 = vmatpush1.bf16.msra.mxu0 0
        %3280 = vmatprep.subr.bf16.mxu0 0
        %3281 = vmatpush1.bf16.msra.mxu0 0
        %3282 = vmatprep.subr.bf16.mxu0 0
        %3283 = vmatpush1.bf16.msra.mxu0 0
        %3284 = vmatprep.subr.bf16.mxu0 0
        %3285 = vmatpush1.bf16.msra.mxu0 0
        %3286 = vmatprep.mubr.bf16.mxu0 0
        %3287 = vmatmul.mubr.bf16.gmra.mrb[0].mxu0 %v3252
        %v3288 = vpop.f32.mrb[0].mxu0
        %v3289 = vadd.f32 0.0, %v3288
        %v3290 = vpop.f32.mrb[0].mxu0
        %v3291 = vpop.f32.mrb[0].mxu0
        %v3292 = vpop.f32.mrb[0].mxu0
        %3293 = vdwg.mxu0
        %v3294 = vpack.c.bf16 %v3289, %v3243
        %3296 = vrot.lane.b32.xlu0 %v3294, 16
        %v3297 = vpop.permute.xlu0 %3296
        %3299 = vst.msk [vmem:[#allocation2] sm:$0xff] %vm2135, %v3297
        %3300 = vrot.lane.b32.xlu0 %v2556, 104
        %v3301 = vpop.permute.xlu0 %3300
        %3302 = vrot.lane.b32.xlu0 %v2641, 104
        %v3303 = vpop.permute.xlu0 %3302
        %v3305 = vsel %vm1465, %v3301, 0
        %v3308 = vsel %vm1465, %v3303, 0
        %3310 = vmatprep.subr.bf16.mxu0 0
        %3311 = vmatpush1.bf16.xpose.msra.mxu0 %v3308
        %3312 = vmatprep.subr.bf16.mxu0 0
        %3313 = vmatpush1.bf16.xpose.msra.mxu0 0
        %3314 = vmatprep.subr.bf16.mxu0 0
        %3315 = vmatpush1.bf16.xpose.msra.mxu0 0
        %3316 = vmatprep.subr.bf16.mxu0 0
        %3317 = vmatpush1.bf16.xpose.msra.mxu0 0
        %3318 = vmatprep.subr.bf16.mxu0 0
        %3319 = vmatpush1.bf16.xpose.msra.mxu0 0
        %3320 = vmatprep.subr.bf16.mxu0 0
        %3321 = vmatpush1.bf16.xpose.msra.mxu0 0
        %3322 = vmatprep.subr.bf16.mxu0 0
        %3323 = vmatpush1.bf16.xpose.msra.mxu0 0
        %3324 = vmatprep.subr.bf16.mxu0 0
        %3325 = vmatpush1.bf16.xpose.msra.mxu0 0
        %3326 = vmatprep.subr.bf16.mxu0 0
        %3327 = vmatpush1.bf16.xpose.msra.mxu0 0
        %3328 = vmatprep.subr.bf16.mxu0 0
        %3329 = vmatpush1.bf16.xpose.msra.mxu0 0
        %3330 = vmatprep.subr.bf16.mxu0 0
        %3331 = vmatpush1.bf16.xpose.msra.mxu0 0
        %3332 = vmatprep.subr.bf16.mxu0 0
        %3333 = vmatpush1.bf16.xpose.msra.mxu0 0
        %3334 = vmatprep.subr.bf16.mxu0 0
        %3335 = vmatpush1.bf16.xpose.msra.mxu0 0
        %3336 = vmatprep.subr.bf16.mxu0 0
        %3337 = vmatpush1.bf16.xpose.msra.mxu0 0
        %3338 = vmatprep.subr.bf16.mxu0 0
        %3339 = vmatpush1.bf16.xpose.msra.mxu0 0
        %3340 = vmatprep.subr.bf16.mxu0 0
        %3341 = vmatpush1.bf16.xpose.msra.mxu0 0
        %3342 = vmatprep.mubr.bf16.mxu0 0
        %3343 = vmatmul.mubr.bf16.gmra.mrb[0].mxu0 %v3305
        %v3344 = vpop.f32.mrb[0].mxu0
        %v3345 = vadd.f32 0.0, %v3344
        %v3346 = vpop.f32.mrb[0].mxu0
        %v3347 = vpop.f32.mrb[0].mxu0
        %v3348 = vpop.f32.mrb[0].mxu0
        %3349 = vdwg.mxu0
        %3350 = vrot.lane.b32.xlu0 %v2557, 104
        %v3351 = vpop.permute.xlu0 %3350
        %3352 = vrot.lane.b32.xlu0 %v2642, 104
        %v3353 = vpop.permute.xlu0 %3352
        %v3355 = vsel %vm1465, %v3351, 0
        %v3358 = vsel %vm1465, %v3353, 0
        %3360 = vmatprep.subr.bf16.mxu0 0
        %3361 = vmatpush1.bf16.xpose.msra.mxu0 %v3358
        %3362 = vmatprep.subr.bf16.mxu0 0
        %3363 = vmatpush1.bf16.xpose.msra.mxu0 0
        %3364 = vmatprep.subr.bf16.mxu0 0
        %3365 = vmatpush1.bf16.xpose.msra.mxu0 0
        %3366 = vmatprep.subr.bf16.mxu0 0
        %3367 = vmatpush1.bf16.xpose.msra.mxu0 0
        %3368 = vmatprep.subr.bf16.mxu0 0
        %3369 = vmatpush1.bf16.xpose.msra.mxu0 0
        %3370 = vmatprep.subr.bf16.mxu0 0
        %3371 = vmatpush1.bf16.xpose.msra.mxu0 0
        %3372 = vmatprep.subr.bf16.mxu0 0
        %3373 = vmatpush1.bf16.xpose.msra.mxu0 0
        %3374 = vmatprep.subr.bf16.mxu0 0
        %3375 = vmatpush1.bf16.xpose.msra.mxu0 0
        %3376 = vmatprep.subr.bf16.mxu0 0
        %3377 = vmatpush1.bf16.xpose.msra.mxu0 0
        %3378 = vmatprep.subr.bf16.mxu0 0
        %3379 = vmatpush1.bf16.xpose.msra.mxu0 0
        %3380 = vmatprep.subr.bf16.mxu0 0
        %3381 = vmatpush1.bf16.xpose.msra.mxu0 0
        %3382 = vmatprep.subr.bf16.mxu0 0
        %3383 = vmatpush1.bf16.xpose.msra.mxu0 0
        %3384 = vmatprep.subr.bf16.mxu0 0
        %3385 = vmatpush1.bf16.xpose.msra.mxu0 0
        %3386 = vmatprep.subr.bf16.mxu0 0
        %3387 = vmatpush1.bf16.xpose.msra.mxu0 0
        %3388 = vmatprep.subr.bf16.mxu0 0
        %3389 = vmatpush1.bf16.xpose.msra.mxu0 0
        %3390 = vmatprep.subr.bf16.mxu0 0
        %3391 = vmatpush1.bf16.xpose.msra.mxu0 0
        %3392 = vmatprep.mubr.bf16.mxu0 0
        %3393 = vmatmul.mubr.bf16.gmra.mrb[0].mxu0 %v3355
        %v3394 = vpop.f32.mrb[0].mxu0
        %v3395 = vadd.f32 0.0, %v3394
        %v3396 = vpop.f32.mrb[0].mxu0
        %v3397 = vpop.f32.mrb[0].mxu0
        %v3398 = vpop.f32.mrb[0].mxu0
        %3399 = vdwg.mxu0
        %v3400 = vsel %vm2735, %v3345, -inf
        %3401 = vmax.xlane.f32.xlu0 %v3400
        %v3402 = vpop.xlane.xlu0 %3401
        %v3403 = vsel %vm2735, %v3395, -inf
        %3404 = vmax.xlane.f32.xlu0 %v3403
        %v3405 = vpop.xlane.xlu0 %3404
        %v3406 = vsub.f32 %v3345, %v3402
        %v3407 = vsub.f32 %v3395, %v3405
        %v3408 = vmul.f32 %v3406, 1.442695
        %v3409 = vpow.pop %v3408
        %v3410 = vmul.f32 %v3407, 1.442695
        %v3411 = vpow.pop %v3410
        %v3412 = vsel %vm2735, %v3409, 0.0
        %3413 = vadd.xlane.f32.xlu0 %v3412
        %v3414 = vpop.xlane.xlu0 %3413
        %v3415 = vsel %vm2735, %v3411, 0.0
        %3416 = vadd.xlane.f32.xlu0 %v3415
        %v3417 = vpop.xlane.xlu0 %3416
        %v3418 = vrcp.pop %v3414
        %v3419 = vrcp.pop %v3417
        %v3420 = vmul.f32 %v3409, %v3418
        %v3421 = vmul.f32 %v3411, %v3419
        %v3422 = vpack.c.bf16 %v3420, %v3420
        %v3423 = vpack.c.bf16 %v3421, %v3421
        %3424 = vrot.lane.b32.xlu0 %v2641, 72
        %v3425 = vpop.permute.xlu0 %3424
        %v3428 = vsel %vm2735, %v3422, 0
        %3430 = vmatprep.subr.bf16.mxu0 0
        %3431 = vmatpush1.bf16.msra.mxu0 %v3425
        %3432 = vmatprep.subr.bf16.mxu0 0
        %3433 = vmatpush1.bf16.msra.mxu0 0
        %3434 = vmatprep.subr.bf16.mxu0 0
        %3435 = vmatpush1.bf16.msra.mxu0 0
        %3436 = vmatprep.subr.bf16.mxu0 0
        %3437 = vmatpush1.bf16.msra.mxu0 0
        %3438 = vmatprep.subr.bf16.mxu0 0
        %3439 = vmatpush1.bf16.msra.mxu0 0
        %3440 = vmatprep.subr.bf16.mxu0 0
        %3441 = vmatpush1.bf16.msra.mxu0 0
        %3442 = vmatprep.subr.bf16.mxu0 0
        %3443 = vmatpush1.bf16.msra.mxu0 0
        %3444 = vmatprep.subr.bf16.mxu0 0
        %3445 = vmatpush1.bf16.msra.mxu0 0
        %3446 = vmatprep.subr.bf16.mxu0 0
        %3447 = vmatpush1.bf16.msra.mxu0 0
        %3448 = vmatprep.subr.bf16.mxu0 0
        %3449 = vmatpush1.bf16.msra.mxu0 0
        %3450 = vmatprep.subr.bf16.mxu0 0
        %3451 = vmatpush1.bf16.msra.mxu0 0
        %3452 = vmatprep.subr.bf16.mxu0 0
        %3453 = vmatpush1.bf16.msra.mxu0 0
        %3454 = vmatprep.subr.bf16.mxu0 0
        %3455 = vmatpush1.bf16.msra.mxu0 0
        %3456 = vmatprep.subr.bf16.mxu0 0
        %3457 = vmatpush1.bf16.msra.mxu0 0
        %3458 = vmatprep.subr.bf16.mxu0 0
        %3459 = vmatpush1.bf16.msra.mxu0 0
        %3460 = vmatprep.subr.bf16.mxu0 0
        %3461 = vmatpush1.bf16.msra.mxu0 0
        %3462 = vmatprep.mubr.bf16.mxu0 0
        %3463 = vmatmul.mubr.bf16.gmra.mrb[0].mxu0 %v3428
        %v3464 = vpop.f32.mrb[0].mxu0
        %v3465 = vadd.f32 0.0, %v3464
        %v3466 = vpop.f32.mrb[0].mxu0
        %v3467 = vpop.f32.mrb[0].mxu0
        %v3468 = vpop.f32.mrb[0].mxu0
        %3469 = vdwg.mxu0
        %3470 = vrot.lane.b32.xlu0 %v2642, 72
        %v3471 = vpop.permute.xlu0 %3470
        %v3474 = vsel %vm2735, %v3423, 0
        %3476 = vmatprep.subr.bf16.mxu0 0
        %3477 = vmatpush1.bf16.msra.mxu0 %v3471
        %3478 = vmatprep.subr.bf16.mxu0 0
        %3479 = vmatpush1.bf16.msra.mxu0 0
        %3480 = vmatprep.subr.bf16.mxu0 0
        %3481 = vmatpush1.bf16.msra.mxu0 0
        %3482 = vmatprep.subr.bf16.mxu0 0
        %3483 = vmatpush1.bf16.msra.mxu0 0
        %3484 = vmatprep.subr.bf16.mxu0 0
        %3485 = vmatpush1.bf16.msra.mxu0 0
        %3486 = vmatprep.subr.bf16.mxu0 0
        %3487 = vmatpush1.bf16.msra.mxu0 0
        %3488 = vmatprep.subr.bf16.mxu0 0
        %3489 = vmatpush1.bf16.msra.mxu0 0
        %3490 = vmatprep.subr.bf16.mxu0 0
        %3491 = vmatpush1.bf16.msra.mxu0 0
        %3492 = vmatprep.subr.bf16.mxu0 0
        %3493 = vmatpush1.bf16.msra.mxu0 0
        %3494 = vmatprep.subr.bf16.mxu0 0
        %3495 = vmatpush1.bf16.msra.mxu0 0
        %3496 = vmatprep.subr.bf16.mxu0 0
        %3497 = vmatpush1.bf16.msra.mxu0 0
        %3498 = vmatprep.subr.bf16.mxu0 0
        %3499 = vmatpush1.bf16.msra.mxu0 0
        %3500 = vmatprep.subr.bf16.mxu0 0
        %3501 = vmatpush1.bf16.msra.mxu0 0
        %3502 = vmatprep.subr.bf16.mxu0 0
        %3503 = vmatpush1.bf16.msra.mxu0 0
        %3504 = vmatprep.subr.bf16.mxu0 0
        %3505 = vmatpush1.bf16.msra.mxu0 0
        %3506 = vmatprep.subr.bf16.mxu0 0
        %3507 = vmatpush1.bf16.msra.mxu0 0
        %3508 = vmatprep.mubr.bf16.mxu0 0
        %3509 = vmatmul.mubr.bf16.gmra.mrb[0].mxu0 %v3474
        %v3510 = vpop.f32.mrb[0].mxu0
        %v3511 = vadd.f32 0.0, %v3510
        %v3512 = vpop.f32.mrb[0].mxu0
        %v3513 = vpop.f32.mrb[0].mxu0
        %v3514 = vpop.f32.mrb[0].mxu0
        %3515 = vdwg.mxu0
        %v3516 = vpack.c.bf16 %v3511, %v3465
        %3518 = vrot.lane.b32.xlu0 %v3516, 24
        %v3519 = vpop.permute.xlu0 %3518
        %3521 = vst.msk [vmem:[#allocation2] sm:$0xff] %vm2362, %v3519
        %v3522 = vld [vmem:[#allocation2] sm:$0xff]
        %v3524 = vlaneseq
        %v3525 = vshrl.u32 %v3524, 7
        %v3526 = vsub.s32 0, %v3525
        %v3527 = vrot.slane %v2488, %v3526
        %v3533 = vunpack.c.l.b16 %v2484
        %v3534 = vunpack.c.l.b16 %v2485
        %v3535 = vunpack.c.l.b16 %v2486
        %v3536 = vunpack.c.l.b16 %v2487
        %v3537 = vpack.c.b16 %v3534, %v3533
        %v3538 = vpack.c.b16 %v3536, %v3535
        %v3542 = vsel %vm1412, %v3522, 0
        %3544 = vmatprep.subr.bf16.mxu0 0
        %3545 = vmatpush1.bf16.msra.mxu0 %v3537
        %3546 = vmatprep.subr.bf16.mxu0 0
        %3547 = vmatpush1.bf16.msra.mxu0 %v3538
        %3548 = vmatprep.subr.bf16.mxu0 0
        %3549 = vmatpush1.bf16.msra.mxu0 0
        %3550 = vmatprep.subr.bf16.mxu0 0
        %3551 = vmatpush1.bf16.msra.mxu0 0
        %3552 = vmatprep.subr.bf16.mxu0 0
        %3553 = vmatpush1.bf16.msra.mxu0 0
        %3554 = vmatprep.subr.bf16.mxu0 0
        %3555 = vmatpush1.bf16.msra.mxu0 0
        %3556 = vmatprep.subr.bf16.mxu0 0
        %3557 = vmatpush1.bf16.msra.mxu0 0
        %3558 = vmatprep.subr.bf16.mxu0 0
        %3559 = vmatpush1.bf16.msra.mxu0 0
        %3560 = vmatprep.subr.bf16.mxu0 0
        %3561 = vmatpush1.bf16.msra.mxu0 0
        %3562 = vmatprep.subr.bf16.mxu0 0
        %3563 = vmatpush1.bf16.msra.mxu0 0
        %3564 = vmatprep.subr.bf16.mxu0 0
        %3565 = vmatpush1.bf16.msra.mxu0 0
        %3566 = vmatprep.subr.bf16.mxu0 0
        %3567 = vmatpush1.bf16.msra.mxu0 0
        %3568 = vmatprep.subr.bf16.mxu0 0
        %3569 = vmatpush1.bf16.msra.mxu0 0
        %3570 = vmatprep.subr.bf16.mxu0 0
        %3571 = vmatpush1.bf16.msra.mxu0 0
        %3572 = vmatprep.subr.bf16.mxu0 0
        %3573 = vmatpush1.bf16.msra.mxu0 0
        %3574 = vmatprep.subr.bf16.mxu0 0
        %3575 = vmatpush1.bf16.msra.mxu0 0
        %3576 = vmatprep.mubr.bf16.mxu0 0
        %3577 = vmatmul.mubr.bf16.gmra.mrb[0].mxu0 %v3542
        %v3578 = vpop.f32.mrb[0].mxu0
        %v3579 = vadd.f32 %v3527, %v3578
        %v3580 = vpop.f32.mrb[0].mxu0
        %v3581 = vpop.f32.mrb[0].mxu0
        %v3582 = vadd.f32 %v3527, %v3581
        %v3583 = vpop.f32.mrb[0].mxu0
        %3584 = vdwg.mxu0
        %v3585 = vadd.f32 %v2472, %v3579
        %v3586 = vadd.f32 %v2473, %v3582
        %v3587 = vld [vmem:[%s1204] sm:$0x1]
        %v3588 = vld [vmem:[%s1212] sm:$0x1]
        %v3589 = vsel %vm1412, %v3585, 0.0
        %3590 = vadd.xlane.f32.xlu0 %v3589
        %v3591 = vpop.xlane.xlu0 %3590
        %v3592 = vsel %vm1412, %v3586, 0.0
        %3593 = vadd.xlane.f32.xlu0 %v3592
        %v3594 = vpop.xlane.xlu0 %3593
        %v3595 = vmul.f32 %v3591, %v2437
        %v3596 = vmul.f32 %v3594, %v2437
        %v3597 = vsub.f32 %v3585, %v3595
        %v3598 = vsub.f32 %v3586, %v3596
        %v3599 = vmul.f32 %v3597, %v3597
        %v3600 = vmul.f32 %v3598, %v3598
        %v3601 = vsel %vm1412, %v3599, 0.0
        %3602 = vadd.xlane.f32.xlu0 %v3601
        %v3603 = vpop.xlane.xlu0 %3602
        %v3604 = vsel %vm1412, %v3600, 0.0
        %3605 = vadd.xlane.f32.xlu0 %v3604
        %v3606 = vpop.xlane.xlu0 %3605
        %v3607 = vmul.f32 %v3603, %v2437
        %v3608 = vmul.f32 %v3606, %v2437
        %v3609 = vadd.f32 %v3607, 1e-05
        %v3610 = vadd.f32 %v3608, 1e-05
        %v3611 = vrsqrt.pop %v3609
        %v3612 = vrsqrt.pop %v3610
        %v3613 = vmul.f32 %v3597, %v3611
        %v3614 = vmul.f32 %v3598, %v3612
        %v3616 = vlaneseq
        %v3617 = vshrl.u32 %v3616, 7
        %v3618 = vsub.s32 0, %v3617
        %v3619 = vrot.slane %v3587, %v3618
        %v3621 = vmul.f32 %v3613, %v3619
        %v3622 = vmul.f32 %v3614, %v3619
        %v3624 = vlaneseq
        %v3625 = vshrl.u32 %v3624, 7
        %v3626 = vsub.s32 0, %v3625
        %v3627 = vrot.slane %v3588, %v3626
        %v3629 = vadd.f32 %v3621, %v3627
        %v3630 = vadd.f32 %v3622, %v3627
        %v3631 = vpack.c.bf16 %v3630, %v3629
        %v3632 = vld [vmem:[%s1155] sm:$0xf]
        %v3633 = vld [vmem:[%s1155 + $0x4] sm:$0xf]
        %v3634 = vld [vmem:[%s1155 + $0x8] sm:$0xf]
        %v3635 = vld [vmem:[%s1155 + $0xc] sm:$0xf]
        %v3636 = vld [vmem:[%s1163] sm:$0x1]
        %v3638 = vlaneseq
        %v3639 = vshrl.u32 %v3638, 7
        %v3640 = vsub.s32 0, %v3639
        %v3641 = vrot.slane %v3636, %v3640
        %v3647 = vunpack.c.l.b16 %v3632
        %v3648 = vunpack.c.l.b16 %v3633
        %v3649 = vunpack.c.l.b16 %v3634
        %v3650 = vunpack.c.l.b16 %v3635
        %v3651 = vpack.c.b16 %v3648, %v3647
        %v3652 = vpack.c.b16 %v3650, %v3649
        %v3656 = vsel %vm1412, %v3631, 0
        %3658 = vmatprep.subr.bf16.mxu0 0
        %3659 = vmatpush1.bf16.msra.mxu0 %v3651
        %3660 = vmatprep.subr.bf16.mxu0 0
        %3661 = vmatpush1.bf16.msra.mxu0 %v3652
        %3662 = vmatprep.subr.bf16.mxu0 0
        %3663 = vmatpush1.bf16.msra.mxu0 0
        %3664 = vmatprep.subr.bf16.mxu0 0
        %3665 = vmatpush1.bf16.msra.mxu0 0
        %3666 = vmatprep.subr.bf16.mxu0 0
        %3667 = vmatpush1.bf16.msra.mxu0 0
        %3668 = vmatprep.subr.bf16.mxu0 0
        %3669 = vmatpush1.bf16.msra.mxu0 0
        %3670 = vmatprep.subr.bf16.mxu0 0
        %3671 = vmatpush1.bf16.msra.mxu0 0
        %3672 = vmatprep.subr.bf16.mxu0 0
        %3673 = vmatpush1.bf16.msra.mxu0 0
        %3674 = vmatprep.subr.bf16.mxu0 0
        %3675 = vmatpush1.bf16.msra.mxu0 0
        %3676 = vmatprep.subr.bf16.mxu0 0
        %3677 = vmatpush1.bf16.msra.mxu0 0
        %3678 = vmatprep.subr.bf16.mxu0 0
        %3679 = vmatpush1.bf16.msra.mxu0 0
        %3680 = vmatprep.subr.bf16.mxu0 0
        %3681 = vmatpush1.bf16.msra.mxu0 0
        %3682 = vmatprep.subr.bf16.mxu0 0
        %3683 = vmatpush1.bf16.msra.mxu0 0
        %3684 = vmatprep.subr.bf16.mxu0 0
        %3685 = vmatpush1.bf16.msra.mxu0 0
        %3686 = vmatprep.subr.bf16.mxu0 0
        %3687 = vmatpush1.bf16.msra.mxu0 0
        %3688 = vmatprep.subr.bf16.mxu0 0
        %3689 = vmatpush1.bf16.msra.mxu0 0
        %3690 = vmatprep.mubr.bf16.mxu0 0
        %3691 = vmatmul.mubr.bf16.gmra.mrb[0].mxu0 %v3656
        %v3692 = vpop.f32.mrb[0].mxu0
        %v3693 = vadd.f32 %v3641, %v3692
        %v3694 = vpop.f32.mrb[0].mxu0
        %v3695 = vpop.f32.mrb[0].mxu0
        %v3696 = vadd.f32 %v3641, %v3695
        %v3697 = vpop.f32.mrb[0].mxu0
        %3698 = vdwg.mxu0
        %v3699 = vmax.f32 %v3693, 0.0
        %v3700 = vmax.f32 %v3696, 0.0
        %v3701 = vpack.c.bf16 %v3700, %v3699
        %v3702 = vld [vmem:[%s1172] sm:$0xf]
        %v3703 = vld [vmem:[%s1172 + $0x4] sm:$0xf]
        %v3704 = vld [vmem:[%s1172 + $0x8] sm:$0xf]
        %v3705 = vld [vmem:[%s1172 + $0xc] sm:$0xf]
        %v3706 = vld [vmem:[%s1172 + $0x10] sm:$0xf]
        %v3707 = vld [vmem:[%s1172 + $0x14] sm:$0xf]
        %v3708 = vld [vmem:[%s1172 + $0x18] sm:$0xf]
        %v3709 = vld [vmem:[%s1172 + $0x1c] sm:$0xf]
        %v3710 = vld [vmem:[%s1180] sm:$0x1]
        %v3712 = vlaneseq
        %v3713 = vshrl.u32 %v3712, 7
        %v3714 = vsub.s32 0, %v3713
        %v3715 = vrot.slane %v3710, %v3714
        %v3725 = vunpack.c.l.b16 %v3702
        %v3726 = vunpack.c.l.b16 %v3703
        %v3727 = vunpack.c.l.b16 %v3704
        %v3728 = vunpack.c.l.b16 %v3705
        %v3729 = vunpack.c.l.b16 %v3706
        %v3730 = vunpack.c.l.b16 %v3707
        %v3731 = vunpack.c.l.b16 %v3708
        %v3732 = vunpack.c.l.b16 %v3709
        %v3733 = vpack.c.b16 %v3726, %v3725
        %v3734 = vpack.c.b16 %v3728, %v3727
        %v3735 = vpack.c.b16 %v3730, %v3729
        %v3736 = vpack.c.b16 %v3732, %v3731
        %vm3741 = vcmask 523264
        %v3743 = vsel %vm3741, %v3701, 0
        %3745 = vmatprep.subr.bf16.mxu0 0
        %3746 = vmatpush1.bf16.msra.mxu0 %v3733
        %3747 = vmatprep.subr.bf16.mxu0 0
        %3748 = vmatpush1.bf16.msra.mxu0 %v3734
        %3749 = vmatprep.subr.bf16.mxu0 0
        %3750 = vmatpush1.bf16.msra.mxu0 %v3735
        %3751 = vmatprep.subr.bf16.mxu0 0
        %3752 = vmatpush1.bf16.msra.mxu0 %v3736
        %3753 = vmatprep.subr.bf16.mxu0 0
        %3754 = vmatpush1.bf16.msra.mxu0 0
        %3755 = vmatprep.subr.bf16.mxu0 0
        %3756 = vmatpush1.bf16.msra.mxu0 0
        %3757 = vmatprep.subr.bf16.mxu0 0
        %3758 = vmatpush1.bf16.msra.mxu0 0
        %3759 = vmatprep.subr.bf16.mxu0 0
        %3760 = vmatpush1.bf16.msra.mxu0 0
        %3761 = vmatprep.subr.bf16.mxu0 0
        %3762 = vmatpush1.bf16.msra.mxu0 0
        %3763 = vmatprep.subr.bf16.mxu0 0
        %3764 = vmatpush1.bf16.msra.mxu0 0
        %3765 = vmatprep.subr.bf16.mxu0 0
        %3766 = vmatpush1.bf16.msra.mxu0 0
        %3767 = vmatprep.subr.bf16.mxu0 0
        %3768 = vmatpush1.bf16.msra.mxu0 0
        %3769 = vmatprep.subr.bf16.mxu0 0
        %3770 = vmatpush1.bf16.msra.mxu0 0
        %3771 = vmatprep.subr.bf16.mxu0 0
        %3772 = vmatpush1.bf16.msra.mxu0 0
        %3773 = vmatprep.subr.bf16.mxu0 0
        %3774 = vmatpush1.bf16.msra.mxu0 0
        %3775 = vmatprep.subr.bf16.mxu0 0
        %3776 = vmatpush1.bf16.msra.mxu0 0
        %3777 = vmatprep.mubr.bf16.mxu0 0
        %3778 = vmatmul.mubr.bf16.gmra.mrb[0].mxu0 %v3743
        %v3779 = vpop.f32.mrb[0].mxu0
        %v3780 = vadd.f32 %v3715, %v3779
        %v3781 = vpop.f32.mrb[0].mxu0
        %v3782 = vpop.f32.mrb[0].mxu0
        %v3783 = vadd.f32 %v3715, %v3782
        %v3784 = vpop.f32.mrb[0].mxu0
        %3785 = vdwg.mxu0
        %v3786 = vadd.f32 %v3629, %v3780
        %v3787 = vadd.f32 %v3630, %v3783
        %v3788 = vld [vmem:[%s1220] sm:$0x1]
        %v3789 = vld [vmem:[%s1228] sm:$0x1]
        %v3790 = vsel %vm1412, %v3786, 0.0
        %3791 = vadd.xlane.f32.xlu0 %v3790
        %v3792 = vpop.xlane.xlu0 %3791
        %v3793 = vsel %vm1412, %v3787, 0.0
        %3794 = vadd.xlane.f32.xlu0 %v3793
        %v3795 = vpop.xlane.xlu0 %3794
        %v3796 = vmul.f32 %v3792, %v2437
        %v3797 = vmul.f32 %v3795, %v2437
        %v3798 = vsub.f32 %v3786, %v3796
        %v3799 = vsub.f32 %v3787, %v3797
        %v3800 = vmul.f32 %v3798, %v3798
        %v3801 = vmul.f32 %v3799, %v3799
        %v3802 = vsel %vm1412, %v3800, 0.0
        %3803 = vadd.xlane.f32.xlu0 %v3802
        %v3804 = vpop.xlane.xlu0 %3803
        %v3805 = vsel %vm1412, %v3801, 0.0
        %3806 = vadd.xlane.f32.xlu0 %v3805
        %v3807 = vpop.xlane.xlu0 %3806
        %v3808 = vmul.f32 %v3804, %v2437
        %v3809 = vmul.f32 %v3807, %v2437
        %v3810 = vadd.f32 %v3808, 1e-05
        %v3811 = vadd.f32 %v3809, 1e-05
        %v3812 = vrsqrt.pop %v3810
        %v3813 = vrsqrt.pop %v3811
        %v3814 = vmul.f32 %v3798, %v3812
        %v3815 = vmul.f32 %v3799, %v3813
        %v3817 = vlaneseq
        %v3818 = vshrl.u32 %v3817, 7
        %v3819 = vsub.s32 0, %v3818
        %v3820 = vrot.slane %v3788, %v3819
        %v3822 = vmul.f32 %v3814, %v3820
        %v3823 = vmul.f32 %v3815, %v3820
        %v3825 = vlaneseq
        %v3826 = vshrl.u32 %v3825, 7
        %v3827 = vsub.s32 0, %v3826
        %v3828 = vrot.slane %v3789, %v3827
        %v3830 = vadd.f32 %v3822, %v3828
        %v3831 = vadd.f32 %v3823, %v3828
        %3832 = vst.msk [vmem:[#allocation28] sm:$0xff] %vm1412, %v3830
        %3833 = vst.msk [vmem:[#allocation28 + $0x8] sm:$0xff] %vm1412, %v3831
        // Predicated region
        $region201: #{tpu_custom_call.1} parent=107 // pred_check
          %p3834 = pneg %p633
        $region202: #{tpu_custom_call.1} parent=107 // pred_check_branch
          %3836 = sbr.rel (%p3834) target = $region204
        $region203: #{tpu_custom_call.1} parent=107 // pred_region
          %s3837 = smul.u32 2, %s40
          %s3839 = ssub.s32 256, 256
          %3840 = vsyncadd [#allocation5], %s3839
          %s3841 = smul.addr %s3837, 128
          %s3842 = scalar_lea.hbm %s22, %s3841
          %s3843 = sshll.u32 [#allocation28], 4
          %s3844 = int_to_ptr.vmem [resolvable:$true] %s3843
          %3849 = dma.vmem_to_hbm [thread:$0]  %s3844, 256, %s3842, [#allocation5], 128, 128, 8
        $region204: #{tpu_custom_call.1} parent=107 // pred_fallthru
          _
        // Predicated region
        $region205: #{tpu_custom_call.1} parent=107 // pred_check
          %p3850 = pneg %p633
        $region206: #{tpu_custom_call.1} parent=107 // pred_check_branch
          %3852 = sbr.rel (%p3850) target = $region208
        $region207: #{tpu_custom_call.1} parent=107 // pred_region
          %3853 = dma.done [#allocation5], 256
        $region208: #{tpu_custom_call.1} parent=107 // pred_fallthru
          _
      $region108: #{tpu_custom_call.1} parent=5 // pred_fallthru
        _
      %p3854 = scmp.le.s32.totalorder 2, %s31
      // Predicated region
      $region209: #{tpu_custom_call.1} parent=5 // pred_check
        %p3855 = pneg %p3854
      $region210: #{tpu_custom_call.1} parent=5 // pred_check_branch
        %3857 = sbr.rel (%p3855) target = $region212
      $region211: #{tpu_custom_call.1} parent=5 // pred_region
        %s3858 = ssub.s32 %s31, 2
      $region212: #{tpu_custom_call.1} parent=5 // pred_fallthru
        _
    $region6: #{tpu_custom_call.1} parent=1 // loop_footer
      %s35 = sadd.s32 1, %s31
    $region7: #{tpu_custom_call.1} parent=1 // loop_footer_branch
      %30 = sbr.rel target = $region3
    $region8: #{tpu_custom_call.1} parent=1 // loop_exit
      _
    %3859 = vsyncpa [#allocation4], 1
    %s3860 = scalar_lea.sflag [#allocation4], 1
    %3861 = vsyncpa %s3860, 1
    %3862 = vsyncpa [#allocation7], 1
    %3863 = vsyncpa [#allocation5], 1
    %s3864 = scalar_lea.sflag [#allocation5], 1
    %3865 = vsyncpa %s3864, 1

</llo_original>
